<compile_context>
chip_gen: v7x
topology: tpu7x:2x2x1
jax: 0.10.0
libtpu: 0.0.40
codegen_flags: <defaults>
</compile_context>

<pallas_src>
import jax
import jax.numpy as jnp
from jax.experimental import pallas as pl
from jax.experimental.pallas import tpu as pltpu

EMBED_DIM = 300    # fixed by the module: nn.GRU(300, 300, 1)
HIDDEN = 300
HIDDEN_PAD = 384   # 300 padded up to a multiple of 128 (lane alignment)
T_CHUNK = 8        # timesteps per grid step: bounds VMEM / vreg live ranges, amortizes
                   # per-grid-step overhead, and lets Pallas pipeline gi prefetch.


def _num_batch_groups(batch: int) -> int:
    """Split the batch across TensorCores only when it pays off.

    On v5e/v6e the grid is a sequential loop on a single TensorCore, so splitting just
    re-runs the whole T-step recurrence (and duplicates the weight DMA).  On v7x (2 TCs per
    chip) split only when each core still gets at least a full 8-row sublane tile.
    """
    if batch < 16:                      # < 8 rows per group -> never worth splitting
        return 1
    try:
        kind = jax.devices()[0].device_kind.lower()
    except Exception:                   # device query must never break tracing
        return 1
    return 2 if "7" in kind else 1      # only v7x has 2 TensorCores per chip


def gru_chunk_kernel(gi_ref, h0_ref, whh_ref, bhn_ref, out_ref, h_scratch):
    """One grid point = (batch group g, time chunk c); hidden state carried in VMEM scratch.

    gi_ref   : (tc, bb, 3*HP) f32   precomputed input-side gates (r|z|n), biases folded in
    h0_ref   : (bb, HP)       f32   initial hidden state (zero-padded), same block every c
    whh_ref  : (HP, 3*HP)     bf16  fused hidden weights [W_hr|W_hz|W_hn] (x @ W layout)
    bhn_ref  : (1, HP)        f32   hidden bias of the n gate (must stay inside r * (.))
    out_ref  : (tc, bb, HP)   f32   per-step hidden states for this chunk (time-major)
    h_scratch: (bb, HP)       f32   hidden state carried across the "arbitrary" chunk axis
    """
    n_steps, bb, HP = out_ref.shape

    @pl.when(pl.program_id(1) == 0)
    def _():
        h_scratch[...] = h0_ref[...]

    # Loop-invariant loads / broadcasts hoisted out of the unrolled chunk loop.
    w_hh = whh_ref[...]                                   # (HP, 3*HP) bf16
    b_hn = jnp.broadcast_to(bhn_ref[...], (bb, HP))       # hoisted: avoids per-step broadcast

    h = h_scratch[...]                                    # (bb, HP) f32 carried value
    for step in range(n_steps):                           # chunk is small & static: unrolled
        gi = gi_ref[step]                                 # (bb, 3*HP)
        # Single fused MXU matmul per step for all three hidden gates: bf16 operands,
        # f32 accumulation (halves weight streaming vs f32 storage).
        gh = jnp.dot(h.astype(jnp.bfloat16), w_hh,
                     preferred_element_type=jnp.float32)  # (bb, 3*HP)

        r = jax.nn.sigmoid(gi[:, 0:HP] + gh[:, 0:HP])
        z = jax.nn.sigmoid(gi[:, HP:2 * HP] + gh[:, HP:2 * HP])
        n = jnp.tanh(gi[:, 2 * HP:3 * HP] + r * (gh[:, 2 * HP:3 * HP] + b_hn))
        h = n + z * (h - n)                               # == (1 - z) * n + z * h

        out_ref[step] = h

    h_scratch[...] = h                                    # carry into the next chunk


def decoder_forward(idxs, state, params):
    """Mirrors Decoder.forward(idxs, state) -> (output, state)."""
    emb_table, wih, whh, bih, bhh = params
    B, T = idxs.shape
    H, HP = HIDDEN, HIDDEN_PAD
    h0 = state[0]                                    # (B, H)

    nb = _num_batch_groups(B)                        # batch groups (1 unless v7x & B >= 16)
    bb = -(-B // nb)                                 # rows per group
    Bp = nb * bb

    t_chunk = min(T_CHUNK, T)                        # timesteps per grid step
    n_chunks = -(-T // t_chunk)
    Tp = n_chunks * t_chunk

    # ---- Hoisted input-side compute (plain XLA): embedding gather + ONE batched matmul ----
    x = jnp.take(emb_table, idxs, axis=0).astype(jnp.float32)            # (B, T, E)
    w_ih_cat = jnp.concatenate([wih[0], wih[1], wih[2]], axis=1)          # (E, 3H), gates r|z|n
    # Fold b_ih (all gates) plus b_hh for the r and z gates into gi; keep b_hn separate.
    b_gi = jnp.concatenate([bih[0] + bhh[0], bih[1] + bhh[1], bih[2]], axis=1)   # (1, 3H)
    # Default matmul precision (bf16 MXU passes, f32 accumulate) — consistent with the
    # in-kernel dot and 3-6x cheaper than precision='highest'.
    gi = jnp.einsum('bte,eg->btg', x, w_ih_cat) + b_gi                    # (B, T, 3H)

    # ---- Pad AFTER the bias add: gate H->HP, batch->Bp, time->Tp; go time-major per group ----
    gi = gi.reshape(B, T, 3, H)
    gi = jnp.pad(gi, ((0, Bp - B), (0, Tp - T), (0, 0), (0, HP - H)))     # (Bp, Tp, 3, HP)
    gi_g = gi.reshape(nb, bb, Tp, 3 * HP).transpose(0, 2, 1, 3)           # (nb, Tp, bb, 3HP)

    h0_g = jnp.pad(h0, ((0, Bp - B), (0, HP - H))).reshape(nb, bb, HP)

    # Fused hidden weights, zero-padded, stored in bf16 (halves HBM DMA + per-step vld traffic).
    whh_p = jnp.concatenate(
        [jnp.pad(whh[g], ((0, HP - H), (0, HP - H))) for g in range(3)],
        axis=1).astype(jnp.bfloat16)                                      # (HP, 3HP) bf16
    bhn_p = jnp.pad(bhh[2], ((0, 0), (0, HP - H)))                        # (1, HP)

    out_g = pl.pallas_call(
        gru_chunk_kernel,
        out_shape=jax.ShapeDtypeStruct((nb, Tp, bb, HP), jnp.float32),
        grid=(nb, n_chunks),
        in_specs=[
            pl.BlockSpec((None, t_chunk, bb, 3 * HP), lambda g, c: (g, c, 0, 0)),  # gi chunk
            pl.BlockSpec((None, bb, HP), lambda g, c: (g, 0, 0)),                  # h0 (resident)
            pl.BlockSpec((HP, 3 * HP), lambda g, c: (0, 0)),                       # W_hh (resident)
            pl.BlockSpec((1, HP), lambda g, c: (0, 0)),                            # b_hn (resident)
        ],
        out_specs=pl.BlockSpec((None, t_chunk, bb, HP), lambda g, c: (g, c, 0, 0)),
        scratch_shapes=[pltpu.VMEM((bb, HP), jnp.float32)],                # carried hidden state
        compiler_params=pltpu.CompilerParams(
            dimension_semantics=("parallel", "arbitrary")),
        # VMEM footprint is O(t_chunk) (≈ 72 KiB/group double-buffered at t_chunk=8) + 0.86 MiB
        # bf16 weights — far under every generation's scoped limit, so no explicit
        # vmem_limit_bytes is needed.
    )(gi_g, h0_g, whh_p, bhn_p)

    out = out_g.transpose(0, 2, 1, 3).reshape(Bp, Tp, HP)[:B, :T, :H]     # (B, T, H), batch_first
    state_out = out[:, -1, :][None]                                       # (1, B, H) final state
    return out, state_out


def decoder_reference(idxs, state, params):
    """Pure-JAX reference (full f32 precision) for correctness check."""
    emb_table, wih, whh, bih, bhh = params
    hp = 'highest'
    x = emb_table[idxs]           # (B, T, E)
    h = state[0]                  # (B, H)
    outs = []
    for t in range(idxs.shape[1]):
        xt = x[:, t, :]
        r = jax.nn.sigmoid(jnp.dot(xt, wih[0], precision=hp) + bih[0]
                           + jnp.dot(h, whh[0], precision=hp) + bhh[0])
        z = jax.nn.sigmoid(jnp.dot(xt, wih[1], precision=hp) + bih[1]
                           + jnp.dot(h, whh[1], precision=hp) + bhh[1])
        n = jnp.tanh(jnp.dot(xt, wih[2], precision=hp) + bih[2]
                     + r * (jnp.dot(h, whh[2], precision=hp) + bhh[2]))
        h = (1.0 - z) * n + z * h
        outs.append(h)
    return jnp.stack(outs, axis=1), h[None]


def make_params(key, vocab):
    # TODO(synk): the original module loads a pretrained embedding pickle from disk; we use a
    # deterministic synthetic table of the right shape instead (weights laid out for x @ W).
    k_emb, k_wih, k_whh, k_bih, k_bhh = jax.random.split(key, 5)
    scale = 1.0 / jnp.sqrt(jnp.float32(HIDDEN))
    emb_table = jax.random.normal(k_emb, (vocab, EMBED_DIM), jnp.float32) * 0.1
    wih = jax.random.uniform(k_wih, (3, EMBED_DIM, HIDDEN), jnp.float32, -scale, scale)
    whh = jax.random.uniform(k_whh, (3, HIDDEN, HIDDEN), jnp.float32, -scale, scale)
    bih = jax.random.uniform(k_bih, (3, 1, HIDDEN), jnp.float32, -scale, scale)
    bhh = jax.random.uniform(k_bhh, (3, 1, HIDDEN), jnp.float32, -scale, scale)
    return emb_table, wih, whh, bih, bhh


if __name__ == "__main__":
    B, T, V = 2, 8, 50
    key = jax.random.PRNGKey(0)
    k_p, k_i, k_s = jax.random.split(key, 3)

    params = make_params(k_p, V)
    idxs = jax.random.randint(k_i, (B, T), 0, V, dtype=jnp.int32)
    state = jax.random.normal(k_s, (1, B, HIDDEN), jnp.float32) * 0.1

    out, new_state = jax.jit(decoder_forward)(idxs, state, params)
    jax.block_until_ready((out, new_state))

    out_ref, state_ref = decoder_reference(idxs, state, params)
    assert out.shape == (B, T, HIDDEN) and new_state.shape == (1, B, HIDDEN)
    # Tolerance sized for single-pass bf16 MXU operands (f32 accumulation) in both the hoisted
    # input projection and the recurrence, compared against a full-f32 ('highest') reference.
    assert jnp.allclose(out, out_ref, atol=3e-3, rtol=3e-3)
    assert jnp.allclose(new_state, state_ref, atol=3e-3, rtol=3e-3)

    print("KERNEL_OK")
</pallas_src>

<mosaic_0001>
module attributes {stable_mosaic.version = 11 : i64} {
  func.func @gru_chunk_kernel(%arg0: i32, %arg1: i32, %arg2: memref<1x8x2x1152xf32, #tpu.memory_space<vmem>>, %arg3: memref<1x2x384xf32, #tpu.memory_space<vmem>>, %arg4: memref<384x1152xbf16, #tpu.memory_space<vmem>>, %arg5: memref<1x384xf32, #tpu.memory_space<vmem>>, %arg6: memref<1x8x2x384xf32, #tpu.memory_space<vmem>>, %arg7: memref<2x384xf32, #tpu.memory_space<vmem>>) attributes {dimension_semantics = [#tpu.dimension_semantics<parallel>, #tpu.dimension_semantics<arbitrary>], iteration_bounds = array<i64: 1, 1>, scalar_prefetch = 0 : i64, scratch_operands = 1 : i64, tpu.core_type = #tpu.core_type<tc>, window_params = [{transform_indices = @transform_0, window_bounds = array<i64: 1, 8, 2, 1152>}, {transform_indices = @transform_1, window_bounds = array<i64: 1, 2, 384>}, {pipeline_mode = #tpu.pipeline_mode<synchronous>, transform_indices = @transform_2, window_bounds = array<i64: 384, 1152>}, {pipeline_mode = #tpu.pipeline_mode<synchronous>, transform_indices = @transform_3, window_bounds = array<i64: 1, 384>}, {transform_indices = @transform_4, window_bounds = array<i64: 1, 8, 2, 384>}]} {
    %c0_i32 = arith.constant 0 : i32
    %0 = arith.cmpi eq, %arg1, %c0_i32 : i32
    %1 = arith.extui %0 : i1 to i32
    %c0_i32_0 = arith.constant 0 : i32
    %2 = arith.cmpi ne, %1, %c0_i32_0 : i32
    scf.if %2 {
      %c0_88 = arith.constant 0 : index
      %c0_89 = arith.constant 0 : index
      %c0_90 = arith.constant 0 : index
      %265 = vector.load %arg3[%c0_88, %c0_89, %c0_90] : memref<1x2x384xf32, #tpu.memory_space<vmem>>, vector<1x2x384xf32>
      %266 = vector.shape_cast %265 : vector<1x2x384xf32> to vector<2x384xf32>
      %c0_91 = arith.constant 0 : index
      %c0_92 = arith.constant 0 : index
      %267 = vector.load %arg7[%c0_91, %c0_92] : memref<2x384xf32, #tpu.memory_space<vmem>>, vector<2x384xf32>
      tpu.vector_store %arg7[%c0_91, %c0_92], %266 {strides = array<i32>} : memref<2x384xf32, #tpu.memory_space<vmem>>, vector<2x384xf32>,
    } else {
    }
    %c0 = arith.constant 0 : index
    %c0_1 = arith.constant 0 : index
    %3 = vector.load %arg4[%c0, %c0_1] : memref<384x1152xbf16, #tpu.memory_space<vmem>>, vector<384x1152xbf16>
    %c0_2 = arith.constant 0 : index
    %c0_3 = arith.constant 0 : index
    %4 = vector.load %arg5[%c0_2, %c0_3] : memref<1x384xf32, #tpu.memory_space<vmem>>, vector<1x384xf32>
    %5 = vector.shape_cast %4 : vector<1x384xf32> to vector<1x384xf32>
    %6 = vector.broadcast %5 : vector<1x384xf32> to vector<2x384xf32>
    %c0_4 = arith.constant 0 : index
    %c0_5 = arith.constant 0 : index
    %7 = vector.load %arg7[%c0_4, %c0_5] : memref<2x384xf32, #tpu.memory_space<vmem>>, vector<2x384xf32>
    %c0_6 = arith.constant 0 : index
    %c0_7 = arith.constant 0 : index
    %c0_8 = arith.constant 0 : index
    %c0_9 = arith.constant 0 : index
    %8 = vector.load %arg2[%c0_6, %c0_7, %c0_8, %c0_9] : memref<1x8x2x1152xf32, #tpu.memory_space<vmem>>, vector<1x1x2x1152xf32>
    %9 = vector.shape_cast %8 : vector<1x1x2x1152xf32> to vector<2x1152xf32>
    %10 = arith.truncf %7 : vector<2x384xf32> to vector<2x384xbf16>
    %cst = arith.constant dense<0.000000e+00> : vector<2x1152xf32>
    %11 = tpu.matmul %10, %3, %cst {dimension_numbers = #tpu.dot_dimension_numbers<[1], [0], [0], [1], [0, 0, 1, 1], [], []>} : vector<2x384xbf16>, vector<384x1152xbf16>, vector<2x1152xf32> -> vector<2x1152xf32>
    %12 = vector.extract_strided_slice %9 {offsets = [0, 0], sizes = [2, 384], strides = [1, 1]} : vector<2x1152xf32> to vector<2x384xf32>
    %13 = vector.extract_strided_slice %11 {offsets = [0, 0], sizes = [2, 384], strides = [1, 1]} : vector<2x1152xf32> to vector<2x384xf32>
    %14 = arith.addf %12, %13 : vector<2x384xf32>
    %15 = arith.negf %14 : vector<2x384xf32>
    %16 = math.exp %15 : vector<2x384xf32>
    %cst_10 = arith.constant 1.000000e+00 : f32
    %17 = vector.broadcast %cst_10 : f32 to vector<2x384xf32>
    %18 = arith.addf %17, %16 : vector<2x384xf32>
    %19 = arith.divf %17, %18 : vector<2x384xf32>
    %20 = vector.extract_strided_slice %9 {offsets = [0, 384], sizes = [2, 384], strides = [1, 1]} : vector<2x1152xf32> to vector<2x384xf32>
    %21 = vector.extract_strided_slice %11 {offsets = [0, 384], sizes = [2, 384], strides = [1, 1]} : vector<2x1152xf32> to vector<2x384xf32>
    %22 = arith.addf %20, %21 : vector<2x384xf32>
    %23 = arith.negf %22 : vector<2x384xf32>
    %24 = math.exp %23 : vector<2x384xf32>
    %cst_11 = arith.constant 1.000000e+00 : f32
    %25 = vector.broadcast %cst_11 : f32 to vector<2x384xf32>
    %26 = arith.addf %25, %24 : vector<2x384xf32>
    %27 = arith.divf %25, %26 : vector<2x384xf32>
    %28 = vector.extract_strided_slice %9 {offsets = [0, 768], sizes = [2, 384], strides = [1, 1]} : vector<2x1152xf32> to vector<2x384xf32>
    %29 = vector.extract_strided_slice %11 {offsets = [0, 768], sizes = [2, 384], strides = [1, 1]} : vector<2x1152xf32> to vector<2x384xf32>
    %30 = arith.addf %29, %6 : vector<2x384xf32>
    %31 = arith.mulf %19, %30 : vector<2x384xf32>
    %32 = arith.addf %28, %31 : vector<2x384xf32>
    %33 = math.tanh %32 : vector<2x384xf32>
    %34 = arith.subf %7, %33 : vector<2x384xf32>
    %35 = arith.mulf %27, %34 : vector<2x384xf32>
    %36 = arith.addf %33, %35 : vector<2x384xf32>
    %c0_12 = arith.constant 0 : index
    %c0_13 = arith.constant 0 : index
    %c0_14 = arith.constant 0 : index
    %c0_15 = arith.constant 0 : index
    %37 = vector.load %arg6[%c0_12, %c0_13, %c0_14, %c0_15] : memref<1x8x2x384xf32, #tpu.memory_space<vmem>>, vector<1x1x2x384xf32>
    %38 = vector.shape_cast %37 : vector<1x1x2x384xf32> to vector<2x384xf32>
    %39 = vector.shape_cast %36 : vector<2x384xf32> to vector<1x1x2x384xf32>
    tpu.vector_store %arg6[%c0_12, %c0_13, %c0_14, %c0_15], %39 {strides = array<i32>} : memref<1x8x2x384xf32, #tpu.memory_space<vmem>>, vector<1x1x2x384xf32>,
    %c0_16 = arith.constant 0 : index
    %c1 = arith.constant 1 : index
    %c0_17 = arith.constant 0 : index
    %c0_18 = arith.constant 0 : index
    %40 = vector.load %arg2[%c0_16, %c1, %c0_17, %c0_18] : memref<1x8x2x1152xf32, #tpu.memory_space<vmem>>, vector<1x1x2x1152xf32>
    %41 = vector.shape_cast %40 : vector<1x1x2x1152xf32> to vector<2x1152xf32>
    %42 = arith.truncf %36 : vector<2x384xf32> to vector<2x384xbf16>
    %cst_19 = arith.constant dense<0.000000e+00> : vector<2x1152xf32>
    %43 = tpu.matmul %42, %3, %cst_19 {dimension_numbers = #tpu.dot_dimension_numbers<[1], [0], [0], [1], [0, 0, 1, 1], [], []>} : vector<2x384xbf16>, vector<384x1152xbf16>, vector<2x1152xf32> -> vector<2x1152xf32>
    %44 = vector.extract_strided_slice %41 {offsets = [0, 0], sizes = [2, 384], strides = [1, 1]} : vector<2x1152xf32> to vector<2x384xf32>
    %45 = vector.extract_strided_slice %43 {offsets = [0, 0], sizes = [2, 384], strides = [1, 1]} : vector<2x1152xf32> to vector<2x384xf32>
    %46 = arith.addf %44, %45 : vector<2x384xf32>
    %47 = arith.negf %46 : vector<2x384xf32>
    %48 = math.exp %47 : vector<2x384xf32>
    %cst_20 = arith.constant 1.000000e+00 : f32
    %49 = vector.broadcast %cst_20 : f32 to vector<2x384xf32>
    %50 = arith.addf %49, %48 : vector<2x384xf32>
    %51 = arith.divf %49, %50 : vector<2x384xf32>
    %52 = vector.extract_strided_slice %41 {offsets = [0, 384], sizes = [2, 384], strides = [1, 1]} : vector<2x1152xf32> to vector<2x384xf32>
    %53 = vector.extract_strided_slice %43 {offsets = [0, 384], sizes = [2, 384], strides = [1, 1]} : vector<2x1152xf32> to vector<2x384xf32>
    %54 = arith.addf %52, %53 : vector<2x384xf32>
    %55 = arith.negf %54 : vector<2x384xf32>
    %56 = math.exp %55 : vector<2x384xf32>
    %cst_21 = arith.constant 1.000000e+00 : f32
    %57 = vector.broadcast %cst_21 : f32 to vector<2x384xf32>
    %58 = arith.addf %57, %56 : vector<2x384xf32>
    %59 = arith.divf %57, %58 : vector<2x384xf32>
    %60 = vector.extract_strided_slice %41 {offsets = [0, 768], sizes = [2, 384], strides = [1, 1]} : vector<2x1152xf32> to vector<2x384xf32>
    %61 = vector.extract_strided_slice %43 {offsets = [0, 768], sizes = [2, 384], strides = [1, 1]} : vector<2x1152xf32> to vector<2x384xf32>
    %62 = arith.addf %61, %6 : vector<2x384xf32>
    %63 = arith.mulf %51, %62 : vector<2x384xf32>
    %64 = arith.addf %60, %63 : vector<2x384xf32>
    %65 = math.tanh %64 : vector<2x384xf32>
    %66 = arith.subf %36, %65 : vector<2x384xf32>
    %67 = arith.mulf %59, %66 : vector<2x384xf32>
    %68 = arith.addf %65, %67 : vector<2x384xf32>
    %c0_22 = arith.constant 0 : index
    %c1_23 = arith.constant 1 : index
    %c0_24 = arith.constant 0 : index
    %c0_25 = arith.constant 0 : index
    %69 = vector.load %arg6[%c0_22, %c1_23, %c0_24, %c0_25] : memref<1x8x2x384xf32, #tpu.memory_space<vmem>>, vector<1x1x2x384xf32>
    %70 = vector.shape_cast %69 : vector<1x1x2x384xf32> to vector<2x384xf32>
    %71 = vector.shape_cast %68 : vector<2x384xf32> to vector<1x1x2x384xf32>
    tpu.vector_store %arg6[%c0_22, %c1_23, %c0_24, %c0_25], %71 {strides = array<i32>} : memref<1x8x2x384xf32, #tpu.memory_space<vmem>>, vector<1x1x2x384xf32>,
    %c0_26 = arith.constant 0 : index
    %c2 = arith.constant 2 : index
    %c0_27 = arith.constant 0 : index
    %c0_28 = arith.constant 0 : index
    %72 = vector.load %arg2[%c0_26, %c2, %c0_27, %c0_28] : memref<1x8x2x1152xf32, #tpu.memory_space<vmem>>, vector<1x1x2x1152xf32>
    %73 = vector.shape_cast %72 : vector<1x1x2x1152xf32> to vector<2x1152xf32>
    %74 = arith.truncf %68 : vector<2x384xf32> to vector<2x384xbf16>
    %cst_29 = arith.constant dense<0.000000e+00> : vector<2x1152xf32>
    %75 = tpu.matmul %74, %3, %cst_29 {dimension_numbers = #tpu.dot_dimension_numbers<[1], [0], [0], [1], [0, 0, 1, 1], [], []>} : vector<2x384xbf16>, vector<384x1152xbf16>, vector<2x1152xf32> -> vector<2x1152xf32>
    %76 = vector.extract_strided_slice %73 {offsets = [0, 0], sizes = [2, 384], strides = [1, 1]} : vector<2x1152xf32> to vector<2x384xf32>
    %77 = vector.extract_strided_slice %75 {offsets = [0, 0], sizes = [2, 384], strides = [1, 1]} : vector<2x1152xf32> to vector<2x384xf32>
    %78 = arith.addf %76, %77 : vector<2x384xf32>
    %79 = arith.negf %78 : vector<2x384xf32>
    %80 = math.exp %79 : vector<2x384xf32>
    %cst_30 = arith.constant 1.000000e+00 : f32
    %81 = vector.broadcast %cst_30 : f32 to vector<2x384xf32>
    %82 = arith.addf %81, %80 : vector<2x384xf32>
    %83 = arith.divf %81, %82 : vector<2x384xf32>
    %84 = vector.extract_strided_slice %73 {offsets = [0, 384], sizes = [2, 384], strides = [1, 1]} : vector<2x1152xf32> to vector<2x384xf32>
    %85 = vector.extract_strided_slice %75 {offsets = [0, 384], sizes = [2, 384], strides = [1, 1]} : vector<2x1152xf32> to vector<2x384xf32>
    %86 = arith.addf %84, %85 : vector<2x384xf32>
    %87 = arith.negf %86 : vector<2x384xf32>
    %88 = math.exp %87 : vector<2x384xf32>
    %cst_31 = arith.constant 1.000000e+00 : f32
    %89 = vector.broadcast %cst_31 : f32 to vector<2x384xf32>
    %90 = arith.addf %89, %88 : vector<2x384xf32>
    %91 = arith.divf %89, %90 : vector<2x384xf32>
    %92 = vector.extract_strided_slice %73 {offsets = [0, 768], sizes = [2, 384], strides = [1, 1]} : vector<2x1152xf32> to vector<2x384xf32>
    %93 = vector.extract_strided_slice %75 {offsets = [0, 768], sizes = [2, 384], strides = [1, 1]} : vector<2x1152xf32> to vector<2x384xf32>
    %94 = arith.addf %93, %6 : vector<2x384xf32>
    %95 = arith.mulf %83, %94 : vector<2x384xf32>
    %96 = arith.addf %92, %95 : vector<2x384xf32>
    %97 = math.tanh %96 : vector<2x384xf32>
    %98 = arith.subf %68, %97 : vector<2x384xf32>
    %99 = arith.mulf %91, %98 : vector<2x384xf32>
    %100 = arith.addf %97, %99 : vector<2x384xf32>
    %c0_32 = arith.constant 0 : index
    %c2_33 = arith.constant 2 : index
    %c0_34 = arith.constant 0 : index
    %c0_35 = arith.constant 0 : index
    %101 = vector.load %arg6[%c0_32, %c2_33, %c0_34, %c0_35] : memref<1x8x2x384xf32, #tpu.memory_space<vmem>>, vector<1x1x2x384xf32>
    %102 = vector.shape_cast %101 : vector<1x1x2x384xf32> to vector<2x384xf32>
    %103 = vector.shape_cast %100 : vector<2x384xf32> to vector<1x1x2x384xf32>
    tpu.vector_store %arg6[%c0_32, %c2_33, %c0_34, %c0_35], %103 {strides = array<i32>} : memref<1x8x2x384xf32, #tpu.memory_space<vmem>>, vector<1x1x2x384xf32>,
    %c0_36 = arith.constant 0 : index
    %c3 = arith.constant 3 : index
    %c0_37 = arith.constant 0 : index
    %c0_38 = arith.constant 0 : index
    %104 = vector.load %arg2[%c0_36, %c3, %c0_37, %c0_38] : memref<1x8x2x1152xf32, #tpu.memory_space<vmem>>, vector<1x1x2x1152xf32>
    %105 = vector.shape_cast %104 : vector<1x1x2x1152xf32> to vector<2x1152xf32>
    %106 = arith.truncf %100 : vector<2x384xf32> to vector<2x384xbf16>
    %cst_39 = arith.constant dense<0.000000e+00> : vector<2x1152xf32>
    %107 = tpu.matmul %106, %3, %cst_39 {dimension_numbers = #tpu.dot_dimension_numbers<[1], [0], [0], [1], [0, 0, 1, 1], [], []>} : vector<2x384xbf16>, vector<384x1152xbf16>, vector<2x1152xf32> -> vector<2x1152xf32>
    %108 = vector.extract_strided_slice %105 {offsets = [0, 0], sizes = [2, 384], strides = [1, 1]} : vector<2x1152xf32> to vector<2x384xf32>
    %109 = vector.extract_strided_slice %107 {offsets = [0, 0], sizes = [2, 384], strides = [1, 1]} : vector<2x1152xf32> to vector<2x384xf32>
    %110 = arith.addf %108, %109 : vector<2x384xf32>
    %111 = arith.negf %110 : vector<2x384xf32>
    %112 = math.exp %111 : vector<2x384xf32>
    %cst_40 = arith.constant 1.000000e+00 : f32
    %113 = vector.broadcast %cst_40 : f32 to vector<2x384xf32>
    %114 = arith.addf %113, %112 : vector<2x384xf32>
    %115 = arith.divf %113, %114 : vector<2x384xf32>
    %116 = vector.extract_strided_slice %105 {offsets = [0, 384], sizes = [2, 384], strides = [1, 1]} : vector<2x1152xf32> to vector<2x384xf32>
    %117 = vector.extract_strided_slice %107 {offsets = [0, 384], sizes = [2, 384], strides = [1, 1]} : vector<2x1152xf32> to vector<2x384xf32>
    %118 = arith.addf %116, %117 : vector<2x384xf32>
    %119 = arith.negf %118 : vector<2x384xf32>
    %120 = math.exp %119 : vector<2x384xf32>
    %cst_41 = arith.constant 1.000000e+00 : f32
    %121 = vector.broadcast %cst_41 : f32 to vector<2x384xf32>
    %122 = arith.addf %121, %120 : vector<2x384xf32>
    %123 = arith.divf %121, %122 : vector<2x384xf32>
    %124 = vector.extract_strided_slice %105 {offsets = [0, 768], sizes = [2, 384], strides = [1, 1]} : vector<2x1152xf32> to vector<2x384xf32>
    %125 = vector.extract_strided_slice %107 {offsets = [0, 768], sizes = [2, 384], strides = [1, 1]} : vector<2x1152xf32> to vector<2x384xf32>
    %126 = arith.addf %125, %6 : vector<2x384xf32>
    %127 = arith.mulf %115, %126 : vector<2x384xf32>
    %128 = arith.addf %124, %127 : vector<2x384xf32>
    %129 = math.tanh %128 : vector<2x384xf32>
    %130 = arith.subf %100, %129 : vector<2x384xf32>
    %131 = arith.mulf %123, %130 : vector<2x384xf32>
    %132 = arith.addf %129, %131 : vector<2x384xf32>
    %c0_42 = arith.constant 0 : index
    %c3_43 = arith.constant 3 : index
    %c0_44 = arith.constant 0 : index
    %c0_45 = arith.constant 0 : index
    %133 = vector.load %arg6[%c0_42, %c3_43, %c0_44, %c0_45] : memref<1x8x2x384xf32, #tpu.memory_space<vmem>>, vector<1x1x2x384xf32>
    %134 = vector.shape_cast %133 : vector<1x1x2x384xf32> to vector<2x384xf32>
    %135 = vector.shape_cast %132 : vector<2x384xf32> to vector<1x1x2x384xf32>
    tpu.vector_store %arg6[%c0_42, %c3_43, %c0_44, %c0_45], %135 {strides = array<i32>} : memref<1x8x2x384xf32, #tpu.memory_space<vmem>>, vector<1x1x2x384xf32>,
    %c0_46 = arith.constant 0 : index
    %c4 = arith.constant 4 : index
    %c0_47 = arith.constant 0 : index
    %c0_48 = arith.constant 0 : index
    %136 = vector.load %arg2[%c0_46, %c4, %c0_47, %c0_48] : memref<1x8x2x1152xf32, #tpu.memory_space<vmem>>, vector<1x1x2x1152xf32>
    %137 = vector.shape_cast %136 : vector<1x1x2x1152xf32> to vector<2x1152xf32>
    %138 = arith.truncf %132 : vector<2x384xf32> to vector<2x384xbf16>
    %cst_49 = arith.constant dense<0.000000e+00> : vector<2x1152xf32>
    %139 = tpu.matmul %138, %3, %cst_49 {dimension_numbers = #tpu.dot_dimension_numbers<[1], [0], [0], [1], [0, 0, 1, 1], [], []>} : vector<2x384xbf16>, vector<384x1152xbf16>, vector<2x1152xf32> -> vector<2x1152xf32>
    %140 = vector.extract_strided_slice %137 {offsets = [0, 0], sizes = [2, 384], strides = [1, 1]} : vector<2x1152xf32> to vector<2x384xf32>
    %141 = vector.extract_strided_slice %139 {offsets = [0, 0], sizes = [2, 384], strides = [1, 1]} : vector<2x1152xf32> to vector<2x384xf32>
    %142 = arith.addf %140, %141 : vector<2x384xf32>
    %143 = arith.negf %142 : vector<2x384xf32>
    %144 = math.exp %143 : vector<2x384xf32>
    %cst_50 = arith.constant 1.000000e+00 : f32
    %145 = vector.broadcast %cst_50 : f32 to vector<2x384xf32>
    %146 = arith.addf %145, %144 : vector<2x384xf32>
    %147 = arith.divf %145, %146 : vector<2x384xf32>
    %148 = vector.extract_strided_slice %137 {offsets = [0, 384], sizes = [2, 384], strides = [1, 1]} : vector<2x1152xf32> to vector<2x384xf32>
    %149 = vector.extract_strided_slice %139 {offsets = [0, 384], sizes = [2, 384], strides = [1, 1]} : vector<2x1152xf32> to vector<2x384xf32>
    %150 = arith.addf %148, %149 : vector<2x384xf32>
    %151 = arith.negf %150 : vector<2x384xf32>
    %152 = math.exp %151 : vector<2x384xf32>
    %cst_51 = arith.constant 1.000000e+00 : f32
    %153 = vector.broadcast %cst_51 : f32 to vector<2x384xf32>
    %154 = arith.addf %153, %152 : vector<2x384xf32>
    %155 = arith.divf %153, %154 : vector<2x384xf32>
    %156 = vector.extract_strided_slice %137 {offsets = [0, 768], sizes = [2, 384], strides = [1, 1]} : vector<2x1152xf32> to vector<2x384xf32>
    %157 = vector.extract_strided_slice %139 {offsets = [0, 768], sizes = [2, 384], strides = [1, 1]} : vector<2x1152xf32> to vector<2x384xf32>
    %158 = arith.addf %157, %6 : vector<2x384xf32>
    %159 = arith.mulf %147, %158 : vector<2x384xf32>
    %160 = arith.addf %156, %159 : vector<2x384xf32>
    %161 = math.tanh %160 : vector<2x384xf32>
    %162 = arith.subf %132, %161 : vector<2x384xf32>
    %163 = arith.mulf %155, %162 : vector<2x384xf32>
    %164 = arith.addf %161, %163 : vector<2x384xf32>
    %c0_52 = arith.constant 0 : index
    %c4_53 = arith.constant 4 : index
    %c0_54 = arith.constant 0 : index
    %c0_55 = arith.constant 0 : index
    %165 = vector.load %arg6[%c0_52, %c4_53, %c0_54, %c0_55] : memref<1x8x2x384xf32, #tpu.memory_space<vmem>>, vector<1x1x2x384xf32>
    %166 = vector.shape_cast %165 : vector<1x1x2x384xf32> to vector<2x384xf32>
    %167 = vector.shape_cast %164 : vector<2x384xf32> to vector<1x1x2x384xf32>
    tpu.vector_store %arg6[%c0_52, %c4_53, %c0_54, %c0_55], %167 {strides = array<i32>} : memref<1x8x2x384xf32, #tpu.memory_space<vmem>>, vector<1x1x2x384xf32>,
    %c0_56 = arith.constant 0 : index
    %c5 = arith.constant 5 : index
    %c0_57 = arith.constant 0 : index
    %c0_58 = arith.constant 0 : index
    %168 = vector.load %arg2[%c0_56, %c5, %c0_57, %c0_58] : memref<1x8x2x1152xf32, #tpu.memory_space<vmem>>, vector<1x1x2x1152xf32>
    %169 = vector.shape_cast %168 : vector<1x1x2x1152xf32> to vector<2x1152xf32>
    %170 = arith.truncf %164 : vector<2x384xf32> to vector<2x384xbf16>
    %cst_59 = arith.constant dense<0.000000e+00> : vector<2x1152xf32>
    %171 = tpu.matmul %170, %3, %cst_59 {dimension_numbers = #tpu.dot_dimension_numbers<[1], [0], [0], [1], [0, 0, 1, 1], [], []>} : vector<2x384xbf16>, vector<384x1152xbf16>, vector<2x1152xf32> -> vector<2x1152xf32>
    %172 = vector.extract_strided_slice %169 {offsets = [0, 0], sizes = [2, 384], strides = [1, 1]} : vector<2x1152xf32> to vector<2x384xf32>
    %173 = vector.extract_strided_slice %171 {offsets = [0, 0], sizes = [2, 384], strides = [1, 1]} : vector<2x1152xf32> to vector<2x384xf32>
    %174 = arith.addf %172, %173 : vector<2x384xf32>
    %175 = arith.negf %174 : vector<2x384xf32>
    %176 = math.exp %175 : vector<2x384xf32>
    %cst_60 = arith.constant 1.000000e+00 : f32
    %177 = vector.broadcast %cst_60 : f32 to vector<2x384xf32>
    %178 = arith.addf %177, %176 : vector<2x384xf32>
    %179 = arith.divf %177, %178 : vector<2x384xf32>
    %180 = vector.extract_strided_slice %169 {offsets = [0, 384], sizes = [2, 384], strides = [1, 1]} : vector<2x1152xf32> to vector<2x384xf32>
    %181 = vector.extract_strided_slice %171 {offsets = [0, 384], sizes = [2, 384], strides = [1, 1]} : vector<2x1152xf32> to vector<2x384xf32>
    %182 = arith.addf %180, %181 : vector<2x384xf32>
    %183 = arith.negf %182 : vector<2x384xf32>
    %184 = math.exp %183 : vector<2x384xf32>
    %cst_61 = arith.constant 1.000000e+00 : f32
    %185 = vector.broadcast %cst_61 : f32 to vector<2x384xf32>
    %186 = arith.addf %185, %184 : vector<2x384xf32>
    %187 = arith.divf %185, %186 : vector<2x384xf32>
    %188 = vector.extract_strided_slice %169 {offsets = [0, 768], sizes = [2, 384], strides = [1, 1]} : vector<2x1152xf32> to vector<2x384xf32>
    %189 = vector.extract_strided_slice %171 {offsets = [0, 768], sizes = [2, 384], strides = [1, 1]} : vector<2x1152xf32> to vector<2x384xf32>
    %190 = arith.addf %189, %6 : vector<2x384xf32>
    %191 = arith.mulf %179, %190 : vector<2x384xf32>
    %192 = arith.addf %188, %191 : vector<2x384xf32>
    %193 = math.tanh %192 : vector<2x384xf32>
    %194 = arith.subf %164, %193 : vector<2x384xf32>
    %195 = arith.mulf %187, %194 : vector<2x384xf32>
    %196 = arith.addf %193, %195 : vector<2x384xf32>
    %c0_62 = arith.constant 0 : index
    %c5_63 = arith.constant 5 : index
    %c0_64 = arith.constant 0 : index
    %c0_65 = arith.constant 0 : index
    %197 = vector.load %arg6[%c0_62, %c5_63, %c0_64, %c0_65] : memref<1x8x2x384xf32, #tpu.memory_space<vmem>>, vector<1x1x2x384xf32>
    %198 = vector.shape_cast %197 : vector<1x1x2x384xf32> to vector<2x384xf32>
    %199 = vector.shape_cast %196 : vector<2x384xf32> to vector<1x1x2x384xf32>
    tpu.vector_store %arg6[%c0_62, %c5_63, %c0_64, %c0_65], %199 {strides = array<i32>} : memref<1x8x2x384xf32, #tpu.memory_space<vmem>>, vector<1x1x2x384xf32>,
    %c0_66 = arith.constant 0 : index
    %c6 = arith.constant 6 : index
    %c0_67 = arith.constant 0 : index
    %c0_68 = arith.constant 0 : index
    %200 = vector.load %arg2[%c0_66, %c6, %c0_67, %c0_68] : memref<1x8x2x1152xf32, #tpu.memory_space<vmem>>, vector<1x1x2x1152xf32>
    %201 = vector.shape_cast %200 : vector<1x1x2x1152xf32> to vector<2x1152xf32>
    %202 = arith.truncf %196 : vector<2x384xf32> to vector<2x384xbf16>
    %cst_69 = arith.constant dense<0.000000e+00> : vector<2x1152xf32>
    %203 = tpu.matmul %202, %3, %cst_69 {dimension_numbers = #tpu.dot_dimension_numbers<[1], [0], [0], [1], [0, 0, 1, 1], [], []>} : vector<2x384xbf16>, vector<384x1152xbf16>, vector<2x1152xf32> -> vector<2x1152xf32>
    %204 = vector.extract_strided_slice %201 {offsets = [0, 0], sizes = [2, 384], strides = [1, 1]} : vector<2x1152xf32> to vector<2x384xf32>
    %205 = vector.extract_strided_slice %203 {offsets = [0, 0], sizes = [2, 384], strides = [1, 1]} : vector<2x1152xf32> to vector<2x384xf32>
    %206 = arith.addf %204, %205 : vector<2x384xf32>
    %207 = arith.negf %206 : vector<2x384xf32>
    %208 = math.exp %207 : vector<2x384xf32>
    %cst_70 = arith.constant 1.000000e+00 : f32
    %209 = vector.broadcast %cst_70 : f32 to vector<2x384xf32>
    %210 = arith.addf %209, %208 : vector<2x384xf32>
    %211 = arith.divf %209, %210 : vector<2x384xf32>
    %212 = vector.extract_strided_slice %201 {offsets = [0, 384], sizes = [2, 384], strides = [1, 1]} : vector<2x1152xf32> to vector<2x384xf32>
    %213 = vector.extract_strided_slice %203 {offsets = [0, 384], sizes = [2, 384], strides = [1, 1]} : vector<2x1152xf32> to vector<2x384xf32>
    %214 = arith.addf %212, %213 : vector<2x384xf32>
    %215 = arith.negf %214 : vector<2x384xf32>
    %216 = math.exp %215 : vector<2x384xf32>
    %cst_71 = arith.constant 1.000000e+00 : f32
    %217 = vector.broadcast %cst_71 : f32 to vector<2x384xf32>
    %218 = arith.addf %217, %216 : vector<2x384xf32>
    %219 = arith.divf %217, %218 : vector<2x384xf32>
    %220 = vector.extract_strided_slice %201 {offsets = [0, 768], sizes = [2, 384], strides = [1, 1]} : vector<2x1152xf32> to vector<2x384xf32>
    %221 = vector.extract_strided_slice %203 {offsets = [0, 768], sizes = [2, 384], strides = [1, 1]} : vector<2x1152xf32> to vector<2x384xf32>
    %222 = arith.addf %221, %6 : vector<2x384xf32>
    %223 = arith.mulf %211, %222 : vector<2x384xf32>
    %224 = arith.addf %220, %223 : vector<2x384xf32>
    %225 = math.tanh %224 : vector<2x384xf32>
    %226 = arith.subf %196, %225 : vector<2x384xf32>
    %227 = arith.mulf %219, %226 : vector<2x384xf32>
    %228 = arith.addf %225, %227 : vector<2x384xf32>
    %c0_72 = arith.constant 0 : index
    %c6_73 = arith.constant 6 : index
    %c0_74 = arith.constant 0 : index
    %c0_75 = arith.constant 0 : index
    %229 = vector.load %arg6[%c0_72, %c6_73, %c0_74, %c0_75] : memref<1x8x2x384xf32, #tpu.memory_space<vmem>>, vector<1x1x2x384xf32>
    %230 = vector.shape_cast %229 : vector<1x1x2x384xf32> to vector<2x384xf32>
    %231 = vector.shape_cast %228 : vector<2x384xf32> to vector<1x1x2x384xf32>
    tpu.vector_store %arg6[%c0_72, %c6_73, %c0_74, %c0_75], %231 {strides = array<i32>} : memref<1x8x2x384xf32, #tpu.memory_space<vmem>>, vector<1x1x2x384xf32>,
    %c0_76 = arith.constant 0 : index
    %c7 = arith.constant 7 : index
    %c0_77 = arith.constant 0 : index
    %c0_78 = arith.constant 0 : index
    %232 = vector.load %arg2[%c0_76, %c7, %c0_77, %c0_78] : memref<1x8x2x1152xf32, #tpu.memory_space<vmem>>, vector<1x1x2x1152xf32>
    %233 = vector.shape_cast %232 : vector<1x1x2x1152xf32> to vector<2x1152xf32>
    %234 = arith.truncf %228 : vector<2x384xf32> to vector<2x384xbf16>
    %cst_79 = arith.constant dense<0.000000e+00> : vector<2x1152xf32>
    %235 = tpu.matmul %234, %3, %cst_79 {dimension_numbers = #tpu.dot_dimension_numbers<[1], [0], [0], [1], [0, 0, 1, 1], [], []>} : vector<2x384xbf16>, vector<384x1152xbf16>, vector<2x1152xf32> -> vector<2x1152xf32>
    %236 = vector.extract_strided_slice %233 {offsets = [0, 0], sizes = [2, 384], strides = [1, 1]} : vector<2x1152xf32> to vector<2x384xf32>
    %237 = vector.extract_strided_slice %235 {offsets = [0, 0], sizes = [2, 384], strides = [1, 1]} : vector<2x1152xf32> to vector<2x384xf32>
    %238 = arith.addf %236, %237 : vector<2x384xf32>
    %239 = arith.negf %238 : vector<2x384xf32>
    %240 = math.exp %239 : vector<2x384xf32>
    %cst_80 = arith.constant 1.000000e+00 : f32
    %241 = vector.broadcast %cst_80 : f32 to vector<2x384xf32>
    %242 = arith.addf %241, %240 : vector<2x384xf32>
    %243 = arith.divf %241, %242 : vector<2x384xf32>
    %244 = vector.extract_strided_slice %233 {offsets = [0, 384], sizes = [2, 384], strides = [1, 1]} : vector<2x1152xf32> to vector<2x384xf32>
    %245 = vector.extract_strided_slice %235 {offsets = [0, 384], sizes = [2, 384], strides = [1, 1]} : vector<2x1152xf32> to vector<2x384xf32>
    %246 = arith.addf %244, %245 : vector<2x384xf32>
    %247 = arith.negf %246 : vector<2x384xf32>
    %248 = math.exp %247 : vector<2x384xf32>
    %cst_81 = arith.constant 1.000000e+00 : f32
    %249 = vector.broadcast %cst_81 : f32 to vector<2x384xf32>
    %250 = arith.addf %249, %248 : vector<2x384xf32>
    %251 = arith.divf %249, %250 : vector<2x384xf32>
    %252 = vector.extract_strided_slice %233 {offsets = [0, 768], sizes = [2, 384], strides = [1, 1]} : vector<2x1152xf32> to vector<2x384xf32>
    %253 = vector.extract_strided_slice %235 {offsets = [0, 768], sizes = [2, 384], strides = [1, 1]} : vector<2x1152xf32> to vector<2x384xf32>
    %254 = arith.addf %253, %6 : vector<2x384xf32>
    %255 = arith.mulf %243, %254 : vector<2x384xf32>
    %256 = arith.addf %252, %255 : vector<2x384xf32>
    %257 = math.tanh %256 : vector<2x384xf32>
    %258 = arith.subf %228, %257 : vector<2x384xf32>
    %259 = arith.mulf %251, %258 : vector<2x384xf32>
    %260 = arith.addf %257, %259 : vector<2x384xf32>
    %c0_82 = arith.constant 0 : index
    %c7_83 = arith.constant 7 : index
    %c0_84 = arith.constant 0 : index
    %c0_85 = arith.constant 0 : index
    %261 = vector.load %arg6[%c0_82, %c7_83, %c0_84, %c0_85] : memref<1x8x2x384xf32, #tpu.memory_space<vmem>>, vector<1x1x2x384xf32>
    %262 = vector.shape_cast %261 : vector<1x1x2x384xf32> to vector<2x384xf32>
    %263 = vector.shape_cast %260 : vector<2x384xf32> to vector<1x1x2x384xf32>
    tpu.vector_store %arg6[%c0_82, %c7_83, %c0_84, %c0_85], %263 {strides = array<i32>} : memref<1x8x2x384xf32, #tpu.memory_space<vmem>>, vector<1x1x2x384xf32>,
    %c0_86 = arith.constant 0 : index
    %c0_87 = arith.constant 0 : index
    %264 = vector.load %arg7[%c0_86, %c0_87] : memref<2x384xf32, #tpu.memory_space<vmem>>, vector<2x384xf32>
    tpu.vector_store %arg7[%c0_86, %c0_87], %260 {strides = array<i32>} : memref<2x384xf32, #tpu.memory_space<vmem>>, vector<2x384xf32>,
    return
  }
  func.func @transform_0(%arg0: i32, %arg1: i32) -> (i32, i32, i32, i32) {
    %c0_i32 = arith.constant 0 : i32
    %c0_i32_0 = arith.constant 0 : i32
    %c0_i32_1 = arith.constant 0 : i32
    return %arg0, %arg1, %c0_i32, %c0_i32_0 : i32, i32, i32, i32
  }
  func.func @transform_1(%arg0: i32, %arg1: i32) -> (i32, i32, i32) {
    %c0_i32 = arith.constant 0 : i32
    %c0_i32_0 = arith.constant 0 : i32
    %c0_i32_1 = arith.constant 0 : i32
    return %arg0, %c0_i32, %c0_i32_0 : i32, i32, i32
  }
  func.func @transform_2(%arg0: i32, %arg1: i32) -> (i32, i32) {
    %c0_i32 = arith.constant 0 : i32
    %c0_i32_0 = arith.constant 0 : i32
    %c0_i32_1 = arith.constant 0 : i32
    return %c0_i32, %c0_i32_0 : i32, i32
  }
  func.func @transform_3(%arg0: i32, %arg1: i32) -> (i32, i32) {
    %c0_i32 = arith.constant 0 : i32
    %c0_i32_0 = arith.constant 0 : i32
    %c0_i32_1 = arith.constant 0 : i32
    return %c0_i32, %c0_i32_0 : i32, i32
  }
  func.func @transform_4(%arg0: i32, %arg1: i32) -> (i32, i32, i32, i32) {
    %c0_i32 = arith.constant 0 : i32
    %c0_i32_0 = arith.constant 0 : i32
    %c0_i32_1 = arith.constant 0 : i32
    return %arg0, %arg1, %c0_i32, %c0_i32_0 : i32, i32, i32, i32
  }
}

</mosaic_0001>

<llo_original>
// kernel: decoder_forward.1
$region0: #{decoder_forward.1}
  #allocation0 [shape = 'u32[]', space=smem, size = 0x4, offset = 0x4, fixed_abs, tag = 'smem constant byte address 0x4 - core index']
  #allocation1 [shape = 'u32[144,128]{1,0:T(1,128)}', space=vmem, size = 0x12000, scoped, tag = 'internal scratch']
  #allocation2 [shape = 'f32[2,384]{1,0:T(2,128)}', space=vmem, size = 0xc00, scoped, tag = 'scratch operand']
  %s0 = inlined_call_operand.vmem [shape: f32[1,8,2,1152], index: 0, kind: input, shape index: {}]
  %s1 = inlined_call_operand.vmem [shape: f32[1,2,384], index: 1, kind: input, shape index: {}]
  %s2 = inlined_call_operand.vmem [shape: bf16[384,1152], index: 2, kind: input, shape index: {}]
  %s3 = inlined_call_operand.vmem [shape: f32[1,384], index: 3, kind: input, shape index: {}]
  %s4 = inlined_call_operand.vmem [shape: f32[1,8,2,384], index: 4, kind: output, shape index: {}]
  %s5 = sld [smem:[#allocation0]]
  $region30: #{decoder_forward.1} parent=0
    _
  %s7 = ssub.s32 1, %s5
  %s8 = scalar_select 0, %s7, %s5
  // Predicated region
  $region2: #{decoder_forward.1} parent=0 // pred_check
    _
  $region3: #{decoder_forward.1} parent=0 // pred_check_branch
    %10 = sbr.rel (0) target = $region5
  $region4: #{decoder_forward.1} parent=0 // pred_region
    _
  $region5: #{decoder_forward.1} parent=0 // pred_fallthru
    _
  // Predicated region
  $region6: #{decoder_forward.1} parent=0 // pred_check
    _
  $region7: #{decoder_forward.1} parent=0 // pred_check_branch
    %12 = sbr.rel (0) target = $region9
  $region8: #{decoder_forward.1} parent=0 // pred_region
    _
  $region9: #{decoder_forward.1} parent=0 // pred_fallthru
    _
  // Predicated region
  $region10: #{decoder_forward.1} parent=0 // pred_check
    _
  $region11: #{decoder_forward.1} parent=0 // pred_check_branch
    %14 = sbr.rel (0) target = $region13
  $region12: #{decoder_forward.1} parent=0 // pred_region
    _
  $region13: #{decoder_forward.1} parent=0 // pred_fallthru
    _
  // Predicated region
  $region14: #{decoder_forward.1} parent=0 // pred_check
    _
  $region15: #{decoder_forward.1} parent=0 // pred_check_branch
    %16 = sbr.rel (0) target = $region17
  $region16: #{decoder_forward.1} parent=0 // pred_region
    _
  $region17: #{decoder_forward.1} parent=0 // pred_fallthru
    _
  %p18 = scmp.eq.s32.totalorder 0, 0
  // Predicated region
  $region18: #{decoder_forward.1} parent=0 // pred_check
    %p19 = pneg %p18
  $region19: #{decoder_forward.1} parent=0 // pred_check_branch
    %21 = sbr.rel (%p19) target = $region21
  $region20: #{decoder_forward.1} parent=0 // pred_region
    %v22 = vld [vmem:[%s1] sm:$0x3f]
    %23 = vst [vmem:[#allocation2] sm:$0x3f] %v22
  $region21: #{decoder_forward.1} parent=0 // pred_fallthru
    _
  %v24 = vld [vmem:[%s2] sm:$0xff]
  %v25 = vld [vmem:[%s2 + $0x8] sm:$0xff]
  %v26 = vld [vmem:[%s2 + $0x10] sm:$0xff]
  %v27 = vld [vmem:[%s2 + $0x18] sm:$0xff]
  %v28 = vld [vmem:[%s2 + $0x20] sm:$0xf]
  %v29 = vld [vmem:[%s2 + $0x24] sm:$0xff]
  %v30 = vld [vmem:[%s2 + $0x2c] sm:$0xff]
  %v31 = vld [vmem:[%s2 + $0x34] sm:$0xff]
  %v32 = vld [vmem:[%s2 + $0x3c] sm:$0xff]
  %v33 = vld [vmem:[%s2 + $0x44] sm:$0xf]
  %v34 = vld [vmem:[%s2 + $0x48] sm:$0xff]
  %v35 = vld [vmem:[%s2 + $0x50] sm:$0xff]
  %v36 = vld [vmem:[%s2 + $0x58] sm:$0xff]
  %v37 = vld [vmem:[%s2 + $0x60] sm:$0xff]
  %v38 = vld [vmem:[%s2 + $0x68] sm:$0xf]
  %v39 = vld [vmem:[%s2 + $0x6c] sm:$0xff]
  %v40 = vld [vmem:[%s2 + $0x74] sm:$0xff]
  %v41 = vld [vmem:[%s2 + $0x7c] sm:$0xff]
  %v42 = vld [vmem:[%s2 + $0x84] sm:$0xff]
  %v43 = vld [vmem:[%s2 + $0x8c] sm:$0xf]
  %v44 = vld [vmem:[%s2 + $0x90] sm:$0xff]
  %v45 = vld [vmem:[%s2 + $0x98] sm:$0xff]
  %v46 = vld [vmem:[%s2 + $0xa0] sm:$0xff]
  %v47 = vld [vmem:[%s2 + $0xa8] sm:$0xff]
  %v48 = vld [vmem:[%s2 + $0xb0] sm:$0xf]
  %v49 = vld [vmem:[%s2 + $0xb4] sm:$0xff]
  %v50 = vld [vmem:[%s2 + $0xbc] sm:$0xff]
  %v51 = vld [vmem:[%s2 + $0xc4] sm:$0xff]
  %v52 = vld [vmem:[%s2 + $0xcc] sm:$0xff]
  %v53 = vld [vmem:[%s2 + $0xd4] sm:$0xf]
  %v54 = vld [vmem:[%s2 + $0xd8] sm:$0xff]
  %v55 = vld [vmem:[%s2 + $0xe0] sm:$0xff]
  %v56 = vld [vmem:[%s2 + $0xe8] sm:$0xff]
  %v57 = vld [vmem:[%s2 + $0xf0] sm:$0xff]
  %v58 = vld [vmem:[%s2 + $0xf8] sm:$0xf]
  %v59 = vld [vmem:[%s2 + $0xfc] sm:$0xff]
  %v60 = vld [vmem:[%s2 + $0x104] sm:$0xff]
  %v61 = vld [vmem:[%s2 + $0x10c] sm:$0xff]
  %v62 = vld [vmem:[%s2 + $0x114] sm:$0xff]
  %v63 = vld [vmem:[%s2 + $0x11c] sm:$0xf]
  %v64 = vld [vmem:[%s2 + $0x120] sm:$0xff]
  %v65 = vld [vmem:[%s2 + $0x128] sm:$0xff]
  %v66 = vld [vmem:[%s2 + $0x130] sm:$0xff]
  %v67 = vld [vmem:[%s2 + $0x138] sm:$0xff]
  %v68 = vld [vmem:[%s2 + $0x140] sm:$0xf]
  %v69 = vld [vmem:[%s2 + $0x144] sm:$0xff]
  %v70 = vld [vmem:[%s2 + $0x14c] sm:$0xff]
  %v71 = vld [vmem:[%s2 + $0x154] sm:$0xff]
  %v72 = vld [vmem:[%s2 + $0x15c] sm:$0xff]
  %v73 = vld [vmem:[%s2 + $0x164] sm:$0xf]
  %v74 = vld [vmem:[%s2 + $0x168] sm:$0xff]
  %v75 = vld [vmem:[%s2 + $0x170] sm:$0xff]
  %v76 = vld [vmem:[%s2 + $0x178] sm:$0xff]
  %v77 = vld [vmem:[%s2 + $0x180] sm:$0xff]
  %v78 = vld [vmem:[%s2 + $0x188] sm:$0xf]
  %v79 = vld [vmem:[%s2 + $0x18c] sm:$0xff]
  %v80 = vld [vmem:[%s2 + $0x194] sm:$0xff]
  %v81 = vld [vmem:[%s2 + $0x19c] sm:$0xff]
  %v82 = vld [vmem:[%s2 + $0x1a4] sm:$0xff]
  %v83 = vld [vmem:[%s2 + $0x1ac] sm:$0xf]
  %v84 = vld [vmem:[%s2 + $0x1b0] sm:$0xff]
  %v85 = vld [vmem:[%s2 + $0x1b8] sm:$0xff]
  %v86 = vld [vmem:[%s2 + $0x1c0] sm:$0xff]
  %v87 = vld [vmem:[%s2 + $0x1c8] sm:$0xff]
  %v88 = vld [vmem:[%s2 + $0x1d0] sm:$0xf]
  %v89 = vld [vmem:[%s2 + $0x1d4] sm:$0xff]
  %v90 = vld [vmem:[%s2 + $0x1dc] sm:$0xff]
  %v91 = vld [vmem:[%s2 + $0x1e4] sm:$0xff]
  %v92 = vld [vmem:[%s2 + $0x1ec] sm:$0xff]
  %v93 = vld [vmem:[%s2 + $0x1f4] sm:$0xf]
  %v94 = vld [vmem:[%s2 + $0x1f8] sm:$0xff]
  %v95 = vld [vmem:[%s2 + $0x200] sm:$0xff]
  %v96 = vld [vmem:[%s2 + $0x208] sm:$0xff]
  %v97 = vld [vmem:[%s2 + $0x210] sm:$0xff]
  %v98 = vld [vmem:[%s2 + $0x218] sm:$0xf]
  %v99 = vld [vmem:[%s2 + $0x21c] sm:$0xff]
  %v100 = vld [vmem:[%s2 + $0x224] sm:$0xff]
  %v101 = vld [vmem:[%s2 + $0x22c] sm:$0xff]
  %v102 = vld [vmem:[%s2 + $0x234] sm:$0xff]
  %v103 = vld [vmem:[%s2 + $0x23c] sm:$0xf]
  %v104 = vld [vmem:[%s2 + $0x240] sm:$0xff]
  %v105 = vld [vmem:[%s2 + $0x248] sm:$0xff]
  %v106 = vld [vmem:[%s2 + $0x250] sm:$0xff]
  %v107 = vld [vmem:[%s2 + $0x258] sm:$0xff]
  %v108 = vld [vmem:[%s2 + $0x260] sm:$0xf]
  %v109 = vld [vmem:[%s2 + $0x264] sm:$0xff]
  %v110 = vld [vmem:[%s2 + $0x26c] sm:$0xff]
  %v111 = vld [vmem:[%s2 + $0x274] sm:$0xff]
  %v112 = vld [vmem:[%s2 + $0x27c] sm:$0xff]
  %v113 = vld [vmem:[%s2 + $0x284] sm:$0xf]
  %v114 = vld [vmem:[%s2 + $0x288] sm:$0xff]
  %v115 = vld [vmem:[%s2 + $0x290] sm:$0xff]
  %v116 = vld [vmem:[%s2 + $0x298] sm:$0xff]
  %v117 = vld [vmem:[%s2 + $0x2a0] sm:$0xff]
  %v118 = vld [vmem:[%s2 + $0x2a8] sm:$0xf]
  %v119 = vld [vmem:[%s2 + $0x2ac] sm:$0xff]
  %v120 = vld [vmem:[%s2 + $0x2b4] sm:$0xff]
  %v121 = vld [vmem:[%s2 + $0x2bc] sm:$0xff]
  %v122 = vld [vmem:[%s2 + $0x2c4] sm:$0xff]
  %v123 = vld [vmem:[%s2 + $0x2cc] sm:$0xf]
  %v124 = vld [vmem:[%s2 + $0x2d0] sm:$0xff]
  %v125 = vld [vmem:[%s2 + $0x2d8] sm:$0xff]
  %v126 = vld [vmem:[%s2 + $0x2e0] sm:$0xff]
  %v127 = vld [vmem:[%s2 + $0x2e8] sm:$0xff]
  %v128 = vld [vmem:[%s2 + $0x2f0] sm:$0xf]
  %v129 = vld [vmem:[%s2 + $0x2f4] sm:$0xff]
  %v130 = vld [vmem:[%s2 + $0x2fc] sm:$0xff]
  %v131 = vld [vmem:[%s2 + $0x304] sm:$0xff]
  %v132 = vld [vmem:[%s2 + $0x30c] sm:$0xff]
  %v133 = vld [vmem:[%s2 + $0x314] sm:$0xf]
  %v134 = vld [vmem:[%s2 + $0x318] sm:$0xff]
  %v135 = vld [vmem:[%s2 + $0x320] sm:$0xff]
  %v136 = vld [vmem:[%s2 + $0x328] sm:$0xff]
  %v137 = vld [vmem:[%s2 + $0x330] sm:$0xff]
  %v138 = vld [vmem:[%s2 + $0x338] sm:$0xf]
  %v139 = vld [vmem:[%s2 + $0x33c] sm:$0xff]
  %v140 = vld [vmem:[%s2 + $0x344] sm:$0xff]
  %v141 = vld [vmem:[%s2 + $0x34c] sm:$0xff]
  %v142 = vld [vmem:[%s2 + $0x354] sm:$0xff]
  %v143 = vld [vmem:[%s2 + $0x35c] sm:$0xf]
  %v144 = vld [vmem:[%s2 + $0x360] sm:$0xff]
  %v145 = vld [vmem:[%s2 + $0x368] sm:$0xff]
  %v146 = vld [vmem:[%s2 + $0x370] sm:$0xff]
  %v147 = vld [vmem:[%s2 + $0x378] sm:$0xff]
  %v148 = vld [vmem:[%s2 + $0x380] sm:$0xf]
  %v149 = vld [vmem:[%s2 + $0x384] sm:$0xff]
  %v150 = vld [vmem:[%s2 + $0x38c] sm:$0xff]
  %v151 = vld [vmem:[%s2 + $0x394] sm:$0xff]
  %v152 = vld [vmem:[%s2 + $0x39c] sm:$0xff]
  %v153 = vld [vmem:[%s2 + $0x3a4] sm:$0xf]
  %v154 = vld [vmem:[%s2 + $0x3a8] sm:$0xff]
  %v155 = vld [vmem:[%s2 + $0x3b0] sm:$0xff]
  %v156 = vld [vmem:[%s2 + $0x3b8] sm:$0xff]
  %v157 = vld [vmem:[%s2 + $0x3c0] sm:$0xff]
  %v158 = vld [vmem:[%s2 + $0x3c8] sm:$0xf]
  %v159 = vld [vmem:[%s2 + $0x3cc] sm:$0xff]
  %v160 = vld [vmem:[%s2 + $0x3d4] sm:$0xff]
  %v161 = vld [vmem:[%s2 + $0x3dc] sm:$0xff]
  %v162 = vld [vmem:[%s2 + $0x3e4] sm:$0xff]
  %v163 = vld [vmem:[%s2 + $0x3ec] sm:$0xf]
  %v164 = vld [vmem:[%s2 + $0x3f0] sm:$0xff]
  %v165 = vld [vmem:[%s2 + $0x3f8] sm:$0xff]
  %v166 = vld [vmem:[%s2 + $0x400] sm:$0xff]
  %v167 = vld [vmem:[%s2 + $0x408] sm:$0xff]
  %v168 = vld [vmem:[%s2 + $0x410] sm:$0xf]
  %v169 = vld [vmem:[%s2 + $0x414] sm:$0xff]
  %v170 = vld [vmem:[%s2 + $0x41c] sm:$0xff]
  %v171 = vld [vmem:[%s2 + $0x424] sm:$0xff]
  %v172 = vld [vmem:[%s2 + $0x42c] sm:$0xff]
  %v173 = vld [vmem:[%s2 + $0x434] sm:$0xf]
  %v174 = vld [vmem:[%s2 + $0x438] sm:$0xff]
  %v175 = vld [vmem:[%s2 + $0x440] sm:$0xff]
  %v176 = vld [vmem:[%s2 + $0x448] sm:$0xff]
  %v177 = vld [vmem:[%s2 + $0x450] sm:$0xff]
  %v178 = vld [vmem:[%s2 + $0x458] sm:$0xf]
  %v179 = vld [vmem:[%s2 + $0x45c] sm:$0xff]
  %v180 = vld [vmem:[%s2 + $0x464] sm:$0xff]
  %v181 = vld [vmem:[%s2 + $0x46c] sm:$0xff]
  %v182 = vld [vmem:[%s2 + $0x474] sm:$0xff]
  %v183 = vld [vmem:[%s2 + $0x47c] sm:$0xf]
  %v184 = vld [vmem:[%s2 + $0x480] sm:$0xff]
  %v185 = vld [vmem:[%s2 + $0x488] sm:$0xff]
  %v186 = vld [vmem:[%s2 + $0x490] sm:$0xff]
  %v187 = vld [vmem:[%s2 + $0x498] sm:$0xff]
  %v188 = vld [vmem:[%s2 + $0x4a0] sm:$0xf]
  %v189 = vld [vmem:[%s2 + $0x4a4] sm:$0xff]
  %v190 = vld [vmem:[%s2 + $0x4ac] sm:$0xff]
  %v191 = vld [vmem:[%s2 + $0x4b4] sm:$0xff]
  %v192 = vld [vmem:[%s2 + $0x4bc] sm:$0xff]
  %v193 = vld [vmem:[%s2 + $0x4c4] sm:$0xf]
  %v194 = vld [vmem:[%s2 + $0x4c8] sm:$0xff]
  %v195 = vld [vmem:[%s2 + $0x4d0] sm:$0xff]
  %v196 = vld [vmem:[%s2 + $0x4d8] sm:$0xff]
  %v197 = vld [vmem:[%s2 + $0x4e0] sm:$0xff]
  %v198 = vld [vmem:[%s2 + $0x4e8] sm:$0xf]
  %v199 = vld [vmem:[%s2 + $0x4ec] sm:$0xff]
  %v200 = vld [vmem:[%s2 + $0x4f4] sm:$0xff]
  %v201 = vld [vmem:[%s2 + $0x4fc] sm:$0xff]
  %v202 = vld [vmem:[%s2 + $0x504] sm:$0xff]
  %v203 = vld [vmem:[%s2 + $0x50c] sm:$0xf]
  %v204 = vld [vmem:[%s2 + $0x510] sm:$0xff]
  %v205 = vld [vmem:[%s2 + $0x518] sm:$0xff]
  %v206 = vld [vmem:[%s2 + $0x520] sm:$0xff]
  %v207 = vld [vmem:[%s2 + $0x528] sm:$0xff]
  %v208 = vld [vmem:[%s2 + $0x530] sm:$0xf]
  %v209 = vld [vmem:[%s2 + $0x534] sm:$0xff]
  %v210 = vld [vmem:[%s2 + $0x53c] sm:$0xff]
  %v211 = vld [vmem:[%s2 + $0x544] sm:$0xff]
  %v212 = vld [vmem:[%s2 + $0x54c] sm:$0xff]
  %v213 = vld [vmem:[%s2 + $0x554] sm:$0xf]
  %v214 = vld [vmem:[%s2 + $0x558] sm:$0xff]
  %v215 = vld [vmem:[%s2 + $0x560] sm:$0xff]
  %v216 = vld [vmem:[%s2 + $0x568] sm:$0xff]
  %v217 = vld [vmem:[%s2 + $0x570] sm:$0xff]
  %v218 = vld [vmem:[%s2 + $0x578] sm:$0xf]
  %v219 = vld [vmem:[%s2 + $0x57c] sm:$0xff]
  %v220 = vld [vmem:[%s2 + $0x584] sm:$0xff]
  %v221 = vld [vmem:[%s2 + $0x58c] sm:$0xff]
  %v222 = vld [vmem:[%s2 + $0x594] sm:$0xff]
  %v223 = vld [vmem:[%s2 + $0x59c] sm:$0xf]
  %v224 = vld [vmem:[%s2 + $0x5a0] sm:$0xff]
  %v225 = vld [vmem:[%s2 + $0x5a8] sm:$0xff]
  %v226 = vld [vmem:[%s2 + $0x5b0] sm:$0xff]
  %v227 = vld [vmem:[%s2 + $0x5b8] sm:$0xff]
  %v228 = vld [vmem:[%s2 + $0x5c0] sm:$0xf]
  %v229 = vld [vmem:[%s2 + $0x5c4] sm:$0xff]
  %v230 = vld [vmem:[%s2 + $0x5cc] sm:$0xff]
  %v231 = vld [vmem:[%s2 + $0x5d4] sm:$0xff]
  %v232 = vld [vmem:[%s2 + $0x5dc] sm:$0xff]
  %v233 = vld [vmem:[%s2 + $0x5e4] sm:$0xf]
  %v234 = vld [vmem:[%s2 + $0x5e8] sm:$0xff]
  %v235 = vld [vmem:[%s2 + $0x5f0] sm:$0xff]
  %v236 = vld [vmem:[%s2 + $0x5f8] sm:$0xff]
  %v237 = vld [vmem:[%s2 + $0x600] sm:$0xff]
  %v238 = vld [vmem:[%s2 + $0x608] sm:$0xf]
  %v239 = vld [vmem:[%s2 + $0x60c] sm:$0xff]
  %v240 = vld [vmem:[%s2 + $0x614] sm:$0xff]
  %v241 = vld [vmem:[%s2 + $0x61c] sm:$0xff]
  %v242 = vld [vmem:[%s2 + $0x624] sm:$0xff]
  %v243 = vld [vmem:[%s2 + $0x62c] sm:$0xf]
  %v244 = vld [vmem:[%s2 + $0x630] sm:$0xff]
  %v245 = vld [vmem:[%s2 + $0x638] sm:$0xff]
  %v246 = vld [vmem:[%s2 + $0x640] sm:$0xff]
  %v247 = vld [vmem:[%s2 + $0x648] sm:$0xff]
  %v248 = vld [vmem:[%s2 + $0x650] sm:$0xf]
  %v249 = vld [vmem:[%s2 + $0x654] sm:$0xff]
  %v250 = vld [vmem:[%s2 + $0x65c] sm:$0xff]
  %v251 = vld [vmem:[%s2 + $0x664] sm:$0xff]
  %v252 = vld [vmem:[%s2 + $0x66c] sm:$0xff]
  %v253 = vld [vmem:[%s2 + $0x674] sm:$0xf]
  %v254 = vld [vmem:[%s2 + $0x678] sm:$0xff]
  %v255 = vld [vmem:[%s2 + $0x680] sm:$0xff]
  %v256 = vld [vmem:[%s2 + $0x688] sm:$0xff]
  %v257 = vld [vmem:[%s2 + $0x690] sm:$0xff]
  %v258 = vld [vmem:[%s2 + $0x698] sm:$0xf]
  %v259 = vld [vmem:[%s2 + $0x69c] sm:$0xff]
  %v260 = vld [vmem:[%s2 + $0x6a4] sm:$0xff]
  %v261 = vld [vmem:[%s2 + $0x6ac] sm:$0xff]
  %v262 = vld [vmem:[%s2 + $0x6b4] sm:$0xff]
  %v263 = vld [vmem:[%s2 + $0x6bc] sm:$0xf]
  %v264 = vld [vmem:[%s3] sm:$0x7]
  %v266 = vlaneseq
  %v267 = vshrl.u32 %v266, 7
  %v268 = vsub.s32 0, %v267
  %v269 = vrot.slane %v264, %v268
  %v270 = vlaneseq
  %v271 = vshrl.u32 %v270, 7
  %v272 = vsub.s32 1, %v271
  %v273 = vrot.slane %v264, %v272
  %v274 = vlaneseq
  %v275 = vshrl.u32 %v274, 7
  %v276 = vsub.s32 2, %v275
  %v277 = vrot.slane %v264, %v276
  %v281 = vld [vmem:[#allocation2] sm:$0x3f]
  %v282 = vld [vmem:[%s0] sm:$0xff]
  %v283 = vld [vmem:[%s0 + $0x8] sm:$0xff]
  %v284 = vld [vmem:[%s0 + $0x10] sm:$0x3]
  %v286 = vcombine.high %v281, %v281
  %v288 = vunpack.c.l.s4 1983009808
  %v289 = vunpack.c.0.s8 %v288
  %v290 = vlaneseq
  %v291 = vshrl.u32 %v290, 7
  %v292 = vsub.s32 %v289, %v291
  %v293 = vrot.slane %v281, %v292
  %v295 = vunpack.c.l.s4 1983009808
  %v296 = vunpack.c.0.s8 %v295
  %v297 = vlaneseq
  %v298 = vshrl.u32 %v297, 7
  %v299 = vsub.s32 %v296, %v298
  %v300 = vrot.slane %v286, %v299
  %v301 = vcombine.high %v293, %v293
  %v305 = vpack.c.bf16 %v293, %v293
  %v306 = vpack.c.bf16 %v301, %v301
  %v307 = vpack.c.bf16 %v300, %v300
  %v548 = vunpack.c.l.b16 %v24
  %v549 = vunpack.c.h.b16 %v24
  %v550 = vunpack.c.l.b16 %v25
  %v551 = vunpack.c.h.b16 %v25
  %v552 = vunpack.c.l.b16 %v26
  %v553 = vunpack.c.h.b16 %v26
  %v554 = vunpack.c.l.b16 %v27
  %v555 = vunpack.c.h.b16 %v27
  %v556 = vunpack.c.l.b16 %v28
  %v557 = vunpack.c.l.b16 %v29
  %v558 = vunpack.c.h.b16 %v29
  %v559 = vunpack.c.l.b16 %v30
  %v560 = vunpack.c.h.b16 %v30
  %v561 = vunpack.c.l.b16 %v31
  %v562 = vunpack.c.h.b16 %v31
  %v563 = vunpack.c.l.b16 %v32
  %v564 = vunpack.c.h.b16 %v32
  %v565 = vunpack.c.l.b16 %v33
  %v566 = vunpack.c.l.b16 %v34
  %v567 = vunpack.c.h.b16 %v34
  %v568 = vunpack.c.l.b16 %v35
  %v569 = vunpack.c.h.b16 %v35
  %v570 = vunpack.c.l.b16 %v36
  %v571 = vunpack.c.h.b16 %v36
  %v572 = vunpack.c.l.b16 %v37
  %v573 = vunpack.c.h.b16 %v37
  %v574 = vunpack.c.l.b16 %v38
  %v575 = vunpack.c.l.b16 %v39
  %v576 = vunpack.c.h.b16 %v39
  %v577 = vunpack.c.l.b16 %v40
  %v578 = vunpack.c.h.b16 %v40
  %v579 = vunpack.c.l.b16 %v41
  %v580 = vunpack.c.h.b16 %v41
  %v581 = vunpack.c.l.b16 %v42
  %v582 = vunpack.c.h.b16 %v42
  %v583 = vunpack.c.l.b16 %v43
  %v584 = vunpack.c.l.b16 %v44
  %v585 = vunpack.c.h.b16 %v44
  %v586 = vunpack.c.l.b16 %v45
  %v587 = vunpack.c.h.b16 %v45
  %v588 = vunpack.c.l.b16 %v46
  %v589 = vunpack.c.h.b16 %v46
  %v590 = vunpack.c.l.b16 %v47
  %v591 = vunpack.c.h.b16 %v47
  %v592 = vunpack.c.l.b16 %v48
  %v593 = vunpack.c.l.b16 %v49
  %v594 = vunpack.c.h.b16 %v49
  %v595 = vunpack.c.l.b16 %v50
  %v596 = vunpack.c.h.b16 %v50
  %v597 = vunpack.c.l.b16 %v51
  %v598 = vunpack.c.h.b16 %v51
  %v599 = vunpack.c.l.b16 %v52
  %v600 = vunpack.c.h.b16 %v52
  %v601 = vunpack.c.l.b16 %v53
  %v602 = vunpack.c.l.b16 %v54
  %v603 = vunpack.c.h.b16 %v54
  %v604 = vunpack.c.l.b16 %v55
  %v605 = vunpack.c.h.b16 %v55
  %v606 = vunpack.c.l.b16 %v56
  %v607 = vunpack.c.h.b16 %v56
  %v608 = vunpack.c.l.b16 %v57
  %v609 = vunpack.c.h.b16 %v57
  %v610 = vunpack.c.l.b16 %v58
  %v611 = vunpack.c.l.b16 %v59
  %v612 = vunpack.c.h.b16 %v59
  %v613 = vunpack.c.l.b16 %v60
  %v614 = vunpack.c.h.b16 %v60
  %v615 = vunpack.c.l.b16 %v61
  %v616 = vunpack.c.h.b16 %v61
  %v617 = vunpack.c.l.b16 %v62
  %v618 = vunpack.c.h.b16 %v62
  %v619 = vunpack.c.l.b16 %v63
  %v620 = vunpack.c.l.b16 %v64
  %v621 = vunpack.c.h.b16 %v64
  %v622 = vunpack.c.l.b16 %v65
  %v623 = vunpack.c.h.b16 %v65
  %v624 = vunpack.c.l.b16 %v66
  %v625 = vunpack.c.h.b16 %v66
  %v626 = vunpack.c.l.b16 %v67
  %v627 = vunpack.c.h.b16 %v67
  %v628 = vunpack.c.l.b16 %v68
  %v629 = vunpack.c.l.b16 %v69
  %v630 = vunpack.c.h.b16 %v69
  %v631 = vunpack.c.l.b16 %v70
  %v632 = vunpack.c.h.b16 %v70
  %v633 = vunpack.c.l.b16 %v71
  %v634 = vunpack.c.h.b16 %v71
  %v635 = vunpack.c.l.b16 %v72
  %v636 = vunpack.c.h.b16 %v72
  %v637 = vunpack.c.l.b16 %v73
  %v638 = vunpack.c.l.b16 %v74
  %v639 = vunpack.c.h.b16 %v74
  %v640 = vunpack.c.l.b16 %v75
  %v641 = vunpack.c.h.b16 %v75
  %v642 = vunpack.c.l.b16 %v76
  %v643 = vunpack.c.h.b16 %v76
  %v644 = vunpack.c.l.b16 %v77
  %v645 = vunpack.c.h.b16 %v77
  %v646 = vunpack.c.l.b16 %v78
  %v647 = vunpack.c.l.b16 %v79
  %v648 = vunpack.c.h.b16 %v79
  %v649 = vunpack.c.l.b16 %v80
  %v650 = vunpack.c.h.b16 %v80
  %v651 = vunpack.c.l.b16 %v81
  %v652 = vunpack.c.h.b16 %v81
  %v653 = vunpack.c.l.b16 %v82
  %v654 = vunpack.c.h.b16 %v82
  %v655 = vunpack.c.l.b16 %v83
  %v656 = vunpack.c.l.b16 %v84
  %v657 = vunpack.c.h.b16 %v84
  %v658 = vunpack.c.l.b16 %v85
  %v659 = vunpack.c.h.b16 %v85
  %v660 = vunpack.c.l.b16 %v86
  %v661 = vunpack.c.h.b16 %v86
  %v662 = vunpack.c.l.b16 %v87
  %v663 = vunpack.c.h.b16 %v87
  %v664 = vunpack.c.l.b16 %v88
  %v665 = vunpack.c.l.b16 %v89
  %v666 = vunpack.c.h.b16 %v89
  %v667 = vunpack.c.l.b16 %v90
  %v668 = vunpack.c.h.b16 %v90
  %v669 = vunpack.c.l.b16 %v91
  %v670 = vunpack.c.h.b16 %v91
  %v671 = vunpack.c.l.b16 %v92
  %v672 = vunpack.c.h.b16 %v92
  %v673 = vunpack.c.l.b16 %v93
  %v674 = vunpack.c.l.b16 %v94
  %v675 = vunpack.c.h.b16 %v94
  %v676 = vunpack.c.l.b16 %v95
  %v677 = vunpack.c.h.b16 %v95
  %v678 = vunpack.c.l.b16 %v96
  %v679 = vunpack.c.h.b16 %v96
  %v680 = vunpack.c.l.b16 %v97
  %v681 = vunpack.c.h.b16 %v97
  %v682 = vunpack.c.l.b16 %v98
  %v683 = vunpack.c.l.b16 %v99
  %v684 = vunpack.c.h.b16 %v99
  %v685 = vunpack.c.l.b16 %v100
  %v686 = vunpack.c.h.b16 %v100
  %v687 = vunpack.c.l.b16 %v101
  %v688 = vunpack.c.h.b16 %v101
  %v689 = vunpack.c.l.b16 %v102
  %v690 = vunpack.c.h.b16 %v102
  %v691 = vunpack.c.l.b16 %v103
  %v692 = vunpack.c.l.b16 %v104
  %v693 = vunpack.c.h.b16 %v104
  %v694 = vunpack.c.l.b16 %v105
  %v695 = vunpack.c.h.b16 %v105
  %v696 = vunpack.c.l.b16 %v106
  %v697 = vunpack.c.h.b16 %v106
  %v698 = vunpack.c.l.b16 %v107
  %v699 = vunpack.c.h.b16 %v107
  %v700 = vunpack.c.l.b16 %v108
  %v701 = vunpack.c.l.b16 %v109
  %v702 = vunpack.c.h.b16 %v109
  %v703 = vunpack.c.l.b16 %v110
  %v704 = vunpack.c.h.b16 %v110
  %v705 = vunpack.c.l.b16 %v111
  %v706 = vunpack.c.h.b16 %v111
  %v707 = vunpack.c.l.b16 %v112
  %v708 = vunpack.c.h.b16 %v112
  %v709 = vunpack.c.l.b16 %v113
  %v710 = vunpack.c.l.b16 %v114
  %v711 = vunpack.c.h.b16 %v114
  %v712 = vunpack.c.l.b16 %v115
  %v713 = vunpack.c.h.b16 %v115
  %v714 = vunpack.c.l.b16 %v116
  %v715 = vunpack.c.h.b16 %v116
  %v716 = vunpack.c.l.b16 %v117
  %v717 = vunpack.c.h.b16 %v117
  %v718 = vunpack.c.l.b16 %v118
  %v719 = vunpack.c.l.b16 %v119
  %v720 = vunpack.c.h.b16 %v119
  %v721 = vunpack.c.l.b16 %v120
  %v722 = vunpack.c.h.b16 %v120
  %v723 = vunpack.c.l.b16 %v121
  %v724 = vunpack.c.h.b16 %v121
  %v725 = vunpack.c.l.b16 %v122
  %v726 = vunpack.c.h.b16 %v122
  %v727 = vunpack.c.l.b16 %v123
  %v728 = vunpack.c.l.b16 %v124
  %v729 = vunpack.c.h.b16 %v124
  %v730 = vunpack.c.l.b16 %v125
  %v731 = vunpack.c.h.b16 %v125
  %v732 = vunpack.c.l.b16 %v126
  %v733 = vunpack.c.h.b16 %v126
  %v734 = vunpack.c.l.b16 %v127
  %v735 = vunpack.c.h.b16 %v127
  %v736 = vunpack.c.l.b16 %v128
  %v737 = vunpack.c.l.b16 %v129
  %v738 = vunpack.c.h.b16 %v129
  %v739 = vunpack.c.l.b16 %v130
  %v740 = vunpack.c.h.b16 %v130
  %v741 = vunpack.c.l.b16 %v131
  %v742 = vunpack.c.h.b16 %v131
  %v743 = vunpack.c.l.b16 %v132
  %v744 = vunpack.c.h.b16 %v132
  %v745 = vunpack.c.l.b16 %v133
  %v746 = vunpack.c.l.b16 %v134
  %v747 = vunpack.c.h.b16 %v134
  %v748 = vunpack.c.l.b16 %v135
  %v749 = vunpack.c.h.b16 %v135
  %v750 = vunpack.c.l.b16 %v136
  %v751 = vunpack.c.h.b16 %v136
  %v752 = vunpack.c.l.b16 %v137
  %v753 = vunpack.c.h.b16 %v137
  %v754 = vunpack.c.l.b16 %v138
  %v755 = vunpack.c.l.b16 %v139
  %v756 = vunpack.c.h.b16 %v139
  %v757 = vunpack.c.l.b16 %v140
  %v758 = vunpack.c.h.b16 %v140
  %v759 = vunpack.c.l.b16 %v141
  %v760 = vunpack.c.h.b16 %v141
  %v761 = vunpack.c.l.b16 %v142
  %v762 = vunpack.c.h.b16 %v142
  %v763 = vunpack.c.l.b16 %v143
  %v764 = vunpack.c.l.b16 %v144
  %v765 = vunpack.c.h.b16 %v144
  %v766 = vunpack.c.l.b16 %v145
  %v767 = vunpack.c.h.b16 %v145
  %v768 = vunpack.c.l.b16 %v146
  %v769 = vunpack.c.h.b16 %v146
  %v770 = vunpack.c.l.b16 %v147
  %v771 = vunpack.c.h.b16 %v147
  %v772 = vunpack.c.l.b16 %v148
  %v773 = vunpack.c.l.b16 %v149
  %v774 = vunpack.c.h.b16 %v149
  %v775 = vunpack.c.l.b16 %v150
  %v776 = vunpack.c.h.b16 %v150
  %v777 = vunpack.c.l.b16 %v151
  %v778 = vunpack.c.h.b16 %v151
  %v779 = vunpack.c.l.b16 %v152
  %v780 = vunpack.c.h.b16 %v152
  %v781 = vunpack.c.l.b16 %v153
  %v782 = vunpack.c.l.b16 %v154
  %v783 = vunpack.c.h.b16 %v154
  %v784 = vunpack.c.l.b16 %v155
  %v785 = vunpack.c.h.b16 %v155
  %v786 = vunpack.c.l.b16 %v156
  %v787 = vunpack.c.h.b16 %v156
  %v788 = vunpack.c.l.b16 %v157
  %v789 = vunpack.c.h.b16 %v157
  %v790 = vunpack.c.l.b16 %v158
  %v791 = vunpack.c.l.b16 %v159
  %v792 = vunpack.c.h.b16 %v159
  %v793 = vunpack.c.l.b16 %v160
  %v794 = vunpack.c.h.b16 %v160
  %v795 = vunpack.c.l.b16 %v161
  %v796 = vunpack.c.h.b16 %v161
  %v797 = vunpack.c.l.b16 %v162
  %v798 = vunpack.c.h.b16 %v162
  %v799 = vunpack.c.l.b16 %v163
  %v800 = vunpack.c.l.b16 %v164
  %v801 = vunpack.c.h.b16 %v164
  %v802 = vunpack.c.l.b16 %v165
  %v803 = vunpack.c.h.b16 %v165
  %v804 = vunpack.c.l.b16 %v166
  %v805 = vunpack.c.h.b16 %v166
  %v806 = vunpack.c.l.b16 %v167
  %v807 = vunpack.c.h.b16 %v167
  %v808 = vunpack.c.l.b16 %v168
  %v809 = vunpack.c.l.b16 %v169
  %v810 = vunpack.c.h.b16 %v169
  %v811 = vunpack.c.l.b16 %v170
  %v812 = vunpack.c.h.b16 %v170
  %v813 = vunpack.c.l.b16 %v171
  %v814 = vunpack.c.h.b16 %v171
  %v815 = vunpack.c.l.b16 %v172
  %v816 = vunpack.c.h.b16 %v172
  %v817 = vunpack.c.l.b16 %v173
  %v818 = vunpack.c.l.b16 %v174
  %v819 = vunpack.c.h.b16 %v174
  %v820 = vunpack.c.l.b16 %v175
  %v821 = vunpack.c.h.b16 %v175
  %v822 = vunpack.c.l.b16 %v176
  %v823 = vunpack.c.h.b16 %v176
  %v824 = vunpack.c.l.b16 %v177
  %v825 = vunpack.c.h.b16 %v177
  %v826 = vunpack.c.l.b16 %v178
  %v827 = vunpack.c.l.b16 %v179
  %v828 = vunpack.c.h.b16 %v179
  %v829 = vunpack.c.l.b16 %v180
  %v830 = vunpack.c.h.b16 %v180
  %v831 = vunpack.c.l.b16 %v181
  %v832 = vunpack.c.h.b16 %v181
  %v833 = vunpack.c.l.b16 %v182
  %v834 = vunpack.c.h.b16 %v182
  %v835 = vunpack.c.l.b16 %v183
  %v836 = vunpack.c.l.b16 %v184
  %v837 = vunpack.c.h.b16 %v184
  %v838 = vunpack.c.l.b16 %v185
  %v839 = vunpack.c.h.b16 %v185
  %v840 = vunpack.c.l.b16 %v186
  %v841 = vunpack.c.h.b16 %v186
  %v842 = vunpack.c.l.b16 %v187
  %v843 = vunpack.c.h.b16 %v187
  %v844 = vunpack.c.l.b16 %v188
  %v845 = vunpack.c.l.b16 %v189
  %v846 = vunpack.c.h.b16 %v189
  %v847 = vunpack.c.l.b16 %v190
  %v848 = vunpack.c.h.b16 %v190
  %v849 = vunpack.c.l.b16 %v191
  %v850 = vunpack.c.h.b16 %v191
  %v851 = vunpack.c.l.b16 %v192
  %v852 = vunpack.c.h.b16 %v192
  %v853 = vunpack.c.l.b16 %v193
  %v854 = vunpack.c.l.b16 %v194
  %v855 = vunpack.c.h.b16 %v194
  %v856 = vunpack.c.l.b16 %v195
  %v857 = vunpack.c.h.b16 %v195
  %v858 = vunpack.c.l.b16 %v196
  %v859 = vunpack.c.h.b16 %v196
  %v860 = vunpack.c.l.b16 %v197
  %v861 = vunpack.c.h.b16 %v197
  %v862 = vunpack.c.l.b16 %v198
  %v863 = vunpack.c.l.b16 %v199
  %v864 = vunpack.c.h.b16 %v199
  %v865 = vunpack.c.l.b16 %v200
  %v866 = vunpack.c.h.b16 %v200
  %v867 = vunpack.c.l.b16 %v201
  %v868 = vunpack.c.h.b16 %v201
  %v869 = vunpack.c.l.b16 %v202
  %v870 = vunpack.c.h.b16 %v202
  %v871 = vunpack.c.l.b16 %v203
  %v872 = vunpack.c.l.b16 %v204
  %v873 = vunpack.c.h.b16 %v204
  %v874 = vunpack.c.l.b16 %v205
  %v875 = vunpack.c.h.b16 %v205
  %v876 = vunpack.c.l.b16 %v206
  %v877 = vunpack.c.h.b16 %v206
  %v878 = vunpack.c.l.b16 %v207
  %v879 = vunpack.c.h.b16 %v207
  %v880 = vunpack.c.l.b16 %v208
  %v881 = vunpack.c.l.b16 %v209
  %v882 = vunpack.c.h.b16 %v209
  %v883 = vunpack.c.l.b16 %v210
  %v884 = vunpack.c.h.b16 %v210
  %v885 = vunpack.c.l.b16 %v211
  %v886 = vunpack.c.h.b16 %v211
  %v887 = vunpack.c.l.b16 %v212
  %v888 = vunpack.c.h.b16 %v212
  %v889 = vunpack.c.l.b16 %v213
  %v890 = vunpack.c.l.b16 %v214
  %v891 = vunpack.c.h.b16 %v214
  %v892 = vunpack.c.l.b16 %v215
  %v893 = vunpack.c.h.b16 %v215
  %v894 = vunpack.c.l.b16 %v216
  %v895 = vunpack.c.h.b16 %v216
  %v896 = vunpack.c.l.b16 %v217
  %v897 = vunpack.c.h.b16 %v217
  %v898 = vunpack.c.l.b16 %v218
  %v899 = vunpack.c.l.b16 %v219
  %v900 = vunpack.c.h.b16 %v219
  %v901 = vunpack.c.l.b16 %v220
  %v902 = vunpack.c.h.b16 %v220
  %v903 = vunpack.c.l.b16 %v221
  %v904 = vunpack.c.h.b16 %v221
  %v905 = vunpack.c.l.b16 %v222
  %v906 = vunpack.c.h.b16 %v222
  %v907 = vunpack.c.l.b16 %v223
  %v908 = vunpack.c.l.b16 %v224
  %v909 = vunpack.c.h.b16 %v224
  %v910 = vunpack.c.l.b16 %v225
  %v911 = vunpack.c.h.b16 %v225
  %v912 = vunpack.c.l.b16 %v226
  %v913 = vunpack.c.h.b16 %v226
  %v914 = vunpack.c.l.b16 %v227
  %v915 = vunpack.c.h.b16 %v227
  %v916 = vunpack.c.l.b16 %v228
  %v917 = vunpack.c.l.b16 %v229
  %v918 = vunpack.c.h.b16 %v229
  %v919 = vunpack.c.l.b16 %v230
  %v920 = vunpack.c.h.b16 %v230
  %v921 = vunpack.c.l.b16 %v231
  %v922 = vunpack.c.h.b16 %v231
  %v923 = vunpack.c.l.b16 %v232
  %v924 = vunpack.c.h.b16 %v232
  %v925 = vunpack.c.l.b16 %v233
  %v926 = vunpack.c.l.b16 %v234
  %v927 = vunpack.c.h.b16 %v234
  %v928 = vunpack.c.l.b16 %v235
  %v929 = vunpack.c.h.b16 %v235
  %v930 = vunpack.c.l.b16 %v236
  %v931 = vunpack.c.h.b16 %v236
  %v932 = vunpack.c.l.b16 %v237
  %v933 = vunpack.c.h.b16 %v237
  %v934 = vunpack.c.l.b16 %v238
  %v935 = vunpack.c.l.b16 %v239
  %v936 = vunpack.c.h.b16 %v239
  %v937 = vunpack.c.l.b16 %v240
  %v938 = vunpack.c.h.b16 %v240
  %v939 = vunpack.c.l.b16 %v241
  %v940 = vunpack.c.h.b16 %v241
  %v941 = vunpack.c.l.b16 %v242
  %v942 = vunpack.c.h.b16 %v242
  %v943 = vunpack.c.l.b16 %v243
  %v944 = vunpack.c.l.b16 %v244
  %v945 = vunpack.c.h.b16 %v244
  %v946 = vunpack.c.l.b16 %v245
  %v947 = vunpack.c.h.b16 %v245
  %v948 = vunpack.c.l.b16 %v246
  %v949 = vunpack.c.h.b16 %v246
  %v950 = vunpack.c.l.b16 %v247
  %v951 = vunpack.c.h.b16 %v247
  %v952 = vunpack.c.l.b16 %v248
  %v953 = vunpack.c.l.b16 %v249
  %v954 = vunpack.c.h.b16 %v249
  %v955 = vunpack.c.l.b16 %v250
  %v956 = vunpack.c.h.b16 %v250
  %v957 = vunpack.c.l.b16 %v251
  %v958 = vunpack.c.h.b16 %v251
  %v959 = vunpack.c.l.b16 %v252
  %v960 = vunpack.c.h.b16 %v252
  %v961 = vunpack.c.l.b16 %v253
  %v962 = vunpack.c.l.b16 %v254
  %v963 = vunpack.c.h.b16 %v254
  %v964 = vunpack.c.l.b16 %v255
  %v965 = vunpack.c.h.b16 %v255
  %v966 = vunpack.c.l.b16 %v256
  %v967 = vunpack.c.h.b16 %v256
  %v968 = vunpack.c.l.b16 %v257
  %v969 = vunpack.c.h.b16 %v257
  %v970 = vunpack.c.l.b16 %v258
  %v971 = vunpack.c.l.b16 %v259
  %v972 = vunpack.c.h.b16 %v259
  %v973 = vunpack.c.l.b16 %v260
  %v974 = vunpack.c.h.b16 %v260
  %v975 = vunpack.c.l.b16 %v261
  %v976 = vunpack.c.h.b16 %v261
  %v977 = vunpack.c.l.b16 %v262
  %v978 = vunpack.c.h.b16 %v262
  %v979 = vunpack.c.l.b16 %v263
  %v980 = vpack.c.b16 %v557, %v548
  %v981 = vpack.c.b16 %v558, %v549
  %v982 = vpack.c.b16 %v559, %v550
  %v983 = vpack.c.b16 %v560, %v551
  %v984 = vpack.c.b16 %v561, %v552
  %v985 = vpack.c.b16 %v562, %v553
  %v986 = vpack.c.b16 %v563, %v554
  %v987 = vpack.c.b16 %v564, %v555
  %v988 = vpack.c.b16 %v565, %v556
  %v989 = vpack.c.b16 %v575, %v566
  %v990 = vpack.c.b16 %v576, %v567
  %v991 = vpack.c.b16 %v577, %v568
  %v992 = vpack.c.b16 %v578, %v569
  %v993 = vpack.c.b16 %v579, %v570
  %v994 = vpack.c.b16 %v580, %v571
  %v995 = vpack.c.b16 %v581, %v572
  %v996 = vpack.c.b16 %v582, %v573
  %v997 = vpack.c.b16 %v583, %v574
  %v998 = vpack.c.b16 %v593, %v584
  %v999 = vpack.c.b16 %v594, %v585
  %v1000 = vpack.c.b16 %v595, %v586
  %v1001 = vpack.c.b16 %v596, %v587
  %v1002 = vpack.c.b16 %v597, %v588
  %v1003 = vpack.c.b16 %v598, %v589
  %v1004 = vpack.c.b16 %v599, %v590
  %v1005 = vpack.c.b16 %v600, %v591
  %v1006 = vpack.c.b16 %v601, %v592
  %v1007 = vpack.c.b16 %v611, %v602
  %v1008 = vpack.c.b16 %v612, %v603
  %v1009 = vpack.c.b16 %v613, %v604
  %v1010 = vpack.c.b16 %v614, %v605
  %v1011 = vpack.c.b16 %v615, %v606
  %v1012 = vpack.c.b16 %v616, %v607
  %v1013 = vpack.c.b16 %v617, %v608
  %v1014 = vpack.c.b16 %v618, %v609
  %v1015 = vpack.c.b16 %v619, %v610
  %v1016 = vpack.c.b16 %v629, %v620
  %v1017 = vpack.c.b16 %v630, %v621
  %v1018 = vpack.c.b16 %v631, %v622
  %v1019 = vpack.c.b16 %v632, %v623
  %v1020 = vpack.c.b16 %v633, %v624
  %v1021 = vpack.c.b16 %v634, %v625
  %v1022 = vpack.c.b16 %v635, %v626
  %v1023 = vpack.c.b16 %v636, %v627
  %v1024 = vpack.c.b16 %v637, %v628
  %v1025 = vpack.c.b16 %v647, %v638
  %v1026 = vpack.c.b16 %v648, %v639
  %v1027 = vpack.c.b16 %v649, %v640
  %v1028 = vpack.c.b16 %v650, %v641
  %v1029 = vpack.c.b16 %v651, %v642
  %v1030 = vpack.c.b16 %v652, %v643
  %v1031 = vpack.c.b16 %v653, %v644
  %v1032 = vpack.c.b16 %v654, %v645
  %v1033 = vpack.c.b16 %v655, %v646
  %v1034 = vpack.c.b16 %v665, %v656
  %v1035 = vpack.c.b16 %v666, %v657
  %v1036 = vpack.c.b16 %v667, %v658
  %v1037 = vpack.c.b16 %v668, %v659
  %v1038 = vpack.c.b16 %v669, %v660
  %v1039 = vpack.c.b16 %v670, %v661
  %v1040 = vpack.c.b16 %v671, %v662
  %v1041 = vpack.c.b16 %v672, %v663
  %v1042 = vpack.c.b16 %v673, %v664
  %v1043 = vpack.c.b16 %v683, %v674
  %v1044 = vpack.c.b16 %v684, %v675
  %v1045 = vpack.c.b16 %v685, %v676
  %v1046 = vpack.c.b16 %v686, %v677
  %v1047 = vpack.c.b16 %v687, %v678
  %v1048 = vpack.c.b16 %v688, %v679
  %v1049 = vpack.c.b16 %v689, %v680
  %v1050 = vpack.c.b16 %v690, %v681
  %v1051 = vpack.c.b16 %v691, %v682
  %v1052 = vpack.c.b16 %v701, %v692
  %v1053 = vpack.c.b16 %v702, %v693
  %v1054 = vpack.c.b16 %v703, %v694
  %v1055 = vpack.c.b16 %v704, %v695
  %v1056 = vpack.c.b16 %v705, %v696
  %v1057 = vpack.c.b16 %v706, %v697
  %v1058 = vpack.c.b16 %v707, %v698
  %v1059 = vpack.c.b16 %v708, %v699
  %v1060 = vpack.c.b16 %v709, %v700
  %v1061 = vpack.c.b16 %v719, %v710
  %v1062 = vpack.c.b16 %v720, %v711
  %v1063 = vpack.c.b16 %v721, %v712
  %v1064 = vpack.c.b16 %v722, %v713
  %v1065 = vpack.c.b16 %v723, %v714
  %v1066 = vpack.c.b16 %v724, %v715
  %v1067 = vpack.c.b16 %v725, %v716
  %v1068 = vpack.c.b16 %v726, %v717
  %v1069 = vpack.c.b16 %v727, %v718
  %v1070 = vpack.c.b16 %v737, %v728
  %v1071 = vpack.c.b16 %v738, %v729
  %v1072 = vpack.c.b16 %v739, %v730
  %v1073 = vpack.c.b16 %v740, %v731
  %v1074 = vpack.c.b16 %v741, %v732
  %v1075 = vpack.c.b16 %v742, %v733
  %v1076 = vpack.c.b16 %v743, %v734
  %v1077 = vpack.c.b16 %v744, %v735
  %v1078 = vpack.c.b16 %v745, %v736
  %v1079 = vpack.c.b16 %v755, %v746
  %v1080 = vpack.c.b16 %v756, %v747
  %v1081 = vpack.c.b16 %v757, %v748
  %v1082 = vpack.c.b16 %v758, %v749
  %v1083 = vpack.c.b16 %v759, %v750
  %v1084 = vpack.c.b16 %v760, %v751
  %v1085 = vpack.c.b16 %v761, %v752
  %v1086 = vpack.c.b16 %v762, %v753
  %v1087 = vpack.c.b16 %v763, %v754
  %v1088 = vpack.c.b16 %v773, %v764
  %v1089 = vpack.c.b16 %v774, %v765
  %v1090 = vpack.c.b16 %v775, %v766
  %v1091 = vpack.c.b16 %v776, %v767
  %v1092 = vpack.c.b16 %v777, %v768
  %v1093 = vpack.c.b16 %v778, %v769
  %v1094 = vpack.c.b16 %v779, %v770
  %v1095 = vpack.c.b16 %v780, %v771
  %v1096 = vpack.c.b16 %v781, %v772
  %v1097 = vpack.c.b16 %v791, %v782
  %v1098 = vpack.c.b16 %v792, %v783
  %v1099 = vpack.c.b16 %v793, %v784
  %v1100 = vpack.c.b16 %v794, %v785
  %v1101 = vpack.c.b16 %v795, %v786
  %v1102 = vpack.c.b16 %v796, %v787
  %v1103 = vpack.c.b16 %v797, %v788
  %v1104 = vpack.c.b16 %v798, %v789
  %v1105 = vpack.c.b16 %v799, %v790
  %v1106 = vpack.c.b16 %v809, %v800
  %v1107 = vpack.c.b16 %v810, %v801
  %v1108 = vpack.c.b16 %v811, %v802
  %v1109 = vpack.c.b16 %v812, %v803
  %v1110 = vpack.c.b16 %v813, %v804
  %v1111 = vpack.c.b16 %v814, %v805
  %v1112 = vpack.c.b16 %v815, %v806
  %v1113 = vpack.c.b16 %v816, %v807
  %v1114 = vpack.c.b16 %v817, %v808
  %v1115 = vpack.c.b16 %v827, %v818
  %v1116 = vpack.c.b16 %v828, %v819
  %v1117 = vpack.c.b16 %v829, %v820
  %v1118 = vpack.c.b16 %v830, %v821
  %v1119 = vpack.c.b16 %v831, %v822
  %v1120 = vpack.c.b16 %v832, %v823
  %v1121 = vpack.c.b16 %v833, %v824
  %v1122 = vpack.c.b16 %v834, %v825
  %v1123 = vpack.c.b16 %v835, %v826
  %v1124 = vpack.c.b16 %v845, %v836
  %v1125 = vpack.c.b16 %v846, %v837
  %v1126 = vpack.c.b16 %v847, %v838
  %v1127 = vpack.c.b16 %v848, %v839
  %v1128 = vpack.c.b16 %v849, %v840
  %v1129 = vpack.c.b16 %v850, %v841
  %v1130 = vpack.c.b16 %v851, %v842
  %v1131 = vpack.c.b16 %v852, %v843
  %v1132 = vpack.c.b16 %v853, %v844
  %v1133 = vpack.c.b16 %v863, %v854
  %v1134 = vpack.c.b16 %v864, %v855
  %v1135 = vpack.c.b16 %v865, %v856
  %v1136 = vpack.c.b16 %v866, %v857
  %v1137 = vpack.c.b16 %v867, %v858
  %v1138 = vpack.c.b16 %v868, %v859
  %v1139 = vpack.c.b16 %v869, %v860
  %v1140 = vpack.c.b16 %v870, %v861
  %v1141 = vpack.c.b16 %v871, %v862
  %v1142 = vpack.c.b16 %v881, %v872
  %v1143 = vpack.c.b16 %v882, %v873
  %v1144 = vpack.c.b16 %v883, %v874
  %v1145 = vpack.c.b16 %v884, %v875
  %v1146 = vpack.c.b16 %v885, %v876
  %v1147 = vpack.c.b16 %v886, %v877
  %v1148 = vpack.c.b16 %v887, %v878
  %v1149 = vpack.c.b16 %v888, %v879
  %v1150 = vpack.c.b16 %v889, %v880
  %v1151 = vpack.c.b16 %v899, %v890
  %v1152 = vpack.c.b16 %v900, %v891
  %v1153 = vpack.c.b16 %v901, %v892
  %v1154 = vpack.c.b16 %v902, %v893
  %v1155 = vpack.c.b16 %v903, %v894
  %v1156 = vpack.c.b16 %v904, %v895
  %v1157 = vpack.c.b16 %v905, %v896
  %v1158 = vpack.c.b16 %v906, %v897
  %v1159 = vpack.c.b16 %v907, %v898
  %v1160 = vpack.c.b16 %v917, %v908
  %v1161 = vpack.c.b16 %v918, %v909
  %v1162 = vpack.c.b16 %v919, %v910
  %v1163 = vpack.c.b16 %v920, %v911
  %v1164 = vpack.c.b16 %v921, %v912
  %v1165 = vpack.c.b16 %v922, %v913
  %v1166 = vpack.c.b16 %v923, %v914
  %v1167 = vpack.c.b16 %v924, %v915
  %v1168 = vpack.c.b16 %v925, %v916
  %v1169 = vpack.c.b16 %v935, %v926
  %v1170 = vpack.c.b16 %v936, %v927
  %v1171 = vpack.c.b16 %v937, %v928
  %v1172 = vpack.c.b16 %v938, %v929
  %v1173 = vpack.c.b16 %v939, %v930
  %v1174 = vpack.c.b16 %v940, %v931
  %v1175 = vpack.c.b16 %v941, %v932
  %v1176 = vpack.c.b16 %v942, %v933
  %v1177 = vpack.c.b16 %v943, %v934
  %v1178 = vpack.c.b16 %v953, %v944
  %v1179 = vpack.c.b16 %v954, %v945
  %v1180 = vpack.c.b16 %v955, %v946
  %v1181 = vpack.c.b16 %v956, %v947
  %v1182 = vpack.c.b16 %v957, %v948
  %v1183 = vpack.c.b16 %v958, %v949
  %v1184 = vpack.c.b16 %v959, %v950
  %v1185 = vpack.c.b16 %v960, %v951
  %v1186 = vpack.c.b16 %v961, %v952
  %v1187 = vpack.c.b16 %v971, %v962
  %v1188 = vpack.c.b16 %v972, %v963
  %v1189 = vpack.c.b16 %v973, %v964
  %v1190 = vpack.c.b16 %v974, %v965
  %v1191 = vpack.c.b16 %v975, %v966
  %v1192 = vpack.c.b16 %v976, %v967
  %v1193 = vpack.c.b16 %v977, %v968
  %v1194 = vpack.c.b16 %v978, %v969
  %v1195 = vpack.c.b16 %v979, %v970
  %1412 = vmatprep.subr.bf16.mxu0 %v981
  %1413 = vmatpush1.bf16.msra.mxu0 %v980
  %1414 = vmatprep.subr.bf16.mxu0 %v990
  %1415 = vmatpush1.bf16.msra.mxu0 %v989
  %1416 = vmatprep.subr.bf16.mxu0 %v999
  %1417 = vmatpush1.bf16.msra.mxu0 %v998
  %1418 = vmatprep.subr.bf16.mxu0 %v1008
  %1419 = vmatpush1.bf16.msra.mxu0 %v1007
  %1420 = vmatprep.subr.bf16.mxu0 %v1017
  %1421 = vmatpush1.bf16.msra.mxu0 %v1016
  %1422 = vmatprep.subr.bf16.mxu0 %v1026
  %1423 = vmatpush1.bf16.msra.mxu0 %v1025
  %1424 = vmatprep.subr.bf16.mxu0 %v1035
  %1425 = vmatpush1.bf16.msra.mxu0 %v1034
  %1426 = vmatprep.subr.bf16.mxu0 %v1044
  %1427 = vmatpush1.bf16.msra.mxu0 %v1043
  %1428 = vmatprep.subr.bf16.mxu0 %v1053
  %1429 = vmatpush1.bf16.msra.mxu0 %v1052
  %1430 = vmatprep.subr.bf16.mxu0 %v1062
  %1431 = vmatpush1.bf16.msra.mxu0 %v1061
  %1432 = vmatprep.subr.bf16.mxu0 %v1071
  %1433 = vmatpush1.bf16.msra.mxu0 %v1070
  %1434 = vmatprep.subr.bf16.mxu0 %v1080
  %1435 = vmatpush1.bf16.msra.mxu0 %v1079
  %1436 = vmatprep.subr.bf16.mxu0 %v1089
  %1437 = vmatpush1.bf16.msra.mxu0 %v1088
  %1438 = vmatprep.subr.bf16.mxu0 %v1098
  %1439 = vmatpush1.bf16.msra.mxu0 %v1097
  %1440 = vmatprep.subr.bf16.mxu0 %v1107
  %1441 = vmatpush1.bf16.msra.mxu0 %v1106
  %1442 = vmatprep.subr.bf16.mxu0 %v1116
  %1443 = vmatpush1.bf16.msra.mxu0 %v1115
  %1444 = vmatprep.mubr.bf16.mxu0 %v306
  %1445 = vmatmul.mubr.bf16.gmra.mrb[0].mxu0 %v305
  %v1446 = vpop.f32.mrb[0].mxu0
  %v1447 = vadd.f32 0.0, %v1446
  %v1448 = vpop.f32.mrb[0].mxu0
  %v1449 = vadd.f32 0.0, %v1448
  %v1450 = vpop.f32.mrb[0].mxu0
  %v1451 = vpop.f32.mrb[0].mxu0
  %1452 = vdwg.mxu0
  %1453 = vmatprep.subr.bf16.mxu0 %v1125
  %1454 = vmatpush1.bf16.msra.mxu0 %v1124
  %1455 = vmatprep.subr.bf16.mxu0 %v1134
  %1456 = vmatpush1.bf16.msra.mxu0 %v1133
  %1457 = vmatprep.subr.bf16.mxu0 %v1143
  %1458 = vmatpush1.bf16.msra.mxu0 %v1142
  %1459 = vmatprep.subr.bf16.mxu0 %v1152
  %1460 = vmatpush1.bf16.msra.mxu0 %v1151
  %1461 = vmatprep.subr.bf16.mxu0 %v1161
  %1462 = vmatpush1.bf16.msra.mxu0 %v1160
  %1463 = vmatprep.subr.bf16.mxu0 %v1170
  %1464 = vmatpush1.bf16.msra.mxu0 %v1169
  %1465 = vmatprep.subr.bf16.mxu0 %v1179
  %1466 = vmatpush1.bf16.msra.mxu0 %v1178
  %1467 = vmatprep.subr.bf16.mxu0 %v1188
  %1468 = vmatpush1.bf16.msra.mxu0 %v1187
  %1469 = vmatprep.subr.bf16.mxu0 0
  %1470 = vmatpush1.bf16.msra.mxu0 0
  %1471 = vmatprep.subr.bf16.mxu0 0
  %1472 = vmatpush1.bf16.msra.mxu0 0
  %1473 = vmatprep.subr.bf16.mxu0 0
  %1474 = vmatpush1.bf16.msra.mxu0 0
  %1475 = vmatprep.subr.bf16.mxu0 0
  %1476 = vmatpush1.bf16.msra.mxu0 0
  %1477 = vmatprep.subr.bf16.mxu0 0
  %1478 = vmatpush1.bf16.msra.mxu0 0
  %1479 = vmatprep.subr.bf16.mxu0 0
  %1480 = vmatpush1.bf16.msra.mxu0 0
  %1481 = vmatprep.subr.bf16.mxu0 0
  %1482 = vmatpush1.bf16.msra.mxu0 0
  %1483 = vmatprep.subr.bf16.mxu0 0
  %1484 = vmatpush1.bf16.msra.mxu0 0
  %1485 = vmatprep.mubr.bf16.mxu0 0
  %1486 = vmatmul.mubr.bf16.gmra.mrb[0].mxu0 %v307
  %v1487 = vpop.f32.mrb[0].mxu0
  %v1488 = vadd.f32 %v1447, %v1487
  %v1489 = vpop.f32.mrb[0].mxu0
  %v1490 = vadd.f32 %v1449, %v1489
  %v1491 = vpop.f32.mrb[0].mxu0
  %v1492 = vpop.f32.mrb[0].mxu0
  %1493 = vdwg.mxu0
  %1494 = vmatprep.subr.bf16.mxu0 %v983
  %1495 = vmatpush1.bf16.msra.mxu0 %v982
  %1496 = vmatprep.subr.bf16.mxu0 %v992
  %1497 = vmatpush1.bf16.msra.mxu0 %v991
  %1498 = vmatprep.subr.bf16.mxu0 %v1001
  %1499 = vmatpush1.bf16.msra.mxu0 %v1000
  %1500 = vmatprep.subr.bf16.mxu0 %v1010
  %1501 = vmatpush1.bf16.msra.mxu0 %v1009
  %1502 = vmatprep.subr.bf16.mxu0 %v1019
  %1503 = vmatpush1.bf16.msra.mxu0 %v1018
  %1504 = vmatprep.subr.bf16.mxu0 %v1028
  %1505 = vmatpush1.bf16.msra.mxu0 %v1027
  %1506 = vmatprep.subr.bf16.mxu0 %v1037
  %1507 = vmatpush1.bf16.msra.mxu0 %v1036
  %1508 = vmatprep.subr.bf16.mxu0 %v1046
  %1509 = vmatpush1.bf16.msra.mxu0 %v1045
  %1510 = vmatprep.subr.bf16.mxu0 %v1055
  %1511 = vmatpush1.bf16.msra.mxu0 %v1054
  %1512 = vmatprep.subr.bf16.mxu0 %v1064
  %1513 = vmatpush1.bf16.msra.mxu0 %v1063
  %1514 = vmatprep.subr.bf16.mxu0 %v1073
  %1515 = vmatpush1.bf16.msra.mxu0 %v1072
  %1516 = vmatprep.subr.bf16.mxu0 %v1082
  %1517 = vmatpush1.bf16.msra.mxu0 %v1081
  %1518 = vmatprep.subr.bf16.mxu0 %v1091
  %1519 = vmatpush1.bf16.msra.mxu0 %v1090
  %1520 = vmatprep.subr.bf16.mxu0 %v1100
  %1521 = vmatpush1.bf16.msra.mxu0 %v1099
  %1522 = vmatprep.subr.bf16.mxu0 %v1109
  %1523 = vmatpush1.bf16.msra.mxu0 %v1108
  %1524 = vmatprep.subr.bf16.mxu0 %v1118
  %1525 = vmatpush1.bf16.msra.mxu0 %v1117
  %1526 = vmatprep.mubr.bf16.mxu0 %v306
  %1527 = vmatmul.mubr.bf16.gmra.mrb[0].mxu0 %v305
  %v1528 = vpop.f32.mrb[0].mxu0
  %v1529 = vadd.f32 0.0, %v1528
  %v1530 = vpop.f32.mrb[0].mxu0
  %v1531 = vadd.f32 0.0, %v1530
  %v1532 = vpop.f32.mrb[0].mxu0
  %v1533 = vpop.f32.mrb[0].mxu0
  %1534 = vdwg.mxu0
  %1535 = vmatprep.subr.bf16.mxu0 %v1127
  %1536 = vmatpush1.bf16.msra.mxu0 %v1126
  %1537 = vmatprep.subr.bf16.mxu0 %v1136
  %1538 = vmatpush1.bf16.msra.mxu0 %v1135
  %1539 = vmatprep.subr.bf16.mxu0 %v1145
  %1540 = vmatpush1.bf16.msra.mxu0 %v1144
  %1541 = vmatprep.subr.bf16.mxu0 %v1154
  %1542 = vmatpush1.bf16.msra.mxu0 %v1153
  %1543 = vmatprep.subr.bf16.mxu0 %v1163
  %1544 = vmatpush1.bf16.msra.mxu0 %v1162
  %1545 = vmatprep.subr.bf16.mxu0 %v1172
  %1546 = vmatpush1.bf16.msra.mxu0 %v1171
  %1547 = vmatprep.subr.bf16.mxu0 %v1181
  %1548 = vmatpush1.bf16.msra.mxu0 %v1180
  %1549 = vmatprep.subr.bf16.mxu0 %v1190
  %1550 = vmatpush1.bf16.msra.mxu0 %v1189
  %1551 = vmatprep.subr.bf16.mxu0 0
  %1552 = vmatpush1.bf16.msra.mxu0 0
  %1553 = vmatprep.subr.bf16.mxu0 0
  %1554 = vmatpush1.bf16.msra.mxu0 0
  %1555 = vmatprep.subr.bf16.mxu0 0
  %1556 = vmatpush1.bf16.msra.mxu0 0
  %1557 = vmatprep.subr.bf16.mxu0 0
  %1558 = vmatpush1.bf16.msra.mxu0 0
  %1559 = vmatprep.subr.bf16.mxu0 0
  %1560 = vmatpush1.bf16.msra.mxu0 0
  %1561 = vmatprep.subr.bf16.mxu0 0
  %1562 = vmatpush1.bf16.msra.mxu0 0
  %1563 = vmatprep.subr.bf16.mxu0 0
  %1564 = vmatpush1.bf16.msra.mxu0 0
  %1565 = vmatprep.subr.bf16.mxu0 0
  %1566 = vmatpush1.bf16.msra.mxu0 0
  %1567 = vmatprep.mubr.bf16.mxu0 0
  %1568 = vmatmul.mubr.bf16.gmra.mrb[0].mxu0 %v307
  %v1569 = vpop.f32.mrb[0].mxu0
  %v1570 = vadd.f32 %v1529, %v1569
  %v1571 = vpop.f32.mrb[0].mxu0
  %v1572 = vadd.f32 %v1531, %v1571
  %v1573 = vpop.f32.mrb[0].mxu0
  %v1574 = vpop.f32.mrb[0].mxu0
  %1575 = vdwg.mxu0
  %1576 = vmatprep.subr.bf16.mxu0 %v985
  %1577 = vmatpush1.bf16.msra.mxu0 %v984
  %1578 = vmatprep.subr.bf16.mxu0 %v994
  %1579 = vmatpush1.bf16.msra.mxu0 %v993
  %1580 = vmatprep.subr.bf16.mxu0 %v1003
  %1581 = vmatpush1.bf16.msra.mxu0 %v1002
  %1582 = vmatprep.subr.bf16.mxu0 %v1012
  %1583 = vmatpush1.bf16.msra.mxu0 %v1011
  %1584 = vmatprep.subr.bf16.mxu0 %v1021
  %1585 = vmatpush1.bf16.msra.mxu0 %v1020
  %1586 = vmatprep.subr.bf16.mxu0 %v1030
  %1587 = vmatpush1.bf16.msra.mxu0 %v1029
  %1588 = vmatprep.subr.bf16.mxu0 %v1039
  %1589 = vmatpush1.bf16.msra.mxu0 %v1038
  %1590 = vmatprep.subr.bf16.mxu0 %v1048
  %1591 = vmatpush1.bf16.msra.mxu0 %v1047
  %1592 = vmatprep.subr.bf16.mxu0 %v1057
  %1593 = vmatpush1.bf16.msra.mxu0 %v1056
  %1594 = vmatprep.subr.bf16.mxu0 %v1066
  %1595 = vmatpush1.bf16.msra.mxu0 %v1065
  %1596 = vmatprep.subr.bf16.mxu0 %v1075
  %1597 = vmatpush1.bf16.msra.mxu0 %v1074
  %1598 = vmatprep.subr.bf16.mxu0 %v1084
  %1599 = vmatpush1.bf16.msra.mxu0 %v1083
  %1600 = vmatprep.subr.bf16.mxu0 %v1093
  %1601 = vmatpush1.bf16.msra.mxu0 %v1092
  %1602 = vmatprep.subr.bf16.mxu0 %v1102
  %1603 = vmatpush1.bf16.msra.mxu0 %v1101
  %1604 = vmatprep.subr.bf16.mxu0 %v1111
  %1605 = vmatpush1.bf16.msra.mxu0 %v1110
  %1606 = vmatprep.subr.bf16.mxu0 %v1120
  %1607 = vmatpush1.bf16.msra.mxu0 %v1119
  %1608 = vmatprep.mubr.bf16.mxu0 %v306
  %1609 = vmatmul.mubr.bf16.gmra.mrb[0].mxu0 %v305
  %v1610 = vpop.f32.mrb[0].mxu0
  %v1611 = vadd.f32 0.0, %v1610
  %v1612 = vpop.f32.mrb[0].mxu0
  %v1613 = vadd.f32 0.0, %v1612
  %v1614 = vpop.f32.mrb[0].mxu0
  %v1615 = vpop.f32.mrb[0].mxu0
  %1616 = vdwg.mxu0
  %1617 = vmatprep.subr.bf16.mxu0 %v1129
  %1618 = vmatpush1.bf16.msra.mxu0 %v1128
  %1619 = vmatprep.subr.bf16.mxu0 %v1138
  %1620 = vmatpush1.bf16.msra.mxu0 %v1137
  %1621 = vmatprep.subr.bf16.mxu0 %v1147
  %1622 = vmatpush1.bf16.msra.mxu0 %v1146
  %1623 = vmatprep.subr.bf16.mxu0 %v1156
  %1624 = vmatpush1.bf16.msra.mxu0 %v1155
  %1625 = vmatprep.subr.bf16.mxu0 %v1165
  %1626 = vmatpush1.bf16.msra.mxu0 %v1164
  %1627 = vmatprep.subr.bf16.mxu0 %v1174
  %1628 = vmatpush1.bf16.msra.mxu0 %v1173
  %1629 = vmatprep.subr.bf16.mxu0 %v1183
  %1630 = vmatpush1.bf16.msra.mxu0 %v1182
  %1631 = vmatprep.subr.bf16.mxu0 %v1192
  %1632 = vmatpush1.bf16.msra.mxu0 %v1191
  %1633 = vmatprep.subr.bf16.mxu0 0
  %1634 = vmatpush1.bf16.msra.mxu0 0
  %1635 = vmatprep.subr.bf16.mxu0 0
  %1636 = vmatpush1.bf16.msra.mxu0 0
  %1637 = vmatprep.subr.bf16.mxu0 0
  %1638 = vmatpush1.bf16.msra.mxu0 0
  %1639 = vmatprep.subr.bf16.mxu0 0
  %1640 = vmatpush1.bf16.msra.mxu0 0
  %1641 = vmatprep.subr.bf16.mxu0 0
  %1642 = vmatpush1.bf16.msra.mxu0 0
  %1643 = vmatprep.subr.bf16.mxu0 0
  %1644 = vmatpush1.bf16.msra.mxu0 0
  %1645 = vmatprep.subr.bf16.mxu0 0
  %1646 = vmatpush1.bf16.msra.mxu0 0
  %1647 = vmatprep.subr.bf16.mxu0 0
  %1648 = vmatpush1.bf16.msra.mxu0 0
  %1649 = vmatprep.mubr.bf16.mxu0 0
  %1650 = vmatmul.mubr.bf16.gmra.mrb[0].mxu0 %v307
  %v1651 = vpop.f32.mrb[0].mxu0
  %v1652 = vadd.f32 %v1611, %v1651
  %v1653 = vpop.f32.mrb[0].mxu0
  %v1654 = vadd.f32 %v1613, %v1653
  %v1655 = vpop.f32.mrb[0].mxu0
  %v1656 = vpop.f32.mrb[0].mxu0
  %1657 = vdwg.mxu0
  %1658 = vmatprep.subr.bf16.mxu0 %v987
  %1659 = vmatpush1.bf16.msra.mxu0 %v986
  %1660 = vmatprep.subr.bf16.mxu0 %v996
  %1661 = vmatpush1.bf16.msra.mxu0 %v995
  %1662 = vmatprep.subr.bf16.mxu0 %v1005
  %1663 = vmatpush1.bf16.msra.mxu0 %v1004
  %1664 = vmatprep.subr.bf16.mxu0 %v1014
  %1665 = vmatpush1.bf16.msra.mxu0 %v1013
  %1666 = vmatprep.subr.bf16.mxu0 %v1023
  %1667 = vmatpush1.bf16.msra.mxu0 %v1022
  %1668 = vmatprep.subr.bf16.mxu0 %v1032
  %1669 = vmatpush1.bf16.msra.mxu0 %v1031
  %1670 = vmatprep.subr.bf16.mxu0 %v1041
  %1671 = vmatpush1.bf16.msra.mxu0 %v1040
  %1672 = vmatprep.subr.bf16.mxu0 %v1050
  %1673 = vmatpush1.bf16.msra.mxu0 %v1049
  %1674 = vmatprep.subr.bf16.mxu0 %v1059
  %1675 = vmatpush1.bf16.msra.mxu0 %v1058
  %1676 = vmatprep.subr.bf16.mxu0 %v1068
  %1677 = vmatpush1.bf16.msra.mxu0 %v1067
  %1678 = vmatprep.subr.bf16.mxu0 %v1077
  %1679 = vmatpush1.bf16.msra.mxu0 %v1076
  %1680 = vmatprep.subr.bf16.mxu0 %v1086
  %1681 = vmatpush1.bf16.msra.mxu0 %v1085
  %1682 = vmatprep.subr.bf16.mxu0 %v1095
  %1683 = vmatpush1.bf16.msra.mxu0 %v1094
  %1684 = vmatprep.subr.bf16.mxu0 %v1104
  %1685 = vmatpush1.bf16.msra.mxu0 %v1103
  %1686 = vmatprep.subr.bf16.mxu0 %v1113
  %1687 = vmatpush1.bf16.msra.mxu0 %v1112
  %1688 = vmatprep.subr.bf16.mxu0 %v1122
  %1689 = vmatpush1.bf16.msra.mxu0 %v1121
  %1690 = vmatprep.mubr.bf16.mxu0 %v306
  %1691 = vmatmul.mubr.bf16.gmra.mrb[0].mxu0 %v305
  %v1692 = vpop.f32.mrb[0].mxu0
  %v1693 = vadd.f32 0.0, %v1692
  %v1694 = vpop.f32.mrb[0].mxu0
  %v1695 = vadd.f32 0.0, %v1694
  %v1696 = vpop.f32.mrb[0].mxu0
  %v1697 = vpop.f32.mrb[0].mxu0
  %1698 = vdwg.mxu0
  %1699 = vmatprep.subr.bf16.mxu0 %v1131
  %1700 = vmatpush1.bf16.msra.mxu0 %v1130
  %1701 = vmatprep.subr.bf16.mxu0 %v1140
  %1702 = vmatpush1.bf16.msra.mxu0 %v1139
  %1703 = vmatprep.subr.bf16.mxu0 %v1149
  %1704 = vmatpush1.bf16.msra.mxu0 %v1148
  %1705 = vmatprep.subr.bf16.mxu0 %v1158
  %1706 = vmatpush1.bf16.msra.mxu0 %v1157
  %1707 = vmatprep.subr.bf16.mxu0 %v1167
  %1708 = vmatpush1.bf16.msra.mxu0 %v1166
  %1709 = vmatprep.subr.bf16.mxu0 %v1176
  %1710 = vmatpush1.bf16.msra.mxu0 %v1175
  %1711 = vmatprep.subr.bf16.mxu0 %v1185
  %1712 = vmatpush1.bf16.msra.mxu0 %v1184
  %1713 = vmatprep.subr.bf16.mxu0 %v1194
  %1714 = vmatpush1.bf16.msra.mxu0 %v1193
  %1715 = vmatprep.subr.bf16.mxu0 0
  %1716 = vmatpush1.bf16.msra.mxu0 0
  %1717 = vmatprep.subr.bf16.mxu0 0
  %1718 = vmatpush1.bf16.msra.mxu0 0
  %1719 = vmatprep.subr.bf16.mxu0 0
  %1720 = vmatpush1.bf16.msra.mxu0 0
  %1721 = vmatprep.subr.bf16.mxu0 0
  %1722 = vmatpush1.bf16.msra.mxu0 0
  %1723 = vmatprep.subr.bf16.mxu0 0
  %1724 = vmatpush1.bf16.msra.mxu0 0
  %1725 = vmatprep.subr.bf16.mxu0 0
  %1726 = vmatpush1.bf16.msra.mxu0 0
  %1727 = vmatprep.subr.bf16.mxu0 0
  %1728 = vmatpush1.bf16.msra.mxu0 0
  %1729 = vmatprep.subr.bf16.mxu0 0
  %1730 = vmatpush1.bf16.msra.mxu0 0
  %1731 = vmatprep.mubr.bf16.mxu0 0
  %1732 = vmatmul.mubr.bf16.gmra.mrb[0].mxu0 %v307
  %v1733 = vpop.f32.mrb[0].mxu0
  %v1734 = vadd.f32 %v1693, %v1733
  %v1735 = vpop.f32.mrb[0].mxu0
  %v1736 = vadd.f32 %v1695, %v1735
  %v1737 = vpop.f32.mrb[0].mxu0
  %v1738 = vpop.f32.mrb[0].mxu0
  %1739 = vdwg.mxu0
  %1740 = vmatprep.subr.bf16.mxu0 0
  %1741 = vmatpush1.bf16.msra.mxu0 %v988
  %1742 = vmatprep.subr.bf16.mxu0 0
  %1743 = vmatpush1.bf16.msra.mxu0 %v997
  %1744 = vmatprep.subr.bf16.mxu0 0
  %1745 = vmatpush1.bf16.msra.mxu0 %v1006
  %1746 = vmatprep.subr.bf16.mxu0 0
  %1747 = vmatpush1.bf16.msra.mxu0 %v1015
  %1748 = vmatprep.subr.bf16.mxu0 0
  %1749 = vmatpush1.bf16.msra.mxu0 %v1024
  %1750 = vmatprep.subr.bf16.mxu0 0
  %1751 = vmatpush1.bf16.msra.mxu0 %v1033
  %1752 = vmatprep.subr.bf16.mxu0 0
  %1753 = vmatpush1.bf16.msra.mxu0 %v1042
  %1754 = vmatprep.subr.bf16.mxu0 0
  %1755 = vmatpush1.bf16.msra.mxu0 %v1051
  %1756 = vmatprep.subr.bf16.mxu0 0
  %1757 = vmatpush1.bf16.msra.mxu0 %v1060
  %1758 = vmatprep.subr.bf16.mxu0 0
  %1759 = vmatpush1.bf16.msra.mxu0 %v1069
  %1760 = vmatprep.subr.bf16.mxu0 0
  %1761 = vmatpush1.bf16.msra.mxu0 %v1078
  %1762 = vmatprep.subr.bf16.mxu0 0
  %1763 = vmatpush1.bf16.msra.mxu0 %v1087
  %1764 = vmatprep.subr.bf16.mxu0 0
  %1765 = vmatpush1.bf16.msra.mxu0 %v1096
  %1766 = vmatprep.subr.bf16.mxu0 0
  %1767 = vmatpush1.bf16.msra.mxu0 %v1105
  %1768 = vmatprep.subr.bf16.mxu0 0
  %1769 = vmatpush1.bf16.msra.mxu0 %v1114
  %1770 = vmatprep.subr.bf16.mxu0 0
  %1771 = vmatpush1.bf16.msra.mxu0 %v1123
  %1772 = vmatprep.mubr.bf16.mxu0 %v306
  %1773 = vmatmul.mubr.bf16.gmra.mrb[0].mxu0 %v305
  %v1774 = vpop.f32.mrb[0].mxu0
  %v1775 = vadd.f32 0.0, %v1774
  %v1776 = vpop.f32.mrb[0].mxu0
  %v1777 = vpop.f32.mrb[0].mxu0
  %v1778 = vpop.f32.mrb[0].mxu0
  %1779 = vdwg.mxu0
  %1780 = vmatprep.subr.bf16.mxu0 0
  %1781 = vmatpush1.bf16.msra.mxu0 %v1132
  %1782 = vmatprep.subr.bf16.mxu0 0
  %1783 = vmatpush1.bf16.msra.mxu0 %v1141
  %1784 = vmatprep.subr.bf16.mxu0 0
  %1785 = vmatpush1.bf16.msra.mxu0 %v1150
  %1786 = vmatprep.subr.bf16.mxu0 0
  %1787 = vmatpush1.bf16.msra.mxu0 %v1159
  %1788 = vmatprep.subr.bf16.mxu0 0
  %1789 = vmatpush1.bf16.msra.mxu0 %v1168
  %1790 = vmatprep.subr.bf16.mxu0 0
  %1791 = vmatpush1.bf16.msra.mxu0 %v1177
  %1792 = vmatprep.subr.bf16.mxu0 0
  %1793 = vmatpush1.bf16.msra.mxu0 %v1186
  %1794 = vmatprep.subr.bf16.mxu0 0
  %1795 = vmatpush1.bf16.msra.mxu0 %v1195
  %1796 = vmatprep.subr.bf16.mxu0 0
  %1797 = vmatpush1.bf16.msra.mxu0 0
  %1798 = vmatprep.subr.bf16.mxu0 0
  %1799 = vmatpush1.bf16.msra.mxu0 0
  %1800 = vmatprep.subr.bf16.mxu0 0
  %1801 = vmatpush1.bf16.msra.mxu0 0
  %1802 = vmatprep.subr.bf16.mxu0 0
  %1803 = vmatpush1.bf16.msra.mxu0 0
  %1804 = vmatprep.subr.bf16.mxu0 0
  %1805 = vmatpush1.bf16.msra.mxu0 0
  %1806 = vmatprep.subr.bf16.mxu0 0
  %1807 = vmatpush1.bf16.msra.mxu0 0
  %1808 = vmatprep.subr.bf16.mxu0 0
  %1809 = vmatpush1.bf16.msra.mxu0 0
  %1810 = vmatprep.subr.bf16.mxu0 0
  %1811 = vmatpush1.bf16.msra.mxu0 0
  %1812 = vmatprep.mubr.bf16.mxu0 0
  %1813 = vmatmul.mubr.bf16.gmra.mrb[0].mxu0 %v307
  %v1814 = vpop.f32.mrb[0].mxu0
  %v1815 = vadd.f32 %v1775, %v1814
  %v1816 = vpop.f32.mrb[0].mxu0
  %v1817 = vpop.f32.mrb[0].mxu0
  %v1818 = vpop.f32.mrb[0].mxu0
  %1819 = vdwg.mxu0
  %v1823 = vcombine.low %v1488, %v1490
  %v1825 = vunpack.c.l.s4 1983009808
  %v1826 = vunpack.c.0.s8 %v1825
  %v1827 = vlaneseq
  %v1828 = vshrl.u32 %v1827, 7
  %v1829 = vsub.s32 %v1826, %v1828
  %v1830 = vrot.slane %v1823, %v1829
  %v1832 = vunpack.c.l.s4 1983009808
  %v1833 = vunpack.c.0.s8 %v1832
  %v1834 = vlaneseq
  %v1835 = vshrl.u32 %v1834, 7
  %v1836 = vsub.s32 %v1833, %v1835
  %v1837 = vrot.slane %v1570, %v1836
  %v1838 = vcombine.low %v1830, %v1837
  %v1840 = vadd.f32 %v282, %v1838
  %v1841 = vxor.u32 %v1840, 2147483648
  %v1842 = vmul.f32 %v1841, 1.442695
  %v1843 = vpow.pop %v1842
  %v1844 = vadd.f32 %v1843, 1.0
  %v1845 = vrcp.pop %v1844
  %v1846 = vmul.f32 1.0, %v1845
  %v1849 = vrot.slane %v282, 6
  %v1850 = vrot.slane %v283, 6
  %vm1851 = vcmask 1041408
  %v1852 = vsel %vm1851, %v1849, %v1850
  %v1857 = vcombine.low %v1572, %v1652
  %v1859 = vunpack.c.l.s4 1983009808
  %v1860 = vunpack.c.0.s8 %v1859
  %v1861 = vlaneseq
  %v1862 = vshrl.u32 %v1861, 7
  %v1863 = vsub.s32 %v1860, %v1862
  %v1864 = vrot.slane %v1857, %v1863
  %v1866 = vunpack.c.l.s4 1983009808
  %v1867 = vunpack.c.0.s8 %v1866
  %v1868 = vlaneseq
  %v1869 = vshrl.u32 %v1868, 7
  %v1870 = vsub.s32 %v1867, %v1869
  %v1871 = vrot.slane %v1654, %v1870
  %v1872 = vcombine.low %v1864, %v1871
  %v1874 = vadd.f32 %v1852, %v1872
  %v1875 = vxor.u32 %v1874, 2147483648
  %v1876 = vmul.f32 %v1875, 1.442695
  %v1877 = vpow.pop %v1876
  %v1878 = vadd.f32 %v1877, 1.0
  %v1879 = vrcp.pop %v1878
  %v1880 = vmul.f32 1.0, %v1879
  %v1881 = vadd.f32 %v1734, %v269
  %v1882 = vadd.f32 %v1736, %v273
  %v1883 = vadd.f32 %v1815, %v277
  %v1887 = vcombine.low %v1881, %v1882
  %v1889 = vunpack.c.l.s4 1983009808
  %v1890 = vunpack.c.0.s8 %v1889
  %v1891 = vlaneseq
  %v1892 = vshrl.u32 %v1891, 7
  %v1893 = vsub.s32 %v1890, %v1892
  %v1894 = vrot.slane %v1887, %v1893
  %v1896 = vunpack.c.l.s4 1983009808
  %v1897 = vunpack.c.0.s8 %v1896
  %v1898 = vlaneseq
  %v1899 = vshrl.u32 %v1898, 7
  %v1900 = vsub.s32 %v1897, %v1899
  %v1901 = vrot.slane %v1883, %v1900
  %v1902 = vcombine.low %v1894, %v1901
  %v1904 = vmul.f32 %v1846, %v1902
  %v1906 = vrot.slane %v283, 4
  %v1907 = vrot.slane %v284, 4
  %vm1908 = vcmask 1043456
  %v1909 = vsel %vm1908, %v1906, %v1907
  %v1911 = vadd.f32 %v1909, %v1904
  %v1912 = vtanh.pop %v1911
  %v1913 = vsub.f32 %v281, %v1912
  %v1914 = vmul.f32 %v1880, %v1913
  %v1915 = vadd.f32 %v1912, %v1914
  %1916 = vst [vmem:[%s4] sm:$0x3f] %v1915
  %s1917 = scalar_lea.vmem %s0, 18
  %v1918 = vld [vmem:[%s1917] sm:$0xff]
  %v1919 = vld [vmem:[%s1917 + $0x8] sm:$0xff]
  %v1920 = vld [vmem:[%s1917 + $0x10] sm:$0x3]
  %v1922 = vcombine.high %v1915, %v1915
  %v1924 = vunpack.c.l.s4 1983009808
  %v1925 = vunpack.c.0.s8 %v1924
  %v1926 = vlaneseq
  %v1927 = vshrl.u32 %v1926, 7
  %v1928 = vsub.s32 %v1925, %v1927
  %v1929 = vrot.slane %v1915, %v1928
  %v1931 = vunpack.c.l.s4 1983009808
  %v1932 = vunpack.c.0.s8 %v1931
  %v1933 = vlaneseq
  %v1934 = vshrl.u32 %v1933, 7
  %v1935 = vsub.s32 %v1932, %v1934
  %v1936 = vrot.slane %v1922, %v1935
  %v1937 = vcombine.high %v1929, %v1929
  %v1941 = vpack.c.bf16 %v1929, %v1929
  %v1942 = vpack.c.bf16 %v1937, %v1937
  %v1943 = vpack.c.bf16 %v1936, %v1936
  %1944 = vmatprep.subr.bf16.mxu0 %v981
  %1945 = vmatpush1.bf16.msra.mxu0 %v980
  %1946 = vmatprep.subr.bf16.mxu0 %v990
  %1947 = vmatpush1.bf16.msra.mxu0 %v989
  %1948 = vmatprep.subr.bf16.mxu0 %v999
  %1949 = vmatpush1.bf16.msra.mxu0 %v998
  %1950 = vmatprep.subr.bf16.mxu0 %v1008
  %1951 = vmatpush1.bf16.msra.mxu0 %v1007
  %1952 = vmatprep.subr.bf16.mxu0 %v1017
  %1953 = vmatpush1.bf16.msra.mxu0 %v1016
  %1954 = vmatprep.subr.bf16.mxu0 %v1026
  %1955 = vmatpush1.bf16.msra.mxu0 %v1025
  %1956 = vmatprep.subr.bf16.mxu0 %v1035
  %1957 = vmatpush1.bf16.msra.mxu0 %v1034
  %1958 = vmatprep.subr.bf16.mxu0 %v1044
  %1959 = vmatpush1.bf16.msra.mxu0 %v1043
  %1960 = vmatprep.subr.bf16.mxu0 %v1053
  %1961 = vmatpush1.bf16.msra.mxu0 %v1052
  %1962 = vmatprep.subr.bf16.mxu0 %v1062
  %1963 = vmatpush1.bf16.msra.mxu0 %v1061
  %1964 = vmatprep.subr.bf16.mxu0 %v1071
  %1965 = vmatpush1.bf16.msra.mxu0 %v1070
  %1966 = vmatprep.subr.bf16.mxu0 %v1080
  %1967 = vmatpush1.bf16.msra.mxu0 %v1079
  %1968 = vmatprep.subr.bf16.mxu0 %v1089
  %1969 = vmatpush1.bf16.msra.mxu0 %v1088
  %1970 = vmatprep.subr.bf16.mxu0 %v1098
  %1971 = vmatpush1.bf16.msra.mxu0 %v1097
  %1972 = vmatprep.subr.bf16.mxu0 %v1107
  %1973 = vmatpush1.bf16.msra.mxu0 %v1106
  %1974 = vmatprep.subr.bf16.mxu0 %v1116
  %1975 = vmatpush1.bf16.msra.mxu0 %v1115
  %1976 = vmatprep.mubr.bf16.mxu0 %v1942
  %1977 = vmatmul.mubr.bf16.gmra.mrb[0].mxu0 %v1941
  %v1978 = vpop.f32.mrb[0].mxu0
  %v1979 = vadd.f32 0.0, %v1978
  %v1980 = vpop.f32.mrb[0].mxu0
  %v1981 = vadd.f32 0.0, %v1980
  %v1982 = vpop.f32.mrb[0].mxu0
  %v1983 = vpop.f32.mrb[0].mxu0
  %1984 = vdwg.mxu0
  %1985 = vmatprep.subr.bf16.mxu0 %v1125
  %1986 = vmatpush1.bf16.msra.mxu0 %v1124
  %1987 = vmatprep.subr.bf16.mxu0 %v1134
  %1988 = vmatpush1.bf16.msra.mxu0 %v1133
  %1989 = vmatprep.subr.bf16.mxu0 %v1143
  %1990 = vmatpush1.bf16.msra.mxu0 %v1142
  %1991 = vmatprep.subr.bf16.mxu0 %v1152
  %1992 = vmatpush1.bf16.msra.mxu0 %v1151
  %1993 = vmatprep.subr.bf16.mxu0 %v1161
  %1994 = vmatpush1.bf16.msra.mxu0 %v1160
  %1995 = vmatprep.subr.bf16.mxu0 %v1170
  %1996 = vmatpush1.bf16.msra.mxu0 %v1169
  %1997 = vmatprep.subr.bf16.mxu0 %v1179
  %1998 = vmatpush1.bf16.msra.mxu0 %v1178
  %1999 = vmatprep.subr.bf16.mxu0 %v1188
  %2000 = vmatpush1.bf16.msra.mxu0 %v1187
  %2001 = vmatprep.subr.bf16.mxu0 0
  %2002 = vmatpush1.bf16.msra.mxu0 0
  %2003 = vmatprep.subr.bf16.mxu0 0
  %2004 = vmatpush1.bf16.msra.mxu0 0
  %2005 = vmatprep.subr.bf16.mxu0 0
  %2006 = vmatpush1.bf16.msra.mxu0 0
  %2007 = vmatprep.subr.bf16.mxu0 0
  %2008 = vmatpush1.bf16.msra.mxu0 0
  %2009 = vmatprep.subr.bf16.mxu0 0
  %2010 = vmatpush1.bf16.msra.mxu0 0
  %2011 = vmatprep.subr.bf16.mxu0 0
  %2012 = vmatpush1.bf16.msra.mxu0 0
  %2013 = vmatprep.subr.bf16.mxu0 0
  %2014 = vmatpush1.bf16.msra.mxu0 0
  %2015 = vmatprep.subr.bf16.mxu0 0
  %2016 = vmatpush1.bf16.msra.mxu0 0
  %2017 = vmatprep.mubr.bf16.mxu0 0
  %2018 = vmatmul.mubr.bf16.gmra.mrb[0].mxu0 %v1943
  %v2019 = vpop.f32.mrb[0].mxu0
  %v2020 = vadd.f32 %v1979, %v2019
  %v2021 = vpop.f32.mrb[0].mxu0
  %v2022 = vadd.f32 %v1981, %v2021
  %v2023 = vpop.f32.mrb[0].mxu0
  %v2024 = vpop.f32.mrb[0].mxu0
  %2025 = vdwg.mxu0
  %2026 = vmatprep.subr.bf16.mxu0 %v983
  %2027 = vmatpush1.bf16.msra.mxu0 %v982
  %2028 = vmatprep.subr.bf16.mxu0 %v992
  %2029 = vmatpush1.bf16.msra.mxu0 %v991
  %2030 = vmatprep.subr.bf16.mxu0 %v1001
  %2031 = vmatpush1.bf16.msra.mxu0 %v1000
  %2032 = vmatprep.subr.bf16.mxu0 %v1010
  %2033 = vmatpush1.bf16.msra.mxu0 %v1009
  %2034 = vmatprep.subr.bf16.mxu0 %v1019
  %2035 = vmatpush1.bf16.msra.mxu0 %v1018
  %2036 = vmatprep.subr.bf16.mxu0 %v1028
  %2037 = vmatpush1.bf16.msra.mxu0 %v1027
  %2038 = vmatprep.subr.bf16.mxu0 %v1037
  %2039 = vmatpush1.bf16.msra.mxu0 %v1036
  %2040 = vmatprep.subr.bf16.mxu0 %v1046
  %2041 = vmatpush1.bf16.msra.mxu0 %v1045
  %2042 = vmatprep.subr.bf16.mxu0 %v1055
  %2043 = vmatpush1.bf16.msra.mxu0 %v1054
  %2044 = vmatprep.subr.bf16.mxu0 %v1064
  %2045 = vmatpush1.bf16.msra.mxu0 %v1063
  %2046 = vmatprep.subr.bf16.mxu0 %v1073
  %2047 = vmatpush1.bf16.msra.mxu0 %v1072
  %2048 = vmatprep.subr.bf16.mxu0 %v1082
  %2049 = vmatpush1.bf16.msra.mxu0 %v1081
  %2050 = vmatprep.subr.bf16.mxu0 %v1091
  %2051 = vmatpush1.bf16.msra.mxu0 %v1090
  %2052 = vmatprep.subr.bf16.mxu0 %v1100
  %2053 = vmatpush1.bf16.msra.mxu0 %v1099
  %2054 = vmatprep.subr.bf16.mxu0 %v1109
  %2055 = vmatpush1.bf16.msra.mxu0 %v1108
  %2056 = vmatprep.subr.bf16.mxu0 %v1118
  %2057 = vmatpush1.bf16.msra.mxu0 %v1117
  %2058 = vmatprep.mubr.bf16.mxu0 %v1942
  %2059 = vmatmul.mubr.bf16.gmra.mrb[0].mxu0 %v1941
  %v2060 = vpop.f32.mrb[0].mxu0
  %v2061 = vadd.f32 0.0, %v2060
  %v2062 = vpop.f32.mrb[0].mxu0
  %v2063 = vadd.f32 0.0, %v2062
  %v2064 = vpop.f32.mrb[0].mxu0
  %v2065 = vpop.f32.mrb[0].mxu0
  %2066 = vdwg.mxu0
  %2067 = vmatprep.subr.bf16.mxu0 %v1127
  %2068 = vmatpush1.bf16.msra.mxu0 %v1126
  %2069 = vmatprep.subr.bf16.mxu0 %v1136
  %2070 = vmatpush1.bf16.msra.mxu0 %v1135
  %2071 = vmatprep.subr.bf16.mxu0 %v1145
  %2072 = vmatpush1.bf16.msra.mxu0 %v1144
  %2073 = vmatprep.subr.bf16.mxu0 %v1154
  %2074 = vmatpush1.bf16.msra.mxu0 %v1153
  %2075 = vmatprep.subr.bf16.mxu0 %v1163
  %2076 = vmatpush1.bf16.msra.mxu0 %v1162
  %2077 = vmatprep.subr.bf16.mxu0 %v1172
  %2078 = vmatpush1.bf16.msra.mxu0 %v1171
  %2079 = vmatprep.subr.bf16.mxu0 %v1181
  %2080 = vmatpush1.bf16.msra.mxu0 %v1180
  %2081 = vmatprep.subr.bf16.mxu0 %v1190
  %2082 = vmatpush1.bf16.msra.mxu0 %v1189
  %2083 = vmatprep.subr.bf16.mxu0 0
  %2084 = vmatpush1.bf16.msra.mxu0 0
  %2085 = vmatprep.subr.bf16.mxu0 0
  %2086 = vmatpush1.bf16.msra.mxu0 0
  %2087 = vmatprep.subr.bf16.mxu0 0
  %2088 = vmatpush1.bf16.msra.mxu0 0
  %2089 = vmatprep.subr.bf16.mxu0 0
  %2090 = vmatpush1.bf16.msra.mxu0 0
  %2091 = vmatprep.subr.bf16.mxu0 0
  %2092 = vmatpush1.bf16.msra.mxu0 0
  %2093 = vmatprep.subr.bf16.mxu0 0
  %2094 = vmatpush1.bf16.msra.mxu0 0
  %2095 = vmatprep.subr.bf16.mxu0 0
  %2096 = vmatpush1.bf16.msra.mxu0 0
  %2097 = vmatprep.subr.bf16.mxu0 0
  %2098 = vmatpush1.bf16.msra.mxu0 0
  %2099 = vmatprep.mubr.bf16.mxu0 0
  %2100 = vmatmul.mubr.bf16.gmra.mrb[0].mxu0 %v1943
  %v2101 = vpop.f32.mrb[0].mxu0
  %v2102 = vadd.f32 %v2061, %v2101
  %v2103 = vpop.f32.mrb[0].mxu0
  %v2104 = vadd.f32 %v2063, %v2103
  %v2105 = vpop.f32.mrb[0].mxu0
  %v2106 = vpop.f32.mrb[0].mxu0
  %2107 = vdwg.mxu0
  %2108 = vmatprep.subr.bf16.mxu0 %v985
  %2109 = vmatpush1.bf16.msra.mxu0 %v984
  %2110 = vmatprep.subr.bf16.mxu0 %v994
  %2111 = vmatpush1.bf16.msra.mxu0 %v993
  %2112 = vmatprep.subr.bf16.mxu0 %v1003
  %2113 = vmatpush1.bf16.msra.mxu0 %v1002
  %2114 = vmatprep.subr.bf16.mxu0 %v1012
  %2115 = vmatpush1.bf16.msra.mxu0 %v1011
  %2116 = vmatprep.subr.bf16.mxu0 %v1021
  %2117 = vmatpush1.bf16.msra.mxu0 %v1020
  %2118 = vmatprep.subr.bf16.mxu0 %v1030
  %2119 = vmatpush1.bf16.msra.mxu0 %v1029
  %2120 = vmatprep.subr.bf16.mxu0 %v1039
  %2121 = vmatpush1.bf16.msra.mxu0 %v1038
  %2122 = vmatprep.subr.bf16.mxu0 %v1048
  %2123 = vmatpush1.bf16.msra.mxu0 %v1047
  %2124 = vmatprep.subr.bf16.mxu0 %v1057
  %2125 = vmatpush1.bf16.msra.mxu0 %v1056
  %2126 = vmatprep.subr.bf16.mxu0 %v1066
  %2127 = vmatpush1.bf16.msra.mxu0 %v1065
  %2128 = vmatprep.subr.bf16.mxu0 %v1075
  %2129 = vmatpush1.bf16.msra.mxu0 %v1074
  %2130 = vmatprep.subr.bf16.mxu0 %v1084
  %2131 = vmatpush1.bf16.msra.mxu0 %v1083
  %2132 = vmatprep.subr.bf16.mxu0 %v1093
  %2133 = vmatpush1.bf16.msra.mxu0 %v1092
  %2134 = vmatprep.subr.bf16.mxu0 %v1102
  %2135 = vmatpush1.bf16.msra.mxu0 %v1101
  %2136 = vmatprep.subr.bf16.mxu0 %v1111
  %2137 = vmatpush1.bf16.msra.mxu0 %v1110
  %2138 = vmatprep.subr.bf16.mxu0 %v1120
  %2139 = vmatpush1.bf16.msra.mxu0 %v1119
  %2140 = vmatprep.mubr.bf16.mxu0 %v1942
  %2141 = vmatmul.mubr.bf16.gmra.mrb[0].mxu0 %v1941
  %v2142 = vpop.f32.mrb[0].mxu0
  %v2143 = vadd.f32 0.0, %v2142
  %v2144 = vpop.f32.mrb[0].mxu0
  %v2145 = vadd.f32 0.0, %v2144
  %v2146 = vpop.f32.mrb[0].mxu0
  %v2147 = vpop.f32.mrb[0].mxu0
  %2148 = vdwg.mxu0
  %2149 = vmatprep.subr.bf16.mxu0 %v1129
  %2150 = vmatpush1.bf16.msra.mxu0 %v1128
  %2151 = vmatprep.subr.bf16.mxu0 %v1138
  %2152 = vmatpush1.bf16.msra.mxu0 %v1137
  %2153 = vmatprep.subr.bf16.mxu0 %v1147
  %2154 = vmatpush1.bf16.msra.mxu0 %v1146
  %2155 = vmatprep.subr.bf16.mxu0 %v1156
  %2156 = vmatpush1.bf16.msra.mxu0 %v1155
  %2157 = vmatprep.subr.bf16.mxu0 %v1165
  %2158 = vmatpush1.bf16.msra.mxu0 %v1164
  %2159 = vmatprep.subr.bf16.mxu0 %v1174
  %2160 = vmatpush1.bf16.msra.mxu0 %v1173
  %2161 = vmatprep.subr.bf16.mxu0 %v1183
  %2162 = vmatpush1.bf16.msra.mxu0 %v1182
  %2163 = vmatprep.subr.bf16.mxu0 %v1192
  %2164 = vmatpush1.bf16.msra.mxu0 %v1191
  %2165 = vmatprep.subr.bf16.mxu0 0
  %2166 = vmatpush1.bf16.msra.mxu0 0
  %2167 = vmatprep.subr.bf16.mxu0 0
  %2168 = vmatpush1.bf16.msra.mxu0 0
  %2169 = vmatprep.subr.bf16.mxu0 0
  %2170 = vmatpush1.bf16.msra.mxu0 0
  %2171 = vmatprep.subr.bf16.mxu0 0
  %2172 = vmatpush1.bf16.msra.mxu0 0
  %2173 = vmatprep.subr.bf16.mxu0 0
  %2174 = vmatpush1.bf16.msra.mxu0 0
  %2175 = vmatprep.subr.bf16.mxu0 0
  %2176 = vmatpush1.bf16.msra.mxu0 0
  %2177 = vmatprep.subr.bf16.mxu0 0
  %2178 = vmatpush1.bf16.msra.mxu0 0
  %2179 = vmatprep.subr.bf16.mxu0 0
  %2180 = vmatpush1.bf16.msra.mxu0 0
  %2181 = vmatprep.mubr.bf16.mxu0 0
  %2182 = vmatmul.mubr.bf16.gmra.mrb[0].mxu0 %v1943
  %v2183 = vpop.f32.mrb[0].mxu0
  %v2184 = vadd.f32 %v2143, %v2183
  %v2185 = vpop.f32.mrb[0].mxu0
  %v2186 = vadd.f32 %v2145, %v2185
  %v2187 = vpop.f32.mrb[0].mxu0
  %v2188 = vpop.f32.mrb[0].mxu0
  %2189 = vdwg.mxu0
  %2190 = vmatprep.subr.bf16.mxu0 %v987
  %2191 = vmatpush1.bf16.msra.mxu0 %v986
  %2192 = vmatprep.subr.bf16.mxu0 %v996
  %2193 = vmatpush1.bf16.msra.mxu0 %v995
  %2194 = vmatprep.subr.bf16.mxu0 %v1005
  %2195 = vmatpush1.bf16.msra.mxu0 %v1004
  %2196 = vmatprep.subr.bf16.mxu0 %v1014
  %2197 = vmatpush1.bf16.msra.mxu0 %v1013
  %2198 = vmatprep.subr.bf16.mxu0 %v1023
  %2199 = vmatpush1.bf16.msra.mxu0 %v1022
  %2200 = vmatprep.subr.bf16.mxu0 %v1032
  %2201 = vmatpush1.bf16.msra.mxu0 %v1031
  %2202 = vmatprep.subr.bf16.mxu0 %v1041
  %2203 = vmatpush1.bf16.msra.mxu0 %v1040
  %2204 = vmatprep.subr.bf16.mxu0 %v1050
  %2205 = vmatpush1.bf16.msra.mxu0 %v1049
  %2206 = vmatprep.subr.bf16.mxu0 %v1059
  %2207 = vmatpush1.bf16.msra.mxu0 %v1058
  %2208 = vmatprep.subr.bf16.mxu0 %v1068
  %2209 = vmatpush1.bf16.msra.mxu0 %v1067
  %2210 = vmatprep.subr.bf16.mxu0 %v1077
  %2211 = vmatpush1.bf16.msra.mxu0 %v1076
  %2212 = vmatprep.subr.bf16.mxu0 %v1086
  %2213 = vmatpush1.bf16.msra.mxu0 %v1085
  %2214 = vmatprep.subr.bf16.mxu0 %v1095
  %2215 = vmatpush1.bf16.msra.mxu0 %v1094
  %2216 = vmatprep.subr.bf16.mxu0 %v1104
  %2217 = vmatpush1.bf16.msra.mxu0 %v1103
  %2218 = vmatprep.subr.bf16.mxu0 %v1113
  %2219 = vmatpush1.bf16.msra.mxu0 %v1112
  %2220 = vmatprep.subr.bf16.mxu0 %v1122
  %2221 = vmatpush1.bf16.msra.mxu0 %v1121
  %2222 = vmatprep.mubr.bf16.mxu0 %v1942
  %2223 = vmatmul.mubr.bf16.gmra.mrb[0].mxu0 %v1941
  %v2224 = vpop.f32.mrb[0].mxu0
  %v2225 = vadd.f32 0.0, %v2224
  %v2226 = vpop.f32.mrb[0].mxu0
  %v2227 = vadd.f32 0.0, %v2226
  %v2228 = vpop.f32.mrb[0].mxu0
  %v2229 = vpop.f32.mrb[0].mxu0
  %2230 = vdwg.mxu0
  %2231 = vmatprep.subr.bf16.mxu0 %v1131
  %2232 = vmatpush1.bf16.msra.mxu0 %v1130
  %2233 = vmatprep.subr.bf16.mxu0 %v1140
  %2234 = vmatpush1.bf16.msra.mxu0 %v1139
  %2235 = vmatprep.subr.bf16.mxu0 %v1149
  %2236 = vmatpush1.bf16.msra.mxu0 %v1148
  %2237 = vmatprep.subr.bf16.mxu0 %v1158
  %2238 = vmatpush1.bf16.msra.mxu0 %v1157
  %2239 = vmatprep.subr.bf16.mxu0 %v1167
  %2240 = vmatpush1.bf16.msra.mxu0 %v1166
  %2241 = vmatprep.subr.bf16.mxu0 %v1176
  %2242 = vmatpush1.bf16.msra.mxu0 %v1175
  %2243 = vmatprep.subr.bf16.mxu0 %v1185
  %2244 = vmatpush1.bf16.msra.mxu0 %v1184
  %2245 = vmatprep.subr.bf16.mxu0 %v1194
  %2246 = vmatpush1.bf16.msra.mxu0 %v1193
  %2247 = vmatprep.subr.bf16.mxu0 0
  %2248 = vmatpush1.bf16.msra.mxu0 0
  %2249 = vmatprep.subr.bf16.mxu0 0
  %2250 = vmatpush1.bf16.msra.mxu0 0
  %2251 = vmatprep.subr.bf16.mxu0 0
  %2252 = vmatpush1.bf16.msra.mxu0 0
  %2253 = vmatprep.subr.bf16.mxu0 0
  %2254 = vmatpush1.bf16.msra.mxu0 0
  %2255 = vmatprep.subr.bf16.mxu0 0
  %2256 = vmatpush1.bf16.msra.mxu0 0
  %2257 = vmatprep.subr.bf16.mxu0 0
  %2258 = vmatpush1.bf16.msra.mxu0 0
  %2259 = vmatprep.subr.bf16.mxu0 0
  %2260 = vmatpush1.bf16.msra.mxu0 0
  %2261 = vmatprep.subr.bf16.mxu0 0
  %2262 = vmatpush1.bf16.msra.mxu0 0
  %2263 = vmatprep.mubr.bf16.mxu0 0
  %2264 = vmatmul.mubr.bf16.gmra.mrb[0].mxu0 %v1943
  %v2265 = vpop.f32.mrb[0].mxu0
  %v2266 = vadd.f32 %v2225, %v2265
  %v2267 = vpop.f32.mrb[0].mxu0
  %v2268 = vadd.f32 %v2227, %v2267
  %v2269 = vpop.f32.mrb[0].mxu0
  %v2270 = vpop.f32.mrb[0].mxu0
  %2271 = vdwg.mxu0
  %2272 = vmatprep.subr.bf16.mxu0 0
  %2273 = vmatpush1.bf16.msra.mxu0 %v988
  %2274 = vmatprep.subr.bf16.mxu0 0
  %2275 = vmatpush1.bf16.msra.mxu0 %v997
  %2276 = vmatprep.subr.bf16.mxu0 0
  %2277 = vmatpush1.bf16.msra.mxu0 %v1006
  %2278 = vmatprep.subr.bf16.mxu0 0
  %2279 = vmatpush1.bf16.msra.mxu0 %v1015
  %2280 = vmatprep.subr.bf16.mxu0 0
  %2281 = vmatpush1.bf16.msra.mxu0 %v1024
  %2282 = vmatprep.subr.bf16.mxu0 0
  %2283 = vmatpush1.bf16.msra.mxu0 %v1033
  %2284 = vmatprep.subr.bf16.mxu0 0
  %2285 = vmatpush1.bf16.msra.mxu0 %v1042
  %2286 = vmatprep.subr.bf16.mxu0 0
  %2287 = vmatpush1.bf16.msra.mxu0 %v1051
  %2288 = vmatprep.subr.bf16.mxu0 0
  %2289 = vmatpush1.bf16.msra.mxu0 %v1060
  %2290 = vmatprep.subr.bf16.mxu0 0
  %2291 = vmatpush1.bf16.msra.mxu0 %v1069
  %2292 = vmatprep.subr.bf16.mxu0 0
  %2293 = vmatpush1.bf16.msra.mxu0 %v1078
  %2294 = vmatprep.subr.bf16.mxu0 0
  %2295 = vmatpush1.bf16.msra.mxu0 %v1087
  %2296 = vmatprep.subr.bf16.mxu0 0
  %2297 = vmatpush1.bf16.msra.mxu0 %v1096
  %2298 = vmatprep.subr.bf16.mxu0 0
  %2299 = vmatpush1.bf16.msra.mxu0 %v1105
  %2300 = vmatprep.subr.bf16.mxu0 0
  %2301 = vmatpush1.bf16.msra.mxu0 %v1114
  %2302 = vmatprep.subr.bf16.mxu0 0
  %2303 = vmatpush1.bf16.msra.mxu0 %v1123
  %2304 = vmatprep.mubr.bf16.mxu0 %v1942
  %2305 = vmatmul.mubr.bf16.gmra.mrb[0].mxu0 %v1941
  %v2306 = vpop.f32.mrb[0].mxu0
  %v2307 = vadd.f32 0.0, %v2306
  %v2308 = vpop.f32.mrb[0].mxu0
  %v2309 = vpop.f32.mrb[0].mxu0
  %v2310 = vpop.f32.mrb[0].mxu0
  %2311 = vdwg.mxu0
  %2312 = vmatprep.subr.bf16.mxu0 0
  %2313 = vmatpush1.bf16.msra.mxu0 %v1132
  %2314 = vmatprep.subr.bf16.mxu0 0
  %2315 = vmatpush1.bf16.msra.mxu0 %v1141
  %2316 = vmatprep.subr.bf16.mxu0 0
  %2317 = vmatpush1.bf16.msra.mxu0 %v1150
  %2318 = vmatprep.subr.bf16.mxu0 0
  %2319 = vmatpush1.bf16.msra.mxu0 %v1159
  %2320 = vmatprep.subr.bf16.mxu0 0
  %2321 = vmatpush1.bf16.msra.mxu0 %v1168
  %2322 = vmatprep.subr.bf16.mxu0 0
  %2323 = vmatpush1.bf16.msra.mxu0 %v1177
  %2324 = vmatprep.subr.bf16.mxu0 0
  %2325 = vmatpush1.bf16.msra.mxu0 %v1186
  %2326 = vmatprep.subr.bf16.mxu0 0
  %2327 = vmatpush1.bf16.msra.mxu0 %v1195
  %2328 = vmatprep.subr.bf16.mxu0 0
  %2329 = vmatpush1.bf16.msra.mxu0 0
  %2330 = vmatprep.subr.bf16.mxu0 0
  %2331 = vmatpush1.bf16.msra.mxu0 0
  %2332 = vmatprep.subr.bf16.mxu0 0
  %2333 = vmatpush1.bf16.msra.mxu0 0
  %2334 = vmatprep.subr.bf16.mxu0 0
  %2335 = vmatpush1.bf16.msra.mxu0 0
  %2336 = vmatprep.subr.bf16.mxu0 0
  %2337 = vmatpush1.bf16.msra.mxu0 0
  %2338 = vmatprep.subr.bf16.mxu0 0
  %2339 = vmatpush1.bf16.msra.mxu0 0
  %2340 = vmatprep.subr.bf16.mxu0 0
  %2341 = vmatpush1.bf16.msra.mxu0 0
  %2342 = vmatprep.subr.bf16.mxu0 0
  %2343 = vmatpush1.bf16.msra.mxu0 0
  %2344 = vmatprep.mubr.bf16.mxu0 0
  %2345 = vmatmul.mubr.bf16.gmra.mrb[0].mxu0 %v1943
  %v2346 = vpop.f32.mrb[0].mxu0
  %v2347 = vadd.f32 %v2307, %v2346
  %v2348 = vpop.f32.mrb[0].mxu0
  %v2349 = vpop.f32.mrb[0].mxu0
  %v2350 = vpop.f32.mrb[0].mxu0
  %2351 = vdwg.mxu0
  %v2355 = vcombine.low %v2020, %v2022
  %v2357 = vunpack.c.l.s4 1983009808
  %v2358 = vunpack.c.0.s8 %v2357
  %v2359 = vlaneseq
  %v2360 = vshrl.u32 %v2359, 7
  %v2361 = vsub.s32 %v2358, %v2360
  %v2362 = vrot.slane %v2355, %v2361
  %v2364 = vunpack.c.l.s4 1983009808
  %v2365 = vunpack.c.0.s8 %v2364
  %v2366 = vlaneseq
  %v2367 = vshrl.u32 %v2366, 7
  %v2368 = vsub.s32 %v2365, %v2367
  %v2369 = vrot.slane %v2102, %v2368
  %v2370 = vcombine.low %v2362, %v2369
  %v2372 = vadd.f32 %v1918, %v2370
  %v2373 = vxor.u32 %v2372, 2147483648
  %v2374 = vmul.f32 %v2373, 1.442695
  %v2375 = vpow.pop %v2374
  %v2376 = vadd.f32 %v2375, 1.0
  %v2377 = vrcp.pop %v2376
  %v2378 = vmul.f32 1.0, %v2377
  %v2381 = vrot.slane %v1918, 6
  %v2382 = vrot.slane %v1919, 6
  %v2383 = vsel %vm1851, %v2381, %v2382
  %v2388 = vcombine.low %v2104, %v2184
  %v2390 = vunpack.c.l.s4 1983009808
  %v2391 = vunpack.c.0.s8 %v2390
  %v2392 = vlaneseq
  %v2393 = vshrl.u32 %v2392, 7
  %v2394 = vsub.s32 %v2391, %v2393
  %v2395 = vrot.slane %v2388, %v2394
  %v2397 = vunpack.c.l.s4 1983009808
  %v2398 = vunpack.c.0.s8 %v2397
  %v2399 = vlaneseq
  %v2400 = vshrl.u32 %v2399, 7
  %v2401 = vsub.s32 %v2398, %v2400
  %v2402 = vrot.slane %v2186, %v2401
  %v2403 = vcombine.low %v2395, %v2402
  %v2405 = vadd.f32 %v2383, %v2403
  %v2406 = vxor.u32 %v2405, 2147483648
  %v2407 = vmul.f32 %v2406, 1.442695
  %v2408 = vpow.pop %v2407
  %v2409 = vadd.f32 %v2408, 1.0
  %v2410 = vrcp.pop %v2409
  %v2411 = vmul.f32 1.0, %v2410
  %v2412 = vadd.f32 %v2266, %v269
  %v2413 = vadd.f32 %v2268, %v273
  %v2414 = vadd.f32 %v2347, %v277
  %v2418 = vcombine.low %v2412, %v2413
  %v2420 = vunpack.c.l.s4 1983009808
  %v2421 = vunpack.c.0.s8 %v2420
  %v2422 = vlaneseq
  %v2423 = vshrl.u32 %v2422, 7
  %v2424 = vsub.s32 %v2421, %v2423
  %v2425 = vrot.slane %v2418, %v2424
  %v2427 = vunpack.c.l.s4 1983009808
  %v2428 = vunpack.c.0.s8 %v2427
  %v2429 = vlaneseq
  %v2430 = vshrl.u32 %v2429, 7
  %v2431 = vsub.s32 %v2428, %v2430
  %v2432 = vrot.slane %v2414, %v2431
  %v2433 = vcombine.low %v2425, %v2432
  %v2435 = vmul.f32 %v2378, %v2433
  %v2437 = vrot.slane %v1919, 4
  %v2438 = vrot.slane %v1920, 4
  %v2439 = vsel %vm1908, %v2437, %v2438
  %v2441 = vadd.f32 %v2439, %v2435
  %v2442 = vtanh.pop %v2441
  %v2443 = vsub.f32 %v1915, %v2442
  %v2444 = vmul.f32 %v2411, %v2443
  %v2445 = vadd.f32 %v2442, %v2444
  %s2446 = scalar_lea.vmem %s4, 6
  %2447 = vst [vmem:[%s2446] sm:$0x3f] %v2445
  %s2448 = scalar_lea.vmem %s0, 36
  %v2449 = vld [vmem:[%s2448] sm:$0xff]
  %v2450 = vld [vmem:[%s2448 + $0x8] sm:$0xff]
  %v2451 = vld [vmem:[%s2448 + $0x10] sm:$0x3]
  %v2453 = vcombine.high %v2445, %v2445
  %v2455 = vunpack.c.l.s4 1983009808
  %v2456 = vunpack.c.0.s8 %v2455
  %v2457 = vlaneseq
  %v2458 = vshrl.u32 %v2457, 7
  %v2459 = vsub.s32 %v2456, %v2458
  %v2460 = vrot.slane %v2445, %v2459
  %v2462 = vunpack.c.l.s4 1983009808
  %v2463 = vunpack.c.0.s8 %v2462
  %v2464 = vlaneseq
  %v2465 = vshrl.u32 %v2464, 7
  %v2466 = vsub.s32 %v2463, %v2465
  %v2467 = vrot.slane %v2453, %v2466
  %v2468 = vcombine.high %v2460, %v2460
  %v2472 = vpack.c.bf16 %v2460, %v2460
  %v2473 = vpack.c.bf16 %v2468, %v2468
  %v2474 = vpack.c.bf16 %v2467, %v2467
  %2475 = vmatprep.subr.bf16.mxu0 %v981
  %2476 = vmatpush1.bf16.msra.mxu0 %v980
  %2477 = vmatprep.subr.bf16.mxu0 %v990
  %2478 = vmatpush1.bf16.msra.mxu0 %v989
  %2479 = vmatprep.subr.bf16.mxu0 %v999
  %2480 = vmatpush1.bf16.msra.mxu0 %v998
  %2481 = vmatprep.subr.bf16.mxu0 %v1008
  %2482 = vmatpush1.bf16.msra.mxu0 %v1007
  %2483 = vmatprep.subr.bf16.mxu0 %v1017
  %2484 = vmatpush1.bf16.msra.mxu0 %v1016
  %2485 = vmatprep.subr.bf16.mxu0 %v1026
  %2486 = vmatpush1.bf16.msra.mxu0 %v1025
  %2487 = vmatprep.subr.bf16.mxu0 %v1035
  %2488 = vmatpush1.bf16.msra.mxu0 %v1034
  %2489 = vmatprep.subr.bf16.mxu0 %v1044
  %2490 = vmatpush1.bf16.msra.mxu0 %v1043
  %2491 = vmatprep.subr.bf16.mxu0 %v1053
  %2492 = vmatpush1.bf16.msra.mxu0 %v1052
  %2493 = vmatprep.subr.bf16.mxu0 %v1062
  %2494 = vmatpush1.bf16.msra.mxu0 %v1061
  %2495 = vmatprep.subr.bf16.mxu0 %v1071
  %2496 = vmatpush1.bf16.msra.mxu0 %v1070
  %2497 = vmatprep.subr.bf16.mxu0 %v1080
  %2498 = vmatpush1.bf16.msra.mxu0 %v1079
  %2499 = vmatprep.subr.bf16.mxu0 %v1089
  %2500 = vmatpush1.bf16.msra.mxu0 %v1088
  %2501 = vmatprep.subr.bf16.mxu0 %v1098
  %2502 = vmatpush1.bf16.msra.mxu0 %v1097
  %2503 = vmatprep.subr.bf16.mxu0 %v1107
  %2504 = vmatpush1.bf16.msra.mxu0 %v1106
  %2505 = vmatprep.subr.bf16.mxu0 %v1116
  %2506 = vmatpush1.bf16.msra.mxu0 %v1115
  %2507 = vmatprep.mubr.bf16.mxu0 %v2473
  %2508 = vmatmul.mubr.bf16.gmra.mrb[0].mxu0 %v2472
  %v2509 = vpop.f32.mrb[0].mxu0
  %v2510 = vadd.f32 0.0, %v2509
  %v2511 = vpop.f32.mrb[0].mxu0
  %v2512 = vadd.f32 0.0, %v2511
  %v2513 = vpop.f32.mrb[0].mxu0
  %v2514 = vpop.f32.mrb[0].mxu0
  %2515 = vdwg.mxu0
  %2516 = vmatprep.subr.bf16.mxu0 %v1125
  %2517 = vmatpush1.bf16.msra.mxu0 %v1124
  %2518 = vmatprep.subr.bf16.mxu0 %v1134
  %2519 = vmatpush1.bf16.msra.mxu0 %v1133
  %2520 = vmatprep.subr.bf16.mxu0 %v1143
  %2521 = vmatpush1.bf16.msra.mxu0 %v1142
  %2522 = vmatprep.subr.bf16.mxu0 %v1152
  %2523 = vmatpush1.bf16.msra.mxu0 %v1151
  %2524 = vmatprep.subr.bf16.mxu0 %v1161
  %2525 = vmatpush1.bf16.msra.mxu0 %v1160
  %2526 = vmatprep.subr.bf16.mxu0 %v1170
  %2527 = vmatpush1.bf16.msra.mxu0 %v1169
  %2528 = vmatprep.subr.bf16.mxu0 %v1179
  %2529 = vmatpush1.bf16.msra.mxu0 %v1178
  %2530 = vmatprep.subr.bf16.mxu0 %v1188
  %2531 = vmatpush1.bf16.msra.mxu0 %v1187
  %2532 = vmatprep.subr.bf16.mxu0 0
  %2533 = vmatpush1.bf16.msra.mxu0 0
  %2534 = vmatprep.subr.bf16.mxu0 0
  %2535 = vmatpush1.bf16.msra.mxu0 0
  %2536 = vmatprep.subr.bf16.mxu0 0
  %2537 = vmatpush1.bf16.msra.mxu0 0
  %2538 = vmatprep.subr.bf16.mxu0 0
  %2539 = vmatpush1.bf16.msra.mxu0 0
  %2540 = vmatprep.subr.bf16.mxu0 0
  %2541 = vmatpush1.bf16.msra.mxu0 0
  %2542 = vmatprep.subr.bf16.mxu0 0
  %2543 = vmatpush1.bf16.msra.mxu0 0
  %2544 = vmatprep.subr.bf16.mxu0 0
  %2545 = vmatpush1.bf16.msra.mxu0 0
  %2546 = vmatprep.subr.bf16.mxu0 0
  %2547 = vmatpush1.bf16.msra.mxu0 0
  %2548 = vmatprep.mubr.bf16.mxu0 0
  %2549 = vmatmul.mubr.bf16.gmra.mrb[0].mxu0 %v2474
  %v2550 = vpop.f32.mrb[0].mxu0
  %v2551 = vadd.f32 %v2510, %v2550
  %v2552 = vpop.f32.mrb[0].mxu0
  %v2553 = vadd.f32 %v2512, %v2552
  %v2554 = vpop.f32.mrb[0].mxu0
  %v2555 = vpop.f32.mrb[0].mxu0
  %2556 = vdwg.mxu0
  %2557 = vmatprep.subr.bf16.mxu0 %v983
  %2558 = vmatpush1.bf16.msra.mxu0 %v982
  %2559 = vmatprep.subr.bf16.mxu0 %v992
  %2560 = vmatpush1.bf16.msra.mxu0 %v991
  %2561 = vmatprep.subr.bf16.mxu0 %v1001
  %2562 = vmatpush1.bf16.msra.mxu0 %v1000
  %2563 = vmatprep.subr.bf16.mxu0 %v1010
  %2564 = vmatpush1.bf16.msra.mxu0 %v1009
  %2565 = vmatprep.subr.bf16.mxu0 %v1019
  %2566 = vmatpush1.bf16.msra.mxu0 %v1018
  %2567 = vmatprep.subr.bf16.mxu0 %v1028
  %2568 = vmatpush1.bf16.msra.mxu0 %v1027
  %2569 = vmatprep.subr.bf16.mxu0 %v1037
  %2570 = vmatpush1.bf16.msra.mxu0 %v1036
  %2571 = vmatprep.subr.bf16.mxu0 %v1046
  %2572 = vmatpush1.bf16.msra.mxu0 %v1045
  %2573 = vmatprep.subr.bf16.mxu0 %v1055
  %2574 = vmatpush1.bf16.msra.mxu0 %v1054
  %2575 = vmatprep.subr.bf16.mxu0 %v1064
  %2576 = vmatpush1.bf16.msra.mxu0 %v1063
  %2577 = vmatprep.subr.bf16.mxu0 %v1073
  %2578 = vmatpush1.bf16.msra.mxu0 %v1072
  %2579 = vmatprep.subr.bf16.mxu0 %v1082
  %2580 = vmatpush1.bf16.msra.mxu0 %v1081
  %2581 = vmatprep.subr.bf16.mxu0 %v1091
  %2582 = vmatpush1.bf16.msra.mxu0 %v1090
  %2583 = vmatprep.subr.bf16.mxu0 %v1100
  %2584 = vmatpush1.bf16.msra.mxu0 %v1099
  %2585 = vmatprep.subr.bf16.mxu0 %v1109
  %2586 = vmatpush1.bf16.msra.mxu0 %v1108
  %2587 = vmatprep.subr.bf16.mxu0 %v1118
  %2588 = vmatpush1.bf16.msra.mxu0 %v1117
  %2589 = vmatprep.mubr.bf16.mxu0 %v2473
  %2590 = vmatmul.mubr.bf16.gmra.mrb[0].mxu0 %v2472
  %v2591 = vpop.f32.mrb[0].mxu0
  %v2592 = vadd.f32 0.0, %v2591
  %v2593 = vpop.f32.mrb[0].mxu0
  %v2594 = vadd.f32 0.0, %v2593
  %v2595 = vpop.f32.mrb[0].mxu0
  %v2596 = vpop.f32.mrb[0].mxu0
  %2597 = vdwg.mxu0
  %2598 = vmatprep.subr.bf16.mxu0 %v1127
  %2599 = vmatpush1.bf16.msra.mxu0 %v1126
  %2600 = vmatprep.subr.bf16.mxu0 %v1136
  %2601 = vmatpush1.bf16.msra.mxu0 %v1135
  %2602 = vmatprep.subr.bf16.mxu0 %v1145
  %2603 = vmatpush1.bf16.msra.mxu0 %v1144
  %2604 = vmatprep.subr.bf16.mxu0 %v1154
  %2605 = vmatpush1.bf16.msra.mxu0 %v1153
  %2606 = vmatprep.subr.bf16.mxu0 %v1163
  %2607 = vmatpush1.bf16.msra.mxu0 %v1162
  %2608 = vmatprep.subr.bf16.mxu0 %v1172
  %2609 = vmatpush1.bf16.msra.mxu0 %v1171
  %2610 = vmatprep.subr.bf16.mxu0 %v1181
  %2611 = vmatpush1.bf16.msra.mxu0 %v1180
  %2612 = vmatprep.subr.bf16.mxu0 %v1190
  %2613 = vmatpush1.bf16.msra.mxu0 %v1189
  %2614 = vmatprep.subr.bf16.mxu0 0
  %2615 = vmatpush1.bf16.msra.mxu0 0
  %2616 = vmatprep.subr.bf16.mxu0 0
  %2617 = vmatpush1.bf16.msra.mxu0 0
  %2618 = vmatprep.subr.bf16.mxu0 0
  %2619 = vmatpush1.bf16.msra.mxu0 0
  %2620 = vmatprep.subr.bf16.mxu0 0
  %2621 = vmatpush1.bf16.msra.mxu0 0
  %2622 = vmatprep.subr.bf16.mxu0 0
  %2623 = vmatpush1.bf16.msra.mxu0 0
  %2624 = vmatprep.subr.bf16.mxu0 0
  %2625 = vmatpush1.bf16.msra.mxu0 0
  %2626 = vmatprep.subr.bf16.mxu0 0
  %2627 = vmatpush1.bf16.msra.mxu0 0
  %2628 = vmatprep.subr.bf16.mxu0 0
  %2629 = vmatpush1.bf16.msra.mxu0 0
  %2630 = vmatprep.mubr.bf16.mxu0 0
  %2631 = vmatmul.mubr.bf16.gmra.mrb[0].mxu0 %v2474
  %v2632 = vpop.f32.mrb[0].mxu0
  %v2633 = vadd.f32 %v2592, %v2632
  %v2634 = vpop.f32.mrb[0].mxu0
  %v2635 = vadd.f32 %v2594, %v2634
  %v2636 = vpop.f32.mrb[0].mxu0
  %v2637 = vpop.f32.mrb[0].mxu0
  %2638 = vdwg.mxu0
  %2639 = vmatprep.subr.bf16.mxu0 %v985
  %2640 = vmatpush1.bf16.msra.mxu0 %v984
  %2641 = vmatprep.subr.bf16.mxu0 %v994
  %2642 = vmatpush1.bf16.msra.mxu0 %v993
  %2643 = vmatprep.subr.bf16.mxu0 %v1003
  %2644 = vmatpush1.bf16.msra.mxu0 %v1002
  %2645 = vmatprep.subr.bf16.mxu0 %v1012
  %2646 = vmatpush1.bf16.msra.mxu0 %v1011
  %2647 = vmatprep.subr.bf16.mxu0 %v1021
  %2648 = vmatpush1.bf16.msra.mxu0 %v1020
  %2649 = vmatprep.subr.bf16.mxu0 %v1030
  %2650 = vmatpush1.bf16.msra.mxu0 %v1029
  %2651 = vmatprep.subr.bf16.mxu0 %v1039
  %2652 = vmatpush1.bf16.msra.mxu0 %v1038
  %2653 = vmatprep.subr.bf16.mxu0 %v1048
  %2654 = vmatpush1.bf16.msra.mxu0 %v1047
  %2655 = vmatprep.subr.bf16.mxu0 %v1057
  %2656 = vmatpush1.bf16.msra.mxu0 %v1056
  %2657 = vmatprep.subr.bf16.mxu0 %v1066
  %2658 = vmatpush1.bf16.msra.mxu0 %v1065
  %2659 = vmatprep.subr.bf16.mxu0 %v1075
  %2660 = vmatpush1.bf16.msra.mxu0 %v1074
  %2661 = vmatprep.subr.bf16.mxu0 %v1084
  %2662 = vmatpush1.bf16.msra.mxu0 %v1083
  %2663 = vmatprep.subr.bf16.mxu0 %v1093
  %2664 = vmatpush1.bf16.msra.mxu0 %v1092
  %2665 = vmatprep.subr.bf16.mxu0 %v1102
  %2666 = vmatpush1.bf16.msra.mxu0 %v1101
  %2667 = vmatprep.subr.bf16.mxu0 %v1111
  %2668 = vmatpush1.bf16.msra.mxu0 %v1110
  %2669 = vmatprep.subr.bf16.mxu0 %v1120
  %2670 = vmatpush1.bf16.msra.mxu0 %v1119
  %2671 = vmatprep.mubr.bf16.mxu0 %v2473
  %2672 = vmatmul.mubr.bf16.gmra.mrb[0].mxu0 %v2472
  %v2673 = vpop.f32.mrb[0].mxu0
  %v2674 = vadd.f32 0.0, %v2673
  %v2675 = vpop.f32.mrb[0].mxu0
  %v2676 = vadd.f32 0.0, %v2675
  %v2677 = vpop.f32.mrb[0].mxu0
  %v2678 = vpop.f32.mrb[0].mxu0
  %2679 = vdwg.mxu0
  %2680 = vmatprep.subr.bf16.mxu0 %v1129
  %2681 = vmatpush1.bf16.msra.mxu0 %v1128
  %2682 = vmatprep.subr.bf16.mxu0 %v1138
  %2683 = vmatpush1.bf16.msra.mxu0 %v1137
  %2684 = vmatprep.subr.bf16.mxu0 %v1147
  %2685 = vmatpush1.bf16.msra.mxu0 %v1146
  %2686 = vmatprep.subr.bf16.mxu0 %v1156
  %2687 = vmatpush1.bf16.msra.mxu0 %v1155
  %2688 = vmatprep.subr.bf16.mxu0 %v1165
  %2689 = vmatpush1.bf16.msra.mxu0 %v1164
  %2690 = vmatprep.subr.bf16.mxu0 %v1174
  %2691 = vmatpush1.bf16.msra.mxu0 %v1173
  %2692 = vmatprep.subr.bf16.mxu0 %v1183
  %2693 = vmatpush1.bf16.msra.mxu0 %v1182
  %2694 = vmatprep.subr.bf16.mxu0 %v1192
  %2695 = vmatpush1.bf16.msra.mxu0 %v1191
  %2696 = vmatprep.subr.bf16.mxu0 0
  %2697 = vmatpush1.bf16.msra.mxu0 0
  %2698 = vmatprep.subr.bf16.mxu0 0
  %2699 = vmatpush1.bf16.msra.mxu0 0
  %2700 = vmatprep.subr.bf16.mxu0 0
  %2701 = vmatpush1.bf16.msra.mxu0 0
  %2702 = vmatprep.subr.bf16.mxu0 0
  %2703 = vmatpush1.bf16.msra.mxu0 0
  %2704 = vmatprep.subr.bf16.mxu0 0
  %2705 = vmatpush1.bf16.msra.mxu0 0
  %2706 = vmatprep.subr.bf16.mxu0 0
  %2707 = vmatpush1.bf16.msra.mxu0 0
  %2708 = vmatprep.subr.bf16.mxu0 0
  %2709 = vmatpush1.bf16.msra.mxu0 0
  %2710 = vmatprep.subr.bf16.mxu0 0
  %2711 = vmatpush1.bf16.msra.mxu0 0
  %2712 = vmatprep.mubr.bf16.mxu0 0
  %2713 = vmatmul.mubr.bf16.gmra.mrb[0].mxu0 %v2474
  %v2714 = vpop.f32.mrb[0].mxu0
  %v2715 = vadd.f32 %v2674, %v2714
  %v2716 = vpop.f32.mrb[0].mxu0
  %v2717 = vadd.f32 %v2676, %v2716
  %v2718 = vpop.f32.mrb[0].mxu0
  %v2719 = vpop.f32.mrb[0].mxu0
  %2720 = vdwg.mxu0
  %2721 = vmatprep.subr.bf16.mxu0 %v987
  %2722 = vmatpush1.bf16.msra.mxu0 %v986
  %2723 = vmatprep.subr.bf16.mxu0 %v996
  %2724 = vmatpush1.bf16.msra.mxu0 %v995
  %2725 = vmatprep.subr.bf16.mxu0 %v1005
  %2726 = vmatpush1.bf16.msra.mxu0 %v1004
  %2727 = vmatprep.subr.bf16.mxu0 %v1014
  %2728 = vmatpush1.bf16.msra.mxu0 %v1013
  %2729 = vmatprep.subr.bf16.mxu0 %v1023
  %2730 = vmatpush1.bf16.msra.mxu0 %v1022
  %2731 = vmatprep.subr.bf16.mxu0 %v1032
  %2732 = vmatpush1.bf16.msra.mxu0 %v1031
  %2733 = vmatprep.subr.bf16.mxu0 %v1041
  %2734 = vmatpush1.bf16.msra.mxu0 %v1040
  %2735 = vmatprep.subr.bf16.mxu0 %v1050
  %2736 = vmatpush1.bf16.msra.mxu0 %v1049
  %2737 = vmatprep.subr.bf16.mxu0 %v1059
  %2738 = vmatpush1.bf16.msra.mxu0 %v1058
  %2739 = vmatprep.subr.bf16.mxu0 %v1068
  %2740 = vmatpush1.bf16.msra.mxu0 %v1067
  %2741 = vmatprep.subr.bf16.mxu0 %v1077
  %2742 = vmatpush1.bf16.msra.mxu0 %v1076
  %2743 = vmatprep.subr.bf16.mxu0 %v1086
  %2744 = vmatpush1.bf16.msra.mxu0 %v1085
  %2745 = vmatprep.subr.bf16.mxu0 %v1095
  %2746 = vmatpush1.bf16.msra.mxu0 %v1094
  %2747 = vmatprep.subr.bf16.mxu0 %v1104
  %2748 = vmatpush1.bf16.msra.mxu0 %v1103
  %2749 = vmatprep.subr.bf16.mxu0 %v1113
  %2750 = vmatpush1.bf16.msra.mxu0 %v1112
  %2751 = vmatprep.subr.bf16.mxu0 %v1122
  %2752 = vmatpush1.bf16.msra.mxu0 %v1121
  %2753 = vmatprep.mubr.bf16.mxu0 %v2473
  %2754 = vmatmul.mubr.bf16.gmra.mrb[0].mxu0 %v2472
  %v2755 = vpop.f32.mrb[0].mxu0
  %v2756 = vadd.f32 0.0, %v2755
  %v2757 = vpop.f32.mrb[0].mxu0
  %v2758 = vadd.f32 0.0, %v2757
  %v2759 = vpop.f32.mrb[0].mxu0
  %v2760 = vpop.f32.mrb[0].mxu0
  %2761 = vdwg.mxu0
  %2762 = vmatprep.subr.bf16.mxu0 %v1131
  %2763 = vmatpush1.bf16.msra.mxu0 %v1130
  %2764 = vmatprep.subr.bf16.mxu0 %v1140
  %2765 = vmatpush1.bf16.msra.mxu0 %v1139
  %2766 = vmatprep.subr.bf16.mxu0 %v1149
  %2767 = vmatpush1.bf16.msra.mxu0 %v1148
  %2768 = vmatprep.subr.bf16.mxu0 %v1158
  %2769 = vmatpush1.bf16.msra.mxu0 %v1157
  %2770 = vmatprep.subr.bf16.mxu0 %v1167
  %2771 = vmatpush1.bf16.msra.mxu0 %v1166
  %2772 = vmatprep.subr.bf16.mxu0 %v1176
  %2773 = vmatpush1.bf16.msra.mxu0 %v1175
  %2774 = vmatprep.subr.bf16.mxu0 %v1185
  %2775 = vmatpush1.bf16.msra.mxu0 %v1184
  %2776 = vmatprep.subr.bf16.mxu0 %v1194
  %2777 = vmatpush1.bf16.msra.mxu0 %v1193
  %2778 = vmatprep.subr.bf16.mxu0 0
  %2779 = vmatpush1.bf16.msra.mxu0 0
  %2780 = vmatprep.subr.bf16.mxu0 0
  %2781 = vmatpush1.bf16.msra.mxu0 0
  %2782 = vmatprep.subr.bf16.mxu0 0
  %2783 = vmatpush1.bf16.msra.mxu0 0
  %2784 = vmatprep.subr.bf16.mxu0 0
  %2785 = vmatpush1.bf16.msra.mxu0 0
  %2786 = vmatprep.subr.bf16.mxu0 0
  %2787 = vmatpush1.bf16.msra.mxu0 0
  %2788 = vmatprep.subr.bf16.mxu0 0
  %2789 = vmatpush1.bf16.msra.mxu0 0
  %2790 = vmatprep.subr.bf16.mxu0 0
  %2791 = vmatpush1.bf16.msra.mxu0 0
  %2792 = vmatprep.subr.bf16.mxu0 0
  %2793 = vmatpush1.bf16.msra.mxu0 0
  %2794 = vmatprep.mubr.bf16.mxu0 0
  %2795 = vmatmul.mubr.bf16.gmra.mrb[0].mxu0 %v2474
  %v2796 = vpop.f32.mrb[0].mxu0
  %v2797 = vadd.f32 %v2756, %v2796
  %v2798 = vpop.f32.mrb[0].mxu0
  %v2799 = vadd.f32 %v2758, %v2798
  %v2800 = vpop.f32.mrb[0].mxu0
  %v2801 = vpop.f32.mrb[0].mxu0
  %2802 = vdwg.mxu0
  %2803 = vmatprep.subr.bf16.mxu0 0
  %2804 = vmatpush1.bf16.msra.mxu0 %v988
  %2805 = vmatprep.subr.bf16.mxu0 0
  %2806 = vmatpush1.bf16.msra.mxu0 %v997
  %2807 = vmatprep.subr.bf16.mxu0 0
  %2808 = vmatpush1.bf16.msra.mxu0 %v1006
  %2809 = vmatprep.subr.bf16.mxu0 0
  %2810 = vmatpush1.bf16.msra.mxu0 %v1015
  %2811 = vmatprep.subr.bf16.mxu0 0
  %2812 = vmatpush1.bf16.msra.mxu0 %v1024
  %2813 = vmatprep.subr.bf16.mxu0 0
  %2814 = vmatpush1.bf16.msra.mxu0 %v1033
  %2815 = vmatprep.subr.bf16.mxu0 0
  %2816 = vmatpush1.bf16.msra.mxu0 %v1042
  %2817 = vmatprep.subr.bf16.mxu0 0
  %2818 = vmatpush1.bf16.msra.mxu0 %v1051
  %2819 = vmatprep.subr.bf16.mxu0 0
  %2820 = vmatpush1.bf16.msra.mxu0 %v1060
  %2821 = vmatprep.subr.bf16.mxu0 0
  %2822 = vmatpush1.bf16.msra.mxu0 %v1069
  %2823 = vmatprep.subr.bf16.mxu0 0
  %2824 = vmatpush1.bf16.msra.mxu0 %v1078
  %2825 = vmatprep.subr.bf16.mxu0 0
  %2826 = vmatpush1.bf16.msra.mxu0 %v1087
  %2827 = vmatprep.subr.bf16.mxu0 0
  %2828 = vmatpush1.bf16.msra.mxu0 %v1096
  %2829 = vmatprep.subr.bf16.mxu0 0
  %2830 = vmatpush1.bf16.msra.mxu0 %v1105
  %2831 = vmatprep.subr.bf16.mxu0 0
  %2832 = vmatpush1.bf16.msra.mxu0 %v1114
  %2833 = vmatprep.subr.bf16.mxu0 0
  %2834 = vmatpush1.bf16.msra.mxu0 %v1123
  %2835 = vmatprep.mubr.bf16.mxu0 %v2473
  %2836 = vmatmul.mubr.bf16.gmra.mrb[0].mxu0 %v2472
  %v2837 = vpop.f32.mrb[0].mxu0
  %v2838 = vadd.f32 0.0, %v2837
  %v2839 = vpop.f32.mrb[0].mxu0
  %v2840 = vpop.f32.mrb[0].mxu0
  %v2841 = vpop.f32.mrb[0].mxu0
  %2842 = vdwg.mxu0
  %2843 = vmatprep.subr.bf16.mxu0 0
  %2844 = vmatpush1.bf16.msra.mxu0 %v1132
  %2845 = vmatprep.subr.bf16.mxu0 0
  %2846 = vmatpush1.bf16.msra.mxu0 %v1141
  %2847 = vmatprep.subr.bf16.mxu0 0
  %2848 = vmatpush1.bf16.msra.mxu0 %v1150
  %2849 = vmatprep.subr.bf16.mxu0 0
  %2850 = vmatpush1.bf16.msra.mxu0 %v1159
  %2851 = vmatprep.subr.bf16.mxu0 0
  %2852 = vmatpush1.bf16.msra.mxu0 %v1168
  %2853 = vmatprep.subr.bf16.mxu0 0
  %2854 = vmatpush1.bf16.msra.mxu0 %v1177
  %2855 = vmatprep.subr.bf16.mxu0 0
  %2856 = vmatpush1.bf16.msra.mxu0 %v1186
  %2857 = vmatprep.subr.bf16.mxu0 0
  %2858 = vmatpush1.bf16.msra.mxu0 %v1195
  %2859 = vmatprep.subr.bf16.mxu0 0
  %2860 = vmatpush1.bf16.msra.mxu0 0
  %2861 = vmatprep.subr.bf16.mxu0 0
  %2862 = vmatpush1.bf16.msra.mxu0 0
  %2863 = vmatprep.subr.bf16.mxu0 0
  %2864 = vmatpush1.bf16.msra.mxu0 0
  %2865 = vmatprep.subr.bf16.mxu0 0
  %2866 = vmatpush1.bf16.msra.mxu0 0
  %2867 = vmatprep.subr.bf16.mxu0 0
  %2868 = vmatpush1.bf16.msra.mxu0 0
  %2869 = vmatprep.subr.bf16.mxu0 0
  %2870 = vmatpush1.bf16.msra.mxu0 0
  %2871 = vmatprep.subr.bf16.mxu0 0
  %2872 = vmatpush1.bf16.msra.mxu0 0
  %2873 = vmatprep.subr.bf16.mxu0 0
  %2874 = vmatpush1.bf16.msra.mxu0 0
  %2875 = vmatprep.mubr.bf16.mxu0 0
  %2876 = vmatmul.mubr.bf16.gmra.mrb[0].mxu0 %v2474
  %v2877 = vpop.f32.mrb[0].mxu0
  %v2878 = vadd.f32 %v2838, %v2877
  %v2879 = vpop.f32.mrb[0].mxu0
  %v2880 = vpop.f32.mrb[0].mxu0
  %v2881 = vpop.f32.mrb[0].mxu0
  %2882 = vdwg.mxu0
  %v2886 = vcombine.low %v2551, %v2553
  %v2888 = vunpack.c.l.s4 1983009808
  %v2889 = vunpack.c.0.s8 %v2888
  %v2890 = vlaneseq
  %v2891 = vshrl.u32 %v2890, 7
  %v2892 = vsub.s32 %v2889, %v2891
  %v2893 = vrot.slane %v2886, %v2892
  %v2895 = vunpack.c.l.s4 1983009808
  %v2896 = vunpack.c.0.s8 %v2895
  %v2897 = vlaneseq
  %v2898 = vshrl.u32 %v2897, 7
  %v2899 = vsub.s32 %v2896, %v2898
  %v2900 = vrot.slane %v2633, %v2899
  %v2901 = vcombine.low %v2893, %v2900
  %v2903 = vadd.f32 %v2449, %v2901
  %v2904 = vxor.u32 %v2903, 2147483648
  %v2905 = vmul.f32 %v2904, 1.442695
  %v2906 = vpow.pop %v2905
  %v2907 = vadd.f32 %v2906, 1.0
  %v2908 = vrcp.pop %v2907
  %v2909 = vmul.f32 1.0, %v2908
  %v2912 = vrot.slane %v2449, 6
  %v2913 = vrot.slane %v2450, 6
  %v2914 = vsel %vm1851, %v2912, %v2913
  %v2919 = vcombine.low %v2635, %v2715
  %v2921 = vunpack.c.l.s4 1983009808
  %v2922 = vunpack.c.0.s8 %v2921
  %v2923 = vlaneseq
  %v2924 = vshrl.u32 %v2923, 7
  %v2925 = vsub.s32 %v2922, %v2924
  %v2926 = vrot.slane %v2919, %v2925
  %v2928 = vunpack.c.l.s4 1983009808
  %v2929 = vunpack.c.0.s8 %v2928
  %v2930 = vlaneseq
  %v2931 = vshrl.u32 %v2930, 7
  %v2932 = vsub.s32 %v2929, %v2931
  %v2933 = vrot.slane %v2717, %v2932
  %v2934 = vcombine.low %v2926, %v2933
  %v2936 = vadd.f32 %v2914, %v2934
  %v2937 = vxor.u32 %v2936, 2147483648
  %v2938 = vmul.f32 %v2937, 1.442695
  %v2939 = vpow.pop %v2938
  %v2940 = vadd.f32 %v2939, 1.0
  %v2941 = vrcp.pop %v2940
  %v2942 = vmul.f32 1.0, %v2941
  %v2943 = vadd.f32 %v2797, %v269
  %v2944 = vadd.f32 %v2799, %v273
  %v2945 = vadd.f32 %v2878, %v277
  %v2949 = vcombine.low %v2943, %v2944
  %v2951 = vunpack.c.l.s4 1983009808
  %v2952 = vunpack.c.0.s8 %v2951
  %v2953 = vlaneseq
  %v2954 = vshrl.u32 %v2953, 7
  %v2955 = vsub.s32 %v2952, %v2954
  %v2956 = vrot.slane %v2949, %v2955
  %v2958 = vunpack.c.l.s4 1983009808
  %v2959 = vunpack.c.0.s8 %v2958
  %v2960 = vlaneseq
  %v2961 = vshrl.u32 %v2960, 7
  %v2962 = vsub.s32 %v2959, %v2961
  %v2963 = vrot.slane %v2945, %v2962
  %v2964 = vcombine.low %v2956, %v2963
  %v2966 = vmul.f32 %v2909, %v2964
  %v2968 = vrot.slane %v2450, 4
  %v2969 = vrot.slane %v2451, 4
  %v2970 = vsel %vm1908, %v2968, %v2969
  %v2972 = vadd.f32 %v2970, %v2966
  %v2973 = vtanh.pop %v2972
  %v2974 = vsub.f32 %v2445, %v2973
  %v2975 = vmul.f32 %v2942, %v2974
  %v2976 = vadd.f32 %v2973, %v2975
  %s2977 = scalar_lea.vmem %s4, 12
  %2978 = vst [vmem:[%s2977] sm:$0x3f] %v2976
  %s2979 = scalar_lea.vmem %s0, 54
  %v2980 = vld [vmem:[%s2979] sm:$0xff]
  %v2981 = vld [vmem:[%s2979 + $0x8] sm:$0xff]
  %v2982 = vld [vmem:[%s2979 + $0x10] sm:$0x3]
  %v2984 = vcombine.high %v2976, %v2976
  %v2986 = vunpack.c.l.s4 1983009808
  %v2987 = vunpack.c.0.s8 %v2986
  %v2988 = vlaneseq
  %v2989 = vshrl.u32 %v2988, 7
  %v2990 = vsub.s32 %v2987, %v2989
  %v2991 = vrot.slane %v2976, %v2990
  %v2993 = vunpack.c.l.s4 1983009808
  %v2994 = vunpack.c.0.s8 %v2993
  %v2995 = vlaneseq
  %v2996 = vshrl.u32 %v2995, 7
  %v2997 = vsub.s32 %v2994, %v2996
  %v2998 = vrot.slane %v2984, %v2997
  %v2999 = vcombine.high %v2991, %v2991
  %v3003 = vpack.c.bf16 %v2991, %v2991
  %v3004 = vpack.c.bf16 %v2999, %v2999
  %v3005 = vpack.c.bf16 %v2998, %v2998
  %3006 = vmatprep.subr.bf16.mxu0 %v981
  %3007 = vmatpush1.bf16.msra.mxu0 %v980
  %3008 = vmatprep.subr.bf16.mxu0 %v990
  %3009 = vmatpush1.bf16.msra.mxu0 %v989
  %3010 = vmatprep.subr.bf16.mxu0 %v999
  %3011 = vmatpush1.bf16.msra.mxu0 %v998
  %3012 = vmatprep.subr.bf16.mxu0 %v1008
  %3013 = vmatpush1.bf16.msra.mxu0 %v1007
  %3014 = vmatprep.subr.bf16.mxu0 %v1017
  %3015 = vmatpush1.bf16.msra.mxu0 %v1016
  %3016 = vmatprep.subr.bf16.mxu0 %v1026
  %3017 = vmatpush1.bf16.msra.mxu0 %v1025
  %3018 = vmatprep.subr.bf16.mxu0 %v1035
  %3019 = vmatpush1.bf16.msra.mxu0 %v1034
  %3020 = vmatprep.subr.bf16.mxu0 %v1044
  %3021 = vmatpush1.bf16.msra.mxu0 %v1043
  %3022 = vmatprep.subr.bf16.mxu0 %v1053
  %3023 = vmatpush1.bf16.msra.mxu0 %v1052
  %3024 = vmatprep.subr.bf16.mxu0 %v1062
  %3025 = vmatpush1.bf16.msra.mxu0 %v1061
  %3026 = vmatprep.subr.bf16.mxu0 %v1071
  %3027 = vmatpush1.bf16.msra.mxu0 %v1070
  %3028 = vmatprep.subr.bf16.mxu0 %v1080
  %3029 = vmatpush1.bf16.msra.mxu0 %v1079
  %3030 = vmatprep.subr.bf16.mxu0 %v1089
  %3031 = vmatpush1.bf16.msra.mxu0 %v1088
  %3032 = vmatprep.subr.bf16.mxu0 %v1098
  %3033 = vmatpush1.bf16.msra.mxu0 %v1097
  %3034 = vmatprep.subr.bf16.mxu0 %v1107
  %3035 = vmatpush1.bf16.msra.mxu0 %v1106
  %3036 = vmatprep.subr.bf16.mxu0 %v1116
  %3037 = vmatpush1.bf16.msra.mxu0 %v1115
  %3038 = vmatprep.mubr.bf16.mxu0 %v3004
  %3039 = vmatmul.mubr.bf16.gmra.mrb[0].mxu0 %v3003
  %v3040 = vpop.f32.mrb[0].mxu0
  %v3041 = vadd.f32 0.0, %v3040
  %v3042 = vpop.f32.mrb[0].mxu0
  %v3043 = vadd.f32 0.0, %v3042
  %v3044 = vpop.f32.mrb[0].mxu0
  %v3045 = vpop.f32.mrb[0].mxu0
  %3046 = vdwg.mxu0
  %3047 = vmatprep.subr.bf16.mxu0 %v1125
  %3048 = vmatpush1.bf16.msra.mxu0 %v1124
  %3049 = vmatprep.subr.bf16.mxu0 %v1134
  %3050 = vmatpush1.bf16.msra.mxu0 %v1133
  %3051 = vmatprep.subr.bf16.mxu0 %v1143
  %3052 = vmatpush1.bf16.msra.mxu0 %v1142
  %3053 = vmatprep.subr.bf16.mxu0 %v1152
  %3054 = vmatpush1.bf16.msra.mxu0 %v1151
  %3055 = vmatprep.subr.bf16.mxu0 %v1161
  %3056 = vmatpush1.bf16.msra.mxu0 %v1160
  %3057 = vmatprep.subr.bf16.mxu0 %v1170
  %3058 = vmatpush1.bf16.msra.mxu0 %v1169
  %3059 = vmatprep.subr.bf16.mxu0 %v1179
  %3060 = vmatpush1.bf16.msra.mxu0 %v1178
  %3061 = vmatprep.subr.bf16.mxu0 %v1188
  %3062 = vmatpush1.bf16.msra.mxu0 %v1187
  %3063 = vmatprep.subr.bf16.mxu0 0
  %3064 = vmatpush1.bf16.msra.mxu0 0
  %3065 = vmatprep.subr.bf16.mxu0 0
  %3066 = vmatpush1.bf16.msra.mxu0 0
  %3067 = vmatprep.subr.bf16.mxu0 0
  %3068 = vmatpush1.bf16.msra.mxu0 0
  %3069 = vmatprep.subr.bf16.mxu0 0
  %3070 = vmatpush1.bf16.msra.mxu0 0
  %3071 = vmatprep.subr.bf16.mxu0 0
  %3072 = vmatpush1.bf16.msra.mxu0 0
  %3073 = vmatprep.subr.bf16.mxu0 0
  %3074 = vmatpush1.bf16.msra.mxu0 0
  %3075 = vmatprep.subr.bf16.mxu0 0
  %3076 = vmatpush1.bf16.msra.mxu0 0
  %3077 = vmatprep.subr.bf16.mxu0 0
  %3078 = vmatpush1.bf16.msra.mxu0 0
  %3079 = vmatprep.mubr.bf16.mxu0 0
  %3080 = vmatmul.mubr.bf16.gmra.mrb[0].mxu0 %v3005
  %v3081 = vpop.f32.mrb[0].mxu0
  %v3082 = vadd.f32 %v3041, %v3081
  %v3083 = vpop.f32.mrb[0].mxu0
  %v3084 = vadd.f32 %v3043, %v3083
  %v3085 = vpop.f32.mrb[0].mxu0
  %v3086 = vpop.f32.mrb[0].mxu0
  %3087 = vdwg.mxu0
  %3088 = vmatprep.subr.bf16.mxu0 %v983
  %3089 = vmatpush1.bf16.msra.mxu0 %v982
  %3090 = vmatprep.subr.bf16.mxu0 %v992
  %3091 = vmatpush1.bf16.msra.mxu0 %v991
  %3092 = vmatprep.subr.bf16.mxu0 %v1001
  %3093 = vmatpush1.bf16.msra.mxu0 %v1000
  %3094 = vmatprep.subr.bf16.mxu0 %v1010
  %3095 = vmatpush1.bf16.msra.mxu0 %v1009
  %3096 = vmatprep.subr.bf16.mxu0 %v1019
  %3097 = vmatpush1.bf16.msra.mxu0 %v1018
  %3098 = vmatprep.subr.bf16.mxu0 %v1028
  %3099 = vmatpush1.bf16.msra.mxu0 %v1027
  %3100 = vmatprep.subr.bf16.mxu0 %v1037
  %3101 = vmatpush1.bf16.msra.mxu0 %v1036
  %3102 = vmatprep.subr.bf16.mxu0 %v1046
  %3103 = vmatpush1.bf16.msra.mxu0 %v1045
  %3104 = vmatprep.subr.bf16.mxu0 %v1055
  %3105 = vmatpush1.bf16.msra.mxu0 %v1054
  %3106 = vmatprep.subr.bf16.mxu0 %v1064
  %3107 = vmatpush1.bf16.msra.mxu0 %v1063
  %3108 = vmatprep.subr.bf16.mxu0 %v1073
  %3109 = vmatpush1.bf16.msra.mxu0 %v1072
  %3110 = vmatprep.subr.bf16.mxu0 %v1082
  %3111 = vmatpush1.bf16.msra.mxu0 %v1081
  %3112 = vmatprep.subr.bf16.mxu0 %v1091
  %3113 = vmatpush1.bf16.msra.mxu0 %v1090
  %3114 = vmatprep.subr.bf16.mxu0 %v1100
  %3115 = vmatpush1.bf16.msra.mxu0 %v1099
  %3116 = vmatprep.subr.bf16.mxu0 %v1109
  %3117 = vmatpush1.bf16.msra.mxu0 %v1108
  %3118 = vmatprep.subr.bf16.mxu0 %v1118
  %3119 = vmatpush1.bf16.msra.mxu0 %v1117
  %3120 = vmatprep.mubr.bf16.mxu0 %v3004
  %3121 = vmatmul.mubr.bf16.gmra.mrb[0].mxu0 %v3003
  %v3122 = vpop.f32.mrb[0].mxu0
  %v3123 = vadd.f32 0.0, %v3122
  %v3124 = vpop.f32.mrb[0].mxu0
  %v3125 = vadd.f32 0.0, %v3124
  %v3126 = vpop.f32.mrb[0].mxu0
  %v3127 = vpop.f32.mrb[0].mxu0
  %3128 = vdwg.mxu0
  %3129 = vmatprep.subr.bf16.mxu0 %v1127
  %3130 = vmatpush1.bf16.msra.mxu0 %v1126
  %3131 = vmatprep.subr.bf16.mxu0 %v1136
  %3132 = vmatpush1.bf16.msra.mxu0 %v1135
  %3133 = vmatprep.subr.bf16.mxu0 %v1145
  %3134 = vmatpush1.bf16.msra.mxu0 %v1144
  %3135 = vmatprep.subr.bf16.mxu0 %v1154
  %3136 = vmatpush1.bf16.msra.mxu0 %v1153
  %3137 = vmatprep.subr.bf16.mxu0 %v1163
  %3138 = vmatpush1.bf16.msra.mxu0 %v1162
  %3139 = vmatprep.subr.bf16.mxu0 %v1172
  %3140 = vmatpush1.bf16.msra.mxu0 %v1171
  %3141 = vmatprep.subr.bf16.mxu0 %v1181
  %3142 = vmatpush1.bf16.msra.mxu0 %v1180
  %3143 = vmatprep.subr.bf16.mxu0 %v1190
  %3144 = vmatpush1.bf16.msra.mxu0 %v1189
  %3145 = vmatprep.subr.bf16.mxu0 0
  %3146 = vmatpush1.bf16.msra.mxu0 0
  %3147 = vmatprep.subr.bf16.mxu0 0
  %3148 = vmatpush1.bf16.msra.mxu0 0
  %3149 = vmatprep.subr.bf16.mxu0 0
  %3150 = vmatpush1.bf16.msra.mxu0 0
  %3151 = vmatprep.subr.bf16.mxu0 0
  %3152 = vmatpush1.bf16.msra.mxu0 0
  %3153 = vmatprep.subr.bf16.mxu0 0
  %3154 = vmatpush1.bf16.msra.mxu0 0
  %3155 = vmatprep.subr.bf16.mxu0 0
  %3156 = vmatpush1.bf16.msra.mxu0 0
  %3157 = vmatprep.subr.bf16.mxu0 0
  %3158 = vmatpush1.bf16.msra.mxu0 0
  %3159 = vmatprep.subr.bf16.mxu0 0
  %3160 = vmatpush1.bf16.msra.mxu0 0
  %3161 = vmatprep.mubr.bf16.mxu0 0
  %3162 = vmatmul.mubr.bf16.gmra.mrb[0].mxu0 %v3005
  %v3163 = vpop.f32.mrb[0].mxu0
  %v3164 = vadd.f32 %v3123, %v3163
  %v3165 = vpop.f32.mrb[0].mxu0
  %v3166 = vadd.f32 %v3125, %v3165
  %v3167 = vpop.f32.mrb[0].mxu0
  %v3168 = vpop.f32.mrb[0].mxu0
  %3169 = vdwg.mxu0
  %3170 = vmatprep.subr.bf16.mxu0 %v985
  %3171 = vmatpush1.bf16.msra.mxu0 %v984
  %3172 = vmatprep.subr.bf16.mxu0 %v994
  %3173 = vmatpush1.bf16.msra.mxu0 %v993
  %3174 = vmatprep.subr.bf16.mxu0 %v1003
  %3175 = vmatpush1.bf16.msra.mxu0 %v1002
  %3176 = vmatprep.subr.bf16.mxu0 %v1012
  %3177 = vmatpush1.bf16.msra.mxu0 %v1011
  %3178 = vmatprep.subr.bf16.mxu0 %v1021
  %3179 = vmatpush1.bf16.msra.mxu0 %v1020
  %3180 = vmatprep.subr.bf16.mxu0 %v1030
  %3181 = vmatpush1.bf16.msra.mxu0 %v1029
  %3182 = vmatprep.subr.bf16.mxu0 %v1039
  %3183 = vmatpush1.bf16.msra.mxu0 %v1038
  %3184 = vmatprep.subr.bf16.mxu0 %v1048
  %3185 = vmatpush1.bf16.msra.mxu0 %v1047
  %3186 = vmatprep.subr.bf16.mxu0 %v1057
  %3187 = vmatpush1.bf16.msra.mxu0 %v1056
  %3188 = vmatprep.subr.bf16.mxu0 %v1066
  %3189 = vmatpush1.bf16.msra.mxu0 %v1065
  %3190 = vmatprep.subr.bf16.mxu0 %v1075
  %3191 = vmatpush1.bf16.msra.mxu0 %v1074
  %3192 = vmatprep.subr.bf16.mxu0 %v1084
  %3193 = vmatpush1.bf16.msra.mxu0 %v1083
  %3194 = vmatprep.subr.bf16.mxu0 %v1093
  %3195 = vmatpush1.bf16.msra.mxu0 %v1092
  %3196 = vmatprep.subr.bf16.mxu0 %v1102
  %3197 = vmatpush1.bf16.msra.mxu0 %v1101
  %3198 = vmatprep.subr.bf16.mxu0 %v1111
  %3199 = vmatpush1.bf16.msra.mxu0 %v1110
  %3200 = vmatprep.subr.bf16.mxu0 %v1120
  %3201 = vmatpush1.bf16.msra.mxu0 %v1119
  %3202 = vmatprep.mubr.bf16.mxu0 %v3004
  %3203 = vmatmul.mubr.bf16.gmra.mrb[0].mxu0 %v3003
  %v3204 = vpop.f32.mrb[0].mxu0
  %v3205 = vadd.f32 0.0, %v3204
  %v3206 = vpop.f32.mrb[0].mxu0
  %v3207 = vadd.f32 0.0, %v3206
  %v3208 = vpop.f32.mrb[0].mxu0
  %v3209 = vpop.f32.mrb[0].mxu0
  %3210 = vdwg.mxu0
  %3211 = vmatprep.subr.bf16.mxu0 %v1129
  %3212 = vmatpush1.bf16.msra.mxu0 %v1128
  %3213 = vmatprep.subr.bf16.mxu0 %v1138
  %3214 = vmatpush1.bf16.msra.mxu0 %v1137
  %3215 = vmatprep.subr.bf16.mxu0 %v1147
  %3216 = vmatpush1.bf16.msra.mxu0 %v1146
  %3217 = vmatprep.subr.bf16.mxu0 %v1156
  %3218 = vmatpush1.bf16.msra.mxu0 %v1155
  %3219 = vmatprep.subr.bf16.mxu0 %v1165
  %3220 = vmatpush1.bf16.msra.mxu0 %v1164
  %3221 = vmatprep.subr.bf16.mxu0 %v1174
  %3222 = vmatpush1.bf16.msra.mxu0 %v1173
  %3223 = vmatprep.subr.bf16.mxu0 %v1183
  %3224 = vmatpush1.bf16.msra.mxu0 %v1182
  %3225 = vmatprep.subr.bf16.mxu0 %v1192
  %3226 = vmatpush1.bf16.msra.mxu0 %v1191
  %3227 = vmatprep.subr.bf16.mxu0 0
  %3228 = vmatpush1.bf16.msra.mxu0 0
  %3229 = vmatprep.subr.bf16.mxu0 0
  %3230 = vmatpush1.bf16.msra.mxu0 0
  %3231 = vmatprep.subr.bf16.mxu0 0
  %3232 = vmatpush1.bf16.msra.mxu0 0
  %3233 = vmatprep.subr.bf16.mxu0 0
  %3234 = vmatpush1.bf16.msra.mxu0 0
  %3235 = vmatprep.subr.bf16.mxu0 0
  %3236 = vmatpush1.bf16.msra.mxu0 0
  %3237 = vmatprep.subr.bf16.mxu0 0
  %3238 = vmatpush1.bf16.msra.mxu0 0
  %3239 = vmatprep.subr.bf16.mxu0 0
  %3240 = vmatpush1.bf16.msra.mxu0 0
  %3241 = vmatprep.subr.bf16.mxu0 0
  %3242 = vmatpush1.bf16.msra.mxu0 0
  %3243 = vmatprep.mubr.bf16.mxu0 0
  %3244 = vmatmul.mubr.bf16.gmra.mrb[0].mxu0 %v3005
  %v3245 = vpop.f32.mrb[0].mxu0
  %v3246 = vadd.f32 %v3205, %v3245
  %v3247 = vpop.f32.mrb[0].mxu0
  %v3248 = vadd.f32 %v3207, %v3247
  %v3249 = vpop.f32.mrb[0].mxu0
  %v3250 = vpop.f32.mrb[0].mxu0
  %3251 = vdwg.mxu0
  %3252 = vmatprep.subr.bf16.mxu0 %v987
  %3253 = vmatpush1.bf16.msra.mxu0 %v986
  %3254 = vmatprep.subr.bf16.mxu0 %v996
  %3255 = vmatpush1.bf16.msra.mxu0 %v995
  %3256 = vmatprep.subr.bf16.mxu0 %v1005
  %3257 = vmatpush1.bf16.msra.mxu0 %v1004
  %3258 = vmatprep.subr.bf16.mxu0 %v1014
  %3259 = vmatpush1.bf16.msra.mxu0 %v1013
  %3260 = vmatprep.subr.bf16.mxu0 %v1023
  %3261 = vmatpush1.bf16.msra.mxu0 %v1022
  %3262 = vmatprep.subr.bf16.mxu0 %v1032
  %3263 = vmatpush1.bf16.msra.mxu0 %v1031
  %3264 = vmatprep.subr.bf16.mxu0 %v1041
  %3265 = vmatpush1.bf16.msra.mxu0 %v1040
  %3266 = vmatprep.subr.bf16.mxu0 %v1050
  %3267 = vmatpush1.bf16.msra.mxu0 %v1049
  %3268 = vmatprep.subr.bf16.mxu0 %v1059
  %3269 = vmatpush1.bf16.msra.mxu0 %v1058
  %3270 = vmatprep.subr.bf16.mxu0 %v1068
  %3271 = vmatpush1.bf16.msra.mxu0 %v1067
  %3272 = vmatprep.subr.bf16.mxu0 %v1077
  %3273 = vmatpush1.bf16.msra.mxu0 %v1076
  %3274 = vmatprep.subr.bf16.mxu0 %v1086
  %3275 = vmatpush1.bf16.msra.mxu0 %v1085
  %3276 = vmatprep.subr.bf16.mxu0 %v1095
  %3277 = vmatpush1.bf16.msra.mxu0 %v1094
  %3278 = vmatprep.subr.bf16.mxu0 %v1104
  %3279 = vmatpush1.bf16.msra.mxu0 %v1103
  %3280 = vmatprep.subr.bf16.mxu0 %v1113
  %3281 = vmatpush1.bf16.msra.mxu0 %v1112
  %3282 = vmatprep.subr.bf16.mxu0 %v1122
  %3283 = vmatpush1.bf16.msra.mxu0 %v1121
  %3284 = vmatprep.mubr.bf16.mxu0 %v3004
  %3285 = vmatmul.mubr.bf16.gmra.mrb[0].mxu0 %v3003
  %v3286 = vpop.f32.mrb[0].mxu0
  %v3287 = vadd.f32 0.0, %v3286
  %v3288 = vpop.f32.mrb[0].mxu0
  %v3289 = vadd.f32 0.0, %v3288
  %v3290 = vpop.f32.mrb[0].mxu0
  %v3291 = vpop.f32.mrb[0].mxu0
  %3292 = vdwg.mxu0
  %3293 = vmatprep.subr.bf16.mxu0 %v1131
  %3294 = vmatpush1.bf16.msra.mxu0 %v1130
  %3295 = vmatprep.subr.bf16.mxu0 %v1140
  %3296 = vmatpush1.bf16.msra.mxu0 %v1139
  %3297 = vmatprep.subr.bf16.mxu0 %v1149
  %3298 = vmatpush1.bf16.msra.mxu0 %v1148
  %3299 = vmatprep.subr.bf16.mxu0 %v1158
  %3300 = vmatpush1.bf16.msra.mxu0 %v1157
  %3301 = vmatprep.subr.bf16.mxu0 %v1167
  %3302 = vmatpush1.bf16.msra.mxu0 %v1166
  %3303 = vmatprep.subr.bf16.mxu0 %v1176
  %3304 = vmatpush1.bf16.msra.mxu0 %v1175
  %3305 = vmatprep.subr.bf16.mxu0 %v1185
  %3306 = vmatpush1.bf16.msra.mxu0 %v1184
  %3307 = vmatprep.subr.bf16.mxu0 %v1194
  %3308 = vmatpush1.bf16.msra.mxu0 %v1193
  %3309 = vmatprep.subr.bf16.mxu0 0
  %3310 = vmatpush1.bf16.msra.mxu0 0
  %3311 = vmatprep.subr.bf16.mxu0 0
  %3312 = vmatpush1.bf16.msra.mxu0 0
  %3313 = vmatprep.subr.bf16.mxu0 0
  %3314 = vmatpush1.bf16.msra.mxu0 0
  %3315 = vmatprep.subr.bf16.mxu0 0
  %3316 = vmatpush1.bf16.msra.mxu0 0
  %3317 = vmatprep.subr.bf16.mxu0 0
  %3318 = vmatpush1.bf16.msra.mxu0 0
  %3319 = vmatprep.subr.bf16.mxu0 0
  %3320 = vmatpush1.bf16.msra.mxu0 0
  %3321 = vmatprep.subr.bf16.mxu0 0
  %3322 = vmatpush1.bf16.msra.mxu0 0
  %3323 = vmatprep.subr.bf16.mxu0 0
  %3324 = vmatpush1.bf16.msra.mxu0 0
  %3325 = vmatprep.mubr.bf16.mxu0 0
  %3326 = vmatmul.mubr.bf16.gmra.mrb[0].mxu0 %v3005
  %v3327 = vpop.f32.mrb[0].mxu0
  %v3328 = vadd.f32 %v3287, %v3327
  %v3329 = vpop.f32.mrb[0].mxu0
  %v3330 = vadd.f32 %v3289, %v3329
  %v3331 = vpop.f32.mrb[0].mxu0
  %v3332 = vpop.f32.mrb[0].mxu0
  %3333 = vdwg.mxu0
  %3334 = vmatprep.subr.bf16.mxu0 0
  %3335 = vmatpush1.bf16.msra.mxu0 %v988
  %3336 = vmatprep.subr.bf16.mxu0 0
  %3337 = vmatpush1.bf16.msra.mxu0 %v997
  %3338 = vmatprep.subr.bf16.mxu0 0
  %3339 = vmatpush1.bf16.msra.mxu0 %v1006
  %3340 = vmatprep.subr.bf16.mxu0 0
  %3341 = vmatpush1.bf16.msra.mxu0 %v1015
  %3342 = vmatprep.subr.bf16.mxu0 0
  %3343 = vmatpush1.bf16.msra.mxu0 %v1024
  %3344 = vmatprep.subr.bf16.mxu0 0
  %3345 = vmatpush1.bf16.msra.mxu0 %v1033
  %3346 = vmatprep.subr.bf16.mxu0 0
  %3347 = vmatpush1.bf16.msra.mxu0 %v1042
  %3348 = vmatprep.subr.bf16.mxu0 0
  %3349 = vmatpush1.bf16.msra.mxu0 %v1051
  %3350 = vmatprep.subr.bf16.mxu0 0
  %3351 = vmatpush1.bf16.msra.mxu0 %v1060
  %3352 = vmatprep.subr.bf16.mxu0 0
  %3353 = vmatpush1.bf16.msra.mxu0 %v1069
  %3354 = vmatprep.subr.bf16.mxu0 0
  %3355 = vmatpush1.bf16.msra.mxu0 %v1078
  %3356 = vmatprep.subr.bf16.mxu0 0
  %3357 = vmatpush1.bf16.msra.mxu0 %v1087
  %3358 = vmatprep.subr.bf16.mxu0 0
  %3359 = vmatpush1.bf16.msra.mxu0 %v1096
  %3360 = vmatprep.subr.bf16.mxu0 0
  %3361 = vmatpush1.bf16.msra.mxu0 %v1105
  %3362 = vmatprep.subr.bf16.mxu0 0
  %3363 = vmatpush1.bf16.msra.mxu0 %v1114
  %3364 = vmatprep.subr.bf16.mxu0 0
  %3365 = vmatpush1.bf16.msra.mxu0 %v1123
  %3366 = vmatprep.mubr.bf16.mxu0 %v3004
  %3367 = vmatmul.mubr.bf16.gmra.mrb[0].mxu0 %v3003
  %v3368 = vpop.f32.mrb[0].mxu0
  %v3369 = vadd.f32 0.0, %v3368
  %v3370 = vpop.f32.mrb[0].mxu0
  %v3371 = vpop.f32.mrb[0].mxu0
  %v3372 = vpop.f32.mrb[0].mxu0
  %3373 = vdwg.mxu0
  %3374 = vmatprep.subr.bf16.mxu0 0
  %3375 = vmatpush1.bf16.msra.mxu0 %v1132
  %3376 = vmatprep.subr.bf16.mxu0 0
  %3377 = vmatpush1.bf16.msra.mxu0 %v1141
  %3378 = vmatprep.subr.bf16.mxu0 0
  %3379 = vmatpush1.bf16.msra.mxu0 %v1150
  %3380 = vmatprep.subr.bf16.mxu0 0
  %3381 = vmatpush1.bf16.msra.mxu0 %v1159
  %3382 = vmatprep.subr.bf16.mxu0 0
  %3383 = vmatpush1.bf16.msra.mxu0 %v1168
  %3384 = vmatprep.subr.bf16.mxu0 0
  %3385 = vmatpush1.bf16.msra.mxu0 %v1177
  %3386 = vmatprep.subr.bf16.mxu0 0
  %3387 = vmatpush1.bf16.msra.mxu0 %v1186
  %3388 = vmatprep.subr.bf16.mxu0 0
  %3389 = vmatpush1.bf16.msra.mxu0 %v1195
  %3390 = vmatprep.subr.bf16.mxu0 0
  %3391 = vmatpush1.bf16.msra.mxu0 0
  %3392 = vmatprep.subr.bf16.mxu0 0
  %3393 = vmatpush1.bf16.msra.mxu0 0
  %3394 = vmatprep.subr.bf16.mxu0 0
  %3395 = vmatpush1.bf16.msra.mxu0 0
  %3396 = vmatprep.subr.bf16.mxu0 0
  %3397 = vmatpush1.bf16.msra.mxu0 0
  %3398 = vmatprep.subr.bf16.mxu0 0
  %3399 = vmatpush1.bf16.msra.mxu0 0
  %3400 = vmatprep.subr.bf16.mxu0 0
  %3401 = vmatpush1.bf16.msra.mxu0 0
  %3402 = vmatprep.subr.bf16.mxu0 0
  %3403 = vmatpush1.bf16.msra.mxu0 0
  %3404 = vmatprep.subr.bf16.mxu0 0
  %3405 = vmatpush1.bf16.msra.mxu0 0
  %3406 = vmatprep.mubr.bf16.mxu0 0
  %3407 = vmatmul.mubr.bf16.gmra.mrb[0].mxu0 %v3005
  %v3408 = vpop.f32.mrb[0].mxu0
  %v3409 = vadd.f32 %v3369, %v3408
  %v3410 = vpop.f32.mrb[0].mxu0
  %v3411 = vpop.f32.mrb[0].mxu0
  %v3412 = vpop.f32.mrb[0].mxu0
  %3413 = vdwg.mxu0
  %v3417 = vcombine.low %v3082, %v3084
  %v3419 = vunpack.c.l.s4 1983009808
  %v3420 = vunpack.c.0.s8 %v3419
  %v3421 = vlaneseq
  %v3422 = vshrl.u32 %v3421, 7
  %v3423 = vsub.s32 %v3420, %v3422
  %v3424 = vrot.slane %v3417, %v3423
  %v3426 = vunpack.c.l.s4 1983009808
  %v3427 = vunpack.c.0.s8 %v3426
  %v3428 = vlaneseq
  %v3429 = vshrl.u32 %v3428, 7
  %v3430 = vsub.s32 %v3427, %v3429
  %v3431 = vrot.slane %v3164, %v3430
  %v3432 = vcombine.low %v3424, %v3431
  %v3434 = vadd.f32 %v2980, %v3432
  %v3435 = vxor.u32 %v3434, 2147483648
  %v3436 = vmul.f32 %v3435, 1.442695
  %v3437 = vpow.pop %v3436
  %v3438 = vadd.f32 %v3437, 1.0
  %v3439 = vrcp.pop %v3438
  %v3440 = vmul.f32 1.0, %v3439
  %v3443 = vrot.slane %v2980, 6
  %v3444 = vrot.slane %v2981, 6
  %v3445 = vsel %vm1851, %v3443, %v3444
  %v3450 = vcombine.low %v3166, %v3246
  %v3452 = vunpack.c.l.s4 1983009808
  %v3453 = vunpack.c.0.s8 %v3452
  %v3454 = vlaneseq
  %v3455 = vshrl.u32 %v3454, 7
  %v3456 = vsub.s32 %v3453, %v3455
  %v3457 = vrot.slane %v3450, %v3456
  %v3459 = vunpack.c.l.s4 1983009808
  %v3460 = vunpack.c.0.s8 %v3459
  %v3461 = vlaneseq
  %v3462 = vshrl.u32 %v3461, 7
  %v3463 = vsub.s32 %v3460, %v3462
  %v3464 = vrot.slane %v3248, %v3463
  %v3465 = vcombine.low %v3457, %v3464
  %v3467 = vadd.f32 %v3445, %v3465
  %v3468 = vxor.u32 %v3467, 2147483648
  %v3469 = vmul.f32 %v3468, 1.442695
  %v3470 = vpow.pop %v3469
  %v3471 = vadd.f32 %v3470, 1.0
  %v3472 = vrcp.pop %v3471
  %v3473 = vmul.f32 1.0, %v3472
  %v3474 = vadd.f32 %v3328, %v269
  %v3475 = vadd.f32 %v3330, %v273
  %v3476 = vadd.f32 %v3409, %v277
  %v3480 = vcombine.low %v3474, %v3475
  %v3482 = vunpack.c.l.s4 1983009808
  %v3483 = vunpack.c.0.s8 %v3482
  %v3484 = vlaneseq
  %v3485 = vshrl.u32 %v3484, 7
  %v3486 = vsub.s32 %v3483, %v3485
  %v3487 = vrot.slane %v3480, %v3486
  %v3489 = vunpack.c.l.s4 1983009808
  %v3490 = vunpack.c.0.s8 %v3489
  %v3491 = vlaneseq
  %v3492 = vshrl.u32 %v3491, 7
  %v3493 = vsub.s32 %v3490, %v3492
  %v3494 = vrot.slane %v3476, %v3493
  %v3495 = vcombine.low %v3487, %v3494
  %v3497 = vmul.f32 %v3440, %v3495
  %v3499 = vrot.slane %v2981, 4
  %v3500 = vrot.slane %v2982, 4
  %v3501 = vsel %vm1908, %v3499, %v3500
  %v3503 = vadd.f32 %v3501, %v3497
  %v3504 = vtanh.pop %v3503
  %v3505 = vsub.f32 %v2976, %v3504
  %v3506 = vmul.f32 %v3473, %v3505
  %v3507 = vadd.f32 %v3504, %v3506
  %s3508 = scalar_lea.vmem %s4, 18
  %3509 = vst [vmem:[%s3508] sm:$0x3f] %v3507
  %s3510 = scalar_lea.vmem %s0, 72
  %v3511 = vld [vmem:[%s3510] sm:$0xff]
  %v3512 = vld [vmem:[%s3510 + $0x8] sm:$0xff]
  %v3513 = vld [vmem:[%s3510 + $0x10] sm:$0x3]
  %v3515 = vcombine.high %v3507, %v3507
  %v3517 = vunpack.c.l.s4 1983009808
  %v3518 = vunpack.c.0.s8 %v3517
  %v3519 = vlaneseq
  %v3520 = vshrl.u32 %v3519, 7
  %v3521 = vsub.s32 %v3518, %v3520
  %v3522 = vrot.slane %v3507, %v3521
  %v3524 = vunpack.c.l.s4 1983009808
  %v3525 = vunpack.c.0.s8 %v3524
  %v3526 = vlaneseq
  %v3527 = vshrl.u32 %v3526, 7
  %v3528 = vsub.s32 %v3525, %v3527
  %v3529 = vrot.slane %v3515, %v3528
  %v3530 = vcombine.high %v3522, %v3522
  %v3534 = vpack.c.bf16 %v3522, %v3522
  %v3535 = vpack.c.bf16 %v3530, %v3530
  %v3536 = vpack.c.bf16 %v3529, %v3529
  %3537 = vmatprep.subr.bf16.mxu0 %v981
  %3538 = vmatpush1.bf16.msra.mxu0 %v980
  %3539 = vmatprep.subr.bf16.mxu0 %v990
  %3540 = vmatpush1.bf16.msra.mxu0 %v989
  %3541 = vmatprep.subr.bf16.mxu0 %v999
  %3542 = vmatpush1.bf16.msra.mxu0 %v998
  %3543 = vmatprep.subr.bf16.mxu0 %v1008
  %3544 = vmatpush1.bf16.msra.mxu0 %v1007
  %3545 = vmatprep.subr.bf16.mxu0 %v1017
  %3546 = vmatpush1.bf16.msra.mxu0 %v1016
  %3547 = vmatprep.subr.bf16.mxu0 %v1026
  %3548 = vmatpush1.bf16.msra.mxu0 %v1025
  %3549 = vmatprep.subr.bf16.mxu0 %v1035
  %3550 = vmatpush1.bf16.msra.mxu0 %v1034
  %3551 = vmatprep.subr.bf16.mxu0 %v1044
  %3552 = vmatpush1.bf16.msra.mxu0 %v1043
  %3553 = vmatprep.subr.bf16.mxu0 %v1053
  %3554 = vmatpush1.bf16.msra.mxu0 %v1052
  %3555 = vmatprep.subr.bf16.mxu0 %v1062
  %3556 = vmatpush1.bf16.msra.mxu0 %v1061
  %3557 = vmatprep.subr.bf16.mxu0 %v1071
  %3558 = vmatpush1.bf16.msra.mxu0 %v1070
  %3559 = vmatprep.subr.bf16.mxu0 %v1080
  %3560 = vmatpush1.bf16.msra.mxu0 %v1079
  %3561 = vmatprep.subr.bf16.mxu0 %v1089
  %3562 = vmatpush1.bf16.msra.mxu0 %v1088
  %3563 = vmatprep.subr.bf16.mxu0 %v1098
  %3564 = vmatpush1.bf16.msra.mxu0 %v1097
  %3565 = vmatprep.subr.bf16.mxu0 %v1107
  %3566 = vmatpush1.bf16.msra.mxu0 %v1106
  %3567 = vmatprep.subr.bf16.mxu0 %v1116
  %3568 = vmatpush1.bf16.msra.mxu0 %v1115
  %3569 = vmatprep.mubr.bf16.mxu0 %v3535
  %3570 = vmatmul.mubr.bf16.gmra.mrb[0].mxu0 %v3534
  %v3571 = vpop.f32.mrb[0].mxu0
  %v3572 = vadd.f32 0.0, %v3571
  %v3573 = vpop.f32.mrb[0].mxu0
  %v3574 = vadd.f32 0.0, %v3573
  %v3575 = vpop.f32.mrb[0].mxu0
  %v3576 = vpop.f32.mrb[0].mxu0
  %3577 = vdwg.mxu0
  %3578 = vmatprep.subr.bf16.mxu0 %v1125
  %3579 = vmatpush1.bf16.msra.mxu0 %v1124
  %3580 = vmatprep.subr.bf16.mxu0 %v1134
  %3581 = vmatpush1.bf16.msra.mxu0 %v1133
  %3582 = vmatprep.subr.bf16.mxu0 %v1143
  %3583 = vmatpush1.bf16.msra.mxu0 %v1142
  %3584 = vmatprep.subr.bf16.mxu0 %v1152
  %3585 = vmatpush1.bf16.msra.mxu0 %v1151
  %3586 = vmatprep.subr.bf16.mxu0 %v1161
  %3587 = vmatpush1.bf16.msra.mxu0 %v1160
  %3588 = vmatprep.subr.bf16.mxu0 %v1170
  %3589 = vmatpush1.bf16.msra.mxu0 %v1169
  %3590 = vmatprep.subr.bf16.mxu0 %v1179
  %3591 = vmatpush1.bf16.msra.mxu0 %v1178
  %3592 = vmatprep.subr.bf16.mxu0 %v1188
  %3593 = vmatpush1.bf16.msra.mxu0 %v1187
  %3594 = vmatprep.subr.bf16.mxu0 0
  %3595 = vmatpush1.bf16.msra.mxu0 0
  %3596 = vmatprep.subr.bf16.mxu0 0
  %3597 = vmatpush1.bf16.msra.mxu0 0
  %3598 = vmatprep.subr.bf16.mxu0 0
  %3599 = vmatpush1.bf16.msra.mxu0 0
  %3600 = vmatprep.subr.bf16.mxu0 0
  %3601 = vmatpush1.bf16.msra.mxu0 0
  %3602 = vmatprep.subr.bf16.mxu0 0
  %3603 = vmatpush1.bf16.msra.mxu0 0
  %3604 = vmatprep.subr.bf16.mxu0 0
  %3605 = vmatpush1.bf16.msra.mxu0 0
  %3606 = vmatprep.subr.bf16.mxu0 0
  %3607 = vmatpush1.bf16.msra.mxu0 0
  %3608 = vmatprep.subr.bf16.mxu0 0
  %3609 = vmatpush1.bf16.msra.mxu0 0
  %3610 = vmatprep.mubr.bf16.mxu0 0
  %3611 = vmatmul.mubr.bf16.gmra.mrb[0].mxu0 %v3536
  %v3612 = vpop.f32.mrb[0].mxu0
  %v3613 = vadd.f32 %v3572, %v3612
  %v3614 = vpop.f32.mrb[0].mxu0
  %v3615 = vadd.f32 %v3574, %v3614
  %v3616 = vpop.f32.mrb[0].mxu0
  %v3617 = vpop.f32.mrb[0].mxu0
  %3618 = vdwg.mxu0
  %3619 = vmatprep.subr.bf16.mxu0 %v983
  %3620 = vmatpush1.bf16.msra.mxu0 %v982
  %3621 = vmatprep.subr.bf16.mxu0 %v992
  %3622 = vmatpush1.bf16.msra.mxu0 %v991
  %3623 = vmatprep.subr.bf16.mxu0 %v1001
  %3624 = vmatpush1.bf16.msra.mxu0 %v1000
  %3625 = vmatprep.subr.bf16.mxu0 %v1010
  %3626 = vmatpush1.bf16.msra.mxu0 %v1009
  %3627 = vmatprep.subr.bf16.mxu0 %v1019
  %3628 = vmatpush1.bf16.msra.mxu0 %v1018
  %3629 = vmatprep.subr.bf16.mxu0 %v1028
  %3630 = vmatpush1.bf16.msra.mxu0 %v1027
  %3631 = vmatprep.subr.bf16.mxu0 %v1037
  %3632 = vmatpush1.bf16.msra.mxu0 %v1036
  %3633 = vmatprep.subr.bf16.mxu0 %v1046
  %3634 = vmatpush1.bf16.msra.mxu0 %v1045
  %3635 = vmatprep.subr.bf16.mxu0 %v1055
  %3636 = vmatpush1.bf16.msra.mxu0 %v1054
  %3637 = vmatprep.subr.bf16.mxu0 %v1064
  %3638 = vmatpush1.bf16.msra.mxu0 %v1063
  %3639 = vmatprep.subr.bf16.mxu0 %v1073
  %3640 = vmatpush1.bf16.msra.mxu0 %v1072
  %3641 = vmatprep.subr.bf16.mxu0 %v1082
  %3642 = vmatpush1.bf16.msra.mxu0 %v1081
  %3643 = vmatprep.subr.bf16.mxu0 %v1091
  %3644 = vmatpush1.bf16.msra.mxu0 %v1090
  %3645 = vmatprep.subr.bf16.mxu0 %v1100
  %3646 = vmatpush1.bf16.msra.mxu0 %v1099
  %3647 = vmatprep.subr.bf16.mxu0 %v1109
  %3648 = vmatpush1.bf16.msra.mxu0 %v1108
  %3649 = vmatprep.subr.bf16.mxu0 %v1118
  %3650 = vmatpush1.bf16.msra.mxu0 %v1117
  %3651 = vmatprep.mubr.bf16.mxu0 %v3535
  %3652 = vmatmul.mubr.bf16.gmra.mrb[0].mxu0 %v3534
  %v3653 = vpop.f32.mrb[0].mxu0
  %v3654 = vadd.f32 0.0, %v3653
  %v3655 = vpop.f32.mrb[0].mxu0
  %v3656 = vadd.f32 0.0, %v3655
  %v3657 = vpop.f32.mrb[0].mxu0
  %v3658 = vpop.f32.mrb[0].mxu0
  %3659 = vdwg.mxu0
  %3660 = vmatprep.subr.bf16.mxu0 %v1127
  %3661 = vmatpush1.bf16.msra.mxu0 %v1126
  %3662 = vmatprep.subr.bf16.mxu0 %v1136
  %3663 = vmatpush1.bf16.msra.mxu0 %v1135
  %3664 = vmatprep.subr.bf16.mxu0 %v1145
  %3665 = vmatpush1.bf16.msra.mxu0 %v1144
  %3666 = vmatprep.subr.bf16.mxu0 %v1154
  %3667 = vmatpush1.bf16.msra.mxu0 %v1153
  %3668 = vmatprep.subr.bf16.mxu0 %v1163
  %3669 = vmatpush1.bf16.msra.mxu0 %v1162
  %3670 = vmatprep.subr.bf16.mxu0 %v1172
  %3671 = vmatpush1.bf16.msra.mxu0 %v1171
  %3672 = vmatprep.subr.bf16.mxu0 %v1181
  %3673 = vmatpush1.bf16.msra.mxu0 %v1180
  %3674 = vmatprep.subr.bf16.mxu0 %v1190
  %3675 = vmatpush1.bf16.msra.mxu0 %v1189
  %3676 = vmatprep.subr.bf16.mxu0 0
  %3677 = vmatpush1.bf16.msra.mxu0 0
  %3678 = vmatprep.subr.bf16.mxu0 0
  %3679 = vmatpush1.bf16.msra.mxu0 0
  %3680 = vmatprep.subr.bf16.mxu0 0
  %3681 = vmatpush1.bf16.msra.mxu0 0
  %3682 = vmatprep.subr.bf16.mxu0 0
  %3683 = vmatpush1.bf16.msra.mxu0 0
  %3684 = vmatprep.subr.bf16.mxu0 0
  %3685 = vmatpush1.bf16.msra.mxu0 0
  %3686 = vmatprep.subr.bf16.mxu0 0
  %3687 = vmatpush1.bf16.msra.mxu0 0
  %3688 = vmatprep.subr.bf16.mxu0 0
  %3689 = vmatpush1.bf16.msra.mxu0 0
  %3690 = vmatprep.subr.bf16.mxu0 0
  %3691 = vmatpush1.bf16.msra.mxu0 0
  %3692 = vmatprep.mubr.bf16.mxu0 0
  %3693 = vmatmul.mubr.bf16.gmra.mrb[0].mxu0 %v3536
  %v3694 = vpop.f32.mrb[0].mxu0
  %v3695 = vadd.f32 %v3654, %v3694
  %v3696 = vpop.f32.mrb[0].mxu0
  %v3697 = vadd.f32 %v3656, %v3696
  %v3698 = vpop.f32.mrb[0].mxu0
  %v3699 = vpop.f32.mrb[0].mxu0
  %3700 = vdwg.mxu0
  %3701 = vmatprep.subr.bf16.mxu0 %v985
  %3702 = vmatpush1.bf16.msra.mxu0 %v984
  %3703 = vmatprep.subr.bf16.mxu0 %v994
  %3704 = vmatpush1.bf16.msra.mxu0 %v993
  %3705 = vmatprep.subr.bf16.mxu0 %v1003
  %3706 = vmatpush1.bf16.msra.mxu0 %v1002
  %3707 = vmatprep.subr.bf16.mxu0 %v1012
  %3708 = vmatpush1.bf16.msra.mxu0 %v1011
  %3709 = vmatprep.subr.bf16.mxu0 %v1021
  %3710 = vmatpush1.bf16.msra.mxu0 %v1020
  %3711 = vmatprep.subr.bf16.mxu0 %v1030
  %3712 = vmatpush1.bf16.msra.mxu0 %v1029
  %3713 = vmatprep.subr.bf16.mxu0 %v1039
  %3714 = vmatpush1.bf16.msra.mxu0 %v1038
  %3715 = vmatprep.subr.bf16.mxu0 %v1048
  %3716 = vmatpush1.bf16.msra.mxu0 %v1047
  %3717 = vmatprep.subr.bf16.mxu0 %v1057
  %3718 = vmatpush1.bf16.msra.mxu0 %v1056
  %3719 = vmatprep.subr.bf16.mxu0 %v1066
  %3720 = vmatpush1.bf16.msra.mxu0 %v1065
  %3721 = vmatprep.subr.bf16.mxu0 %v1075
  %3722 = vmatpush1.bf16.msra.mxu0 %v1074
  %3723 = vmatprep.subr.bf16.mxu0 %v1084
  %3724 = vmatpush1.bf16.msra.mxu0 %v1083
  %3725 = vmatprep.subr.bf16.mxu0 %v1093
  %3726 = vmatpush1.bf16.msra.mxu0 %v1092
  %3727 = vmatprep.subr.bf16.mxu0 %v1102
  %3728 = vmatpush1.bf16.msra.mxu0 %v1101
  %3729 = vmatprep.subr.bf16.mxu0 %v1111
  %3730 = vmatpush1.bf16.msra.mxu0 %v1110
  %3731 = vmatprep.subr.bf16.mxu0 %v1120
  %3732 = vmatpush1.bf16.msra.mxu0 %v1119
  %3733 = vmatprep.mubr.bf16.mxu0 %v3535
  %3734 = vmatmul.mubr.bf16.gmra.mrb[0].mxu0 %v3534
  %v3735 = vpop.f32.mrb[0].mxu0
  %v3736 = vadd.f32 0.0, %v3735
  %v3737 = vpop.f32.mrb[0].mxu0
  %v3738 = vadd.f32 0.0, %v3737
  %v3739 = vpop.f32.mrb[0].mxu0
  %v3740 = vpop.f32.mrb[0].mxu0
  %3741 = vdwg.mxu0
  %3742 = vmatprep.subr.bf16.mxu0 %v1129
  %3743 = vmatpush1.bf16.msra.mxu0 %v1128
  %3744 = vmatprep.subr.bf16.mxu0 %v1138
  %3745 = vmatpush1.bf16.msra.mxu0 %v1137
  %3746 = vmatprep.subr.bf16.mxu0 %v1147
  %3747 = vmatpush1.bf16.msra.mxu0 %v1146
  %3748 = vmatprep.subr.bf16.mxu0 %v1156
  %3749 = vmatpush1.bf16.msra.mxu0 %v1155
  %3750 = vmatprep.subr.bf16.mxu0 %v1165
  %3751 = vmatpush1.bf16.msra.mxu0 %v1164
  %3752 = vmatprep.subr.bf16.mxu0 %v1174
  %3753 = vmatpush1.bf16.msra.mxu0 %v1173
  %3754 = vmatprep.subr.bf16.mxu0 %v1183
  %3755 = vmatpush1.bf16.msra.mxu0 %v1182
  %3756 = vmatprep.subr.bf16.mxu0 %v1192
  %3757 = vmatpush1.bf16.msra.mxu0 %v1191
  %3758 = vmatprep.subr.bf16.mxu0 0
  %3759 = vmatpush1.bf16.msra.mxu0 0
  %3760 = vmatprep.subr.bf16.mxu0 0
  %3761 = vmatpush1.bf16.msra.mxu0 0
  %3762 = vmatprep.subr.bf16.mxu0 0
  %3763 = vmatpush1.bf16.msra.mxu0 0
  %3764 = vmatprep.subr.bf16.mxu0 0
  %3765 = vmatpush1.bf16.msra.mxu0 0
  %3766 = vmatprep.subr.bf16.mxu0 0
  %3767 = vmatpush1.bf16.msra.mxu0 0
  %3768 = vmatprep.subr.bf16.mxu0 0
  %3769 = vmatpush1.bf16.msra.mxu0 0
  %3770 = vmatprep.subr.bf16.mxu0 0
  %3771 = vmatpush1.bf16.msra.mxu0 0
  %3772 = vmatprep.subr.bf16.mxu0 0
  %3773 = vmatpush1.bf16.msra.mxu0 0
  %3774 = vmatprep.mubr.bf16.mxu0 0
  %3775 = vmatmul.mubr.bf16.gmra.mrb[0].mxu0 %v3536
  %v3776 = vpop.f32.mrb[0].mxu0
  %v3777 = vadd.f32 %v3736, %v3776
  %v3778 = vpop.f32.mrb[0].mxu0
  %v3779 = vadd.f32 %v3738, %v3778
  %v3780 = vpop.f32.mrb[0].mxu0
  %v3781 = vpop.f32.mrb[0].mxu0
  %3782 = vdwg.mxu0
  %3783 = vmatprep.subr.bf16.mxu0 %v987
  %3784 = vmatpush1.bf16.msra.mxu0 %v986
  %3785 = vmatprep.subr.bf16.mxu0 %v996
  %3786 = vmatpush1.bf16.msra.mxu0 %v995
  %3787 = vmatprep.subr.bf16.mxu0 %v1005
  %3788 = vmatpush1.bf16.msra.mxu0 %v1004
  %3789 = vmatprep.subr.bf16.mxu0 %v1014
  %3790 = vmatpush1.bf16.msra.mxu0 %v1013
  %3791 = vmatprep.subr.bf16.mxu0 %v1023
  %3792 = vmatpush1.bf16.msra.mxu0 %v1022
  %3793 = vmatprep.subr.bf16.mxu0 %v1032
  %3794 = vmatpush1.bf16.msra.mxu0 %v1031
  %3795 = vmatprep.subr.bf16.mxu0 %v1041
  %3796 = vmatpush1.bf16.msra.mxu0 %v1040
  %3797 = vmatprep.subr.bf16.mxu0 %v1050
  %3798 = vmatpush1.bf16.msra.mxu0 %v1049
  %3799 = vmatprep.subr.bf16.mxu0 %v1059
  %3800 = vmatpush1.bf16.msra.mxu0 %v1058
  %3801 = vmatprep.subr.bf16.mxu0 %v1068
  %3802 = vmatpush1.bf16.msra.mxu0 %v1067
  %3803 = vmatprep.subr.bf16.mxu0 %v1077
  %3804 = vmatpush1.bf16.msra.mxu0 %v1076
  %3805 = vmatprep.subr.bf16.mxu0 %v1086
  %3806 = vmatpush1.bf16.msra.mxu0 %v1085
  %3807 = vmatprep.subr.bf16.mxu0 %v1095
  %3808 = vmatpush1.bf16.msra.mxu0 %v1094
  %3809 = vmatprep.subr.bf16.mxu0 %v1104
  %3810 = vmatpush1.bf16.msra.mxu0 %v1103
  %3811 = vmatprep.subr.bf16.mxu0 %v1113
  %3812 = vmatpush1.bf16.msra.mxu0 %v1112
  %3813 = vmatprep.subr.bf16.mxu0 %v1122
  %3814 = vmatpush1.bf16.msra.mxu0 %v1121
  %3815 = vmatprep.mubr.bf16.mxu0 %v3535
  %3816 = vmatmul.mubr.bf16.gmra.mrb[0].mxu0 %v3534
  %v3817 = vpop.f32.mrb[0].mxu0
  %v3818 = vadd.f32 0.0, %v3817
  %v3819 = vpop.f32.mrb[0].mxu0
  %v3820 = vadd.f32 0.0, %v3819
  %v3821 = vpop.f32.mrb[0].mxu0
  %v3822 = vpop.f32.mrb[0].mxu0
  %3823 = vdwg.mxu0
  %3824 = vmatprep.subr.bf16.mxu0 %v1131
  %3825 = vmatpush1.bf16.msra.mxu0 %v1130
  %3826 = vmatprep.subr.bf16.mxu0 %v1140
  %3827 = vmatpush1.bf16.msra.mxu0 %v1139
  %3828 = vmatprep.subr.bf16.mxu0 %v1149
  %3829 = vmatpush1.bf16.msra.mxu0 %v1148
  %3830 = vmatprep.subr.bf16.mxu0 %v1158
  %3831 = vmatpush1.bf16.msra.mxu0 %v1157
  %3832 = vmatprep.subr.bf16.mxu0 %v1167
  %3833 = vmatpush1.bf16.msra.mxu0 %v1166
  %3834 = vmatprep.subr.bf16.mxu0 %v1176
  %3835 = vmatpush1.bf16.msra.mxu0 %v1175
  %3836 = vmatprep.subr.bf16.mxu0 %v1185
  %3837 = vmatpush1.bf16.msra.mxu0 %v1184
  %3838 = vmatprep.subr.bf16.mxu0 %v1194
  %3839 = vmatpush1.bf16.msra.mxu0 %v1193
  %3840 = vmatprep.subr.bf16.mxu0 0
  %3841 = vmatpush1.bf16.msra.mxu0 0
  %3842 = vmatprep.subr.bf16.mxu0 0
  %3843 = vmatpush1.bf16.msra.mxu0 0
  %3844 = vmatprep.subr.bf16.mxu0 0
  %3845 = vmatpush1.bf16.msra.mxu0 0
  %3846 = vmatprep.subr.bf16.mxu0 0
  %3847 = vmatpush1.bf16.msra.mxu0 0
  %3848 = vmatprep.subr.bf16.mxu0 0
  %3849 = vmatpush1.bf16.msra.mxu0 0
  %3850 = vmatprep.subr.bf16.mxu0 0
  %3851 = vmatpush1.bf16.msra.mxu0 0
  %3852 = vmatprep.subr.bf16.mxu0 0
  %3853 = vmatpush1.bf16.msra.mxu0 0
  %3854 = vmatprep.subr.bf16.mxu0 0
  %3855 = vmatpush1.bf16.msra.mxu0 0
  %3856 = vmatprep.mubr.bf16.mxu0 0
  %3857 = vmatmul.mubr.bf16.gmra.mrb[0].mxu0 %v3536
  %v3858 = vpop.f32.mrb[0].mxu0
  %v3859 = vadd.f32 %v3818, %v3858
  %v3860 = vpop.f32.mrb[0].mxu0
  %v3861 = vadd.f32 %v3820, %v3860
  %v3862 = vpop.f32.mrb[0].mxu0
  %v3863 = vpop.f32.mrb[0].mxu0
  %3864 = vdwg.mxu0
  %3865 = vmatprep.subr.bf16.mxu0 0
  %3866 = vmatpush1.bf16.msra.mxu0 %v988
  %3867 = vmatprep.subr.bf16.mxu0 0
  %3868 = vmatpush1.bf16.msra.mxu0 %v997
  %3869 = vmatprep.subr.bf16.mxu0 0
  %3870 = vmatpush1.bf16.msra.mxu0 %v1006
  %3871 = vmatprep.subr.bf16.mxu0 0
  %3872 = vmatpush1.bf16.msra.mxu0 %v1015
  %3873 = vmatprep.subr.bf16.mxu0 0
  %3874 = vmatpush1.bf16.msra.mxu0 %v1024
  %3875 = vmatprep.subr.bf16.mxu0 0
  %3876 = vmatpush1.bf16.msra.mxu0 %v1033
  %3877 = vmatprep.subr.bf16.mxu0 0
  %3878 = vmatpush1.bf16.msra.mxu0 %v1042
  %3879 = vmatprep.subr.bf16.mxu0 0
  %3880 = vmatpush1.bf16.msra.mxu0 %v1051
  %3881 = vmatprep.subr.bf16.mxu0 0
  %3882 = vmatpush1.bf16.msra.mxu0 %v1060
  %3883 = vmatprep.subr.bf16.mxu0 0
  %3884 = vmatpush1.bf16.msra.mxu0 %v1069
  %3885 = vmatprep.subr.bf16.mxu0 0
  %3886 = vmatpush1.bf16.msra.mxu0 %v1078
  %3887 = vmatprep.subr.bf16.mxu0 0
  %3888 = vmatpush1.bf16.msra.mxu0 %v1087
  %3889 = vmatprep.subr.bf16.mxu0 0
  %3890 = vmatpush1.bf16.msra.mxu0 %v1096
  %3891 = vmatprep.subr.bf16.mxu0 0
  %3892 = vmatpush1.bf16.msra.mxu0 %v1105
  %3893 = vmatprep.subr.bf16.mxu0 0
  %3894 = vmatpush1.bf16.msra.mxu0 %v1114
  %3895 = vmatprep.subr.bf16.mxu0 0
  %3896 = vmatpush1.bf16.msra.mxu0 %v1123
  %3897 = vmatprep.mubr.bf16.mxu0 %v3535
  %3898 = vmatmul.mubr.bf16.gmra.mrb[0].mxu0 %v3534
  %v3899 = vpop.f32.mrb[0].mxu0
  %v3900 = vadd.f32 0.0, %v3899
  %v3901 = vpop.f32.mrb[0].mxu0
  %v3902 = vpop.f32.mrb[0].mxu0
  %v3903 = vpop.f32.mrb[0].mxu0
  %3904 = vdwg.mxu0
  %3905 = vmatprep.subr.bf16.mxu0 0
  %3906 = vmatpush1.bf16.msra.mxu0 %v1132
  %3907 = vmatprep.subr.bf16.mxu0 0
  %3908 = vmatpush1.bf16.msra.mxu0 %v1141
  %3909 = vmatprep.subr.bf16.mxu0 0
  %3910 = vmatpush1.bf16.msra.mxu0 %v1150
  %3911 = vmatprep.subr.bf16.mxu0 0
  %3912 = vmatpush1.bf16.msra.mxu0 %v1159
  %3913 = vmatprep.subr.bf16.mxu0 0
  %3914 = vmatpush1.bf16.msra.mxu0 %v1168
  %3915 = vmatprep.subr.bf16.mxu0 0
  %3916 = vmatpush1.bf16.msra.mxu0 %v1177
  %3917 = vmatprep.subr.bf16.mxu0 0
  %3918 = vmatpush1.bf16.msra.mxu0 %v1186
  %3919 = vmatprep.subr.bf16.mxu0 0
  %3920 = vmatpush1.bf16.msra.mxu0 %v1195
  %3921 = vmatprep.subr.bf16.mxu0 0
  %3922 = vmatpush1.bf16.msra.mxu0 0
  %3923 = vmatprep.subr.bf16.mxu0 0
  %3924 = vmatpush1.bf16.msra.mxu0 0
  %3925 = vmatprep.subr.bf16.mxu0 0
  %3926 = vmatpush1.bf16.msra.mxu0 0
  %3927 = vmatprep.subr.bf16.mxu0 0
  %3928 = vmatpush1.bf16.msra.mxu0 0
  %3929 = vmatprep.subr.bf16.mxu0 0
  %3930 = vmatpush1.bf16.msra.mxu0 0
  %3931 = vmatprep.subr.bf16.mxu0 0
  %3932 = vmatpush1.bf16.msra.mxu0 0
  %3933 = vmatprep.subr.bf16.mxu0 0
  %3934 = vmatpush1.bf16.msra.mxu0 0
  %3935 = vmatprep.subr.bf16.mxu0 0
  %3936 = vmatpush1.bf16.msra.mxu0 0
  %3937 = vmatprep.mubr.bf16.mxu0 0
  %3938 = vmatmul.mubr.bf16.gmra.mrb[0].mxu0 %v3536
  %v3939 = vpop.f32.mrb[0].mxu0
  %v3940 = vadd.f32 %v3900, %v3939
  %v3941 = vpop.f32.mrb[0].mxu0
  %v3942 = vpop.f32.mrb[0].mxu0
  %v3943 = vpop.f32.mrb[0].mxu0
  %3944 = vdwg.mxu0
  %v3948 = vcombine.low %v3613, %v3615
  %v3950 = vunpack.c.l.s4 1983009808
  %v3951 = vunpack.c.0.s8 %v3950
  %v3952 = vlaneseq
  %v3953 = vshrl.u32 %v3952, 7
  %v3954 = vsub.s32 %v3951, %v3953
  %v3955 = vrot.slane %v3948, %v3954
  %v3957 = vunpack.c.l.s4 1983009808
  %v3958 = vunpack.c.0.s8 %v3957
  %v3959 = vlaneseq
  %v3960 = vshrl.u32 %v3959, 7
  %v3961 = vsub.s32 %v3958, %v3960
  %v3962 = vrot.slane %v3695, %v3961
  %v3963 = vcombine.low %v3955, %v3962
  %v3965 = vadd.f32 %v3511, %v3963
  %v3966 = vxor.u32 %v3965, 2147483648
  %v3967 = vmul.f32 %v3966, 1.442695
  %v3968 = vpow.pop %v3967
  %v3969 = vadd.f32 %v3968, 1.0
  %v3970 = vrcp.pop %v3969
  %v3971 = vmul.f32 1.0, %v3970
  %v3974 = vrot.slane %v3511, 6
  %v3975 = vrot.slane %v3512, 6
  %v3976 = vsel %vm1851, %v3974, %v3975
  %v3981 = vcombine.low %v3697, %v3777
  %v3983 = vunpack.c.l.s4 1983009808
  %v3984 = vunpack.c.0.s8 %v3983
  %v3985 = vlaneseq
  %v3986 = vshrl.u32 %v3985, 7
  %v3987 = vsub.s32 %v3984, %v3986
  %v3988 = vrot.slane %v3981, %v3987
  %v3990 = vunpack.c.l.s4 1983009808
  %v3991 = vunpack.c.0.s8 %v3990
  %v3992 = vlaneseq
  %v3993 = vshrl.u32 %v3992, 7
  %v3994 = vsub.s32 %v3991, %v3993
  %v3995 = vrot.slane %v3779, %v3994
  %v3996 = vcombine.low %v3988, %v3995
  %v3998 = vadd.f32 %v3976, %v3996
  %v3999 = vxor.u32 %v3998, 2147483648
  %v4000 = vmul.f32 %v3999, 1.442695
  %v4001 = vpow.pop %v4000
  %v4002 = vadd.f32 %v4001, 1.0
  %v4003 = vrcp.pop %v4002
  %v4004 = vmul.f32 1.0, %v4003
  %v4005 = vadd.f32 %v3859, %v269
  %v4006 = vadd.f32 %v3861, %v273
  %v4007 = vadd.f32 %v3940, %v277
  %v4011 = vcombine.low %v4005, %v4006
  %v4013 = vunpack.c.l.s4 1983009808
  %v4014 = vunpack.c.0.s8 %v4013
  %v4015 = vlaneseq
  %v4016 = vshrl.u32 %v4015, 7
  %v4017 = vsub.s32 %v4014, %v4016
  %v4018 = vrot.slane %v4011, %v4017
  %v4020 = vunpack.c.l.s4 1983009808
  %v4021 = vunpack.c.0.s8 %v4020
  %v4022 = vlaneseq
  %v4023 = vshrl.u32 %v4022, 7
  %v4024 = vsub.s32 %v4021, %v4023
  %v4025 = vrot.slane %v4007, %v4024
  %v4026 = vcombine.low %v4018, %v4025
  %v4028 = vmul.f32 %v3971, %v4026
  %v4030 = vrot.slane %v3512, 4
  %v4031 = vrot.slane %v3513, 4
  %v4032 = vsel %vm1908, %v4030, %v4031
  %v4034 = vadd.f32 %v4032, %v4028
  %v4035 = vtanh.pop %v4034
  %v4036 = vsub.f32 %v3507, %v4035
  %v4037 = vmul.f32 %v4004, %v4036
  %v4038 = vadd.f32 %v4035, %v4037
  %s4039 = scalar_lea.vmem %s4, 24
  %4040 = vst [vmem:[%s4039] sm:$0x3f] %v4038
  %s4041 = scalar_lea.vmem %s0, 90
  %v4042 = vld [vmem:[%s4041] sm:$0xff]
  %v4043 = vld [vmem:[%s4041 + $0x8] sm:$0xff]
  %v4044 = vld [vmem:[%s4041 + $0x10] sm:$0x3]
  %v4046 = vcombine.high %v4038, %v4038
  %v4048 = vunpack.c.l.s4 1983009808
  %v4049 = vunpack.c.0.s8 %v4048
  %v4050 = vlaneseq
  %v4051 = vshrl.u32 %v4050, 7
  %v4052 = vsub.s32 %v4049, %v4051
  %v4053 = vrot.slane %v4038, %v4052
  %v4055 = vunpack.c.l.s4 1983009808
  %v4056 = vunpack.c.0.s8 %v4055
  %v4057 = vlaneseq
  %v4058 = vshrl.u32 %v4057, 7
  %v4059 = vsub.s32 %v4056, %v4058
  %v4060 = vrot.slane %v4046, %v4059
  %v4061 = vcombine.high %v4053, %v4053
  %v4065 = vpack.c.bf16 %v4053, %v4053
  %v4066 = vpack.c.bf16 %v4061, %v4061
  %v4067 = vpack.c.bf16 %v4060, %v4060
  %4068 = vmatprep.subr.bf16.mxu0 %v981
  %4069 = vmatpush1.bf16.msra.mxu0 %v980
  %4070 = vmatprep.subr.bf16.mxu0 %v990
  %4071 = vmatpush1.bf16.msra.mxu0 %v989
  %4072 = vmatprep.subr.bf16.mxu0 %v999
  %4073 = vmatpush1.bf16.msra.mxu0 %v998
  %4074 = vmatprep.subr.bf16.mxu0 %v1008
  %4075 = vmatpush1.bf16.msra.mxu0 %v1007
  %4076 = vmatprep.subr.bf16.mxu0 %v1017
  %4077 = vmatpush1.bf16.msra.mxu0 %v1016
  %4078 = vmatprep.subr.bf16.mxu0 %v1026
  %4079 = vmatpush1.bf16.msra.mxu0 %v1025
  %4080 = vmatprep.subr.bf16.mxu0 %v1035
  %4081 = vmatpush1.bf16.msra.mxu0 %v1034
  %4082 = vmatprep.subr.bf16.mxu0 %v1044
  %4083 = vmatpush1.bf16.msra.mxu0 %v1043
  %4084 = vmatprep.subr.bf16.mxu0 %v1053
  %4085 = vmatpush1.bf16.msra.mxu0 %v1052
  %4086 = vmatprep.subr.bf16.mxu0 %v1062
  %4087 = vmatpush1.bf16.msra.mxu0 %v1061
  %4088 = vmatprep.subr.bf16.mxu0 %v1071
  %4089 = vmatpush1.bf16.msra.mxu0 %v1070
  %4090 = vmatprep.subr.bf16.mxu0 %v1080
  %4091 = vmatpush1.bf16.msra.mxu0 %v1079
  %4092 = vmatprep.subr.bf16.mxu0 %v1089
  %4093 = vmatpush1.bf16.msra.mxu0 %v1088
  %4094 = vmatprep.subr.bf16.mxu0 %v1098
  %4095 = vmatpush1.bf16.msra.mxu0 %v1097
  %4096 = vmatprep.subr.bf16.mxu0 %v1107
  %4097 = vmatpush1.bf16.msra.mxu0 %v1106
  %4098 = vmatprep.subr.bf16.mxu0 %v1116
  %4099 = vmatpush1.bf16.msra.mxu0 %v1115
  %4100 = vmatprep.mubr.bf16.mxu0 %v4066
  %4101 = vmatmul.mubr.bf16.gmra.mrb[0].mxu0 %v4065
  %v4102 = vpop.f32.mrb[0].mxu0
  %v4103 = vadd.f32 0.0, %v4102
  %v4104 = vpop.f32.mrb[0].mxu0
  %v4105 = vadd.f32 0.0, %v4104
  %v4106 = vpop.f32.mrb[0].mxu0
  %v4107 = vpop.f32.mrb[0].mxu0
  %4108 = vdwg.mxu0
  %4109 = vmatprep.subr.bf16.mxu0 %v1125
  %4110 = vmatpush1.bf16.msra.mxu0 %v1124
  %4111 = vmatprep.subr.bf16.mxu0 %v1134
  %4112 = vmatpush1.bf16.msra.mxu0 %v1133
  %4113 = vmatprep.subr.bf16.mxu0 %v1143
  %4114 = vmatpush1.bf16.msra.mxu0 %v1142
  %4115 = vmatprep.subr.bf16.mxu0 %v1152
  %4116 = vmatpush1.bf16.msra.mxu0 %v1151
  %4117 = vmatprep.subr.bf16.mxu0 %v1161
  %4118 = vmatpush1.bf16.msra.mxu0 %v1160
  %4119 = vmatprep.subr.bf16.mxu0 %v1170
  %4120 = vmatpush1.bf16.msra.mxu0 %v1169
  %4121 = vmatprep.subr.bf16.mxu0 %v1179
  %4122 = vmatpush1.bf16.msra.mxu0 %v1178
  %4123 = vmatprep.subr.bf16.mxu0 %v1188
  %4124 = vmatpush1.bf16.msra.mxu0 %v1187
  %4125 = vmatprep.subr.bf16.mxu0 0
  %4126 = vmatpush1.bf16.msra.mxu0 0
  %4127 = vmatprep.subr.bf16.mxu0 0
  %4128 = vmatpush1.bf16.msra.mxu0 0
  %4129 = vmatprep.subr.bf16.mxu0 0
  %4130 = vmatpush1.bf16.msra.mxu0 0
  %4131 = vmatprep.subr.bf16.mxu0 0
  %4132 = vmatpush1.bf16.msra.mxu0 0
  %4133 = vmatprep.subr.bf16.mxu0 0
  %4134 = vmatpush1.bf16.msra.mxu0 0
  %4135 = vmatprep.subr.bf16.mxu0 0
  %4136 = vmatpush1.bf16.msra.mxu0 0
  %4137 = vmatprep.subr.bf16.mxu0 0
  %4138 = vmatpush1.bf16.msra.mxu0 0
  %4139 = vmatprep.subr.bf16.mxu0 0
  %4140 = vmatpush1.bf16.msra.mxu0 0
  %4141 = vmatprep.mubr.bf16.mxu0 0
  %4142 = vmatmul.mubr.bf16.gmra.mrb[0].mxu0 %v4067
  %v4143 = vpop.f32.mrb[0].mxu0
  %v4144 = vadd.f32 %v4103, %v4143
  %v4145 = vpop.f32.mrb[0].mxu0
  %v4146 = vadd.f32 %v4105, %v4145
  %v4147 = vpop.f32.mrb[0].mxu0
  %v4148 = vpop.f32.mrb[0].mxu0
  %4149 = vdwg.mxu0
  %4150 = vmatprep.subr.bf16.mxu0 %v983
  %4151 = vmatpush1.bf16.msra.mxu0 %v982
  %4152 = vmatprep.subr.bf16.mxu0 %v992
  %4153 = vmatpush1.bf16.msra.mxu0 %v991
  %4154 = vmatprep.subr.bf16.mxu0 %v1001
  %4155 = vmatpush1.bf16.msra.mxu0 %v1000
  %4156 = vmatprep.subr.bf16.mxu0 %v1010
  %4157 = vmatpush1.bf16.msra.mxu0 %v1009
  %4158 = vmatprep.subr.bf16.mxu0 %v1019
  %4159 = vmatpush1.bf16.msra.mxu0 %v1018
  %4160 = vmatprep.subr.bf16.mxu0 %v1028
  %4161 = vmatpush1.bf16.msra.mxu0 %v1027
  %4162 = vmatprep.subr.bf16.mxu0 %v1037
  %4163 = vmatpush1.bf16.msra.mxu0 %v1036
  %4164 = vmatprep.subr.bf16.mxu0 %v1046
  %4165 = vmatpush1.bf16.msra.mxu0 %v1045
  %4166 = vmatprep.subr.bf16.mxu0 %v1055
  %4167 = vmatpush1.bf16.msra.mxu0 %v1054
  %4168 = vmatprep.subr.bf16.mxu0 %v1064
  %4169 = vmatpush1.bf16.msra.mxu0 %v1063
  %4170 = vmatprep.subr.bf16.mxu0 %v1073
  %4171 = vmatpush1.bf16.msra.mxu0 %v1072
  %4172 = vmatprep.subr.bf16.mxu0 %v1082
  %4173 = vmatpush1.bf16.msra.mxu0 %v1081
  %4174 = vmatprep.subr.bf16.mxu0 %v1091
  %4175 = vmatpush1.bf16.msra.mxu0 %v1090
  %4176 = vmatprep.subr.bf16.mxu0 %v1100
  %4177 = vmatpush1.bf16.msra.mxu0 %v1099
  %4178 = vmatprep.subr.bf16.mxu0 %v1109
  %4179 = vmatpush1.bf16.msra.mxu0 %v1108
  %4180 = vmatprep.subr.bf16.mxu0 %v1118
  %4181 = vmatpush1.bf16.msra.mxu0 %v1117
  %4182 = vmatprep.mubr.bf16.mxu0 %v4066
  %4183 = vmatmul.mubr.bf16.gmra.mrb[0].mxu0 %v4065
  %v4184 = vpop.f32.mrb[0].mxu0
  %v4185 = vadd.f32 0.0, %v4184
  %v4186 = vpop.f32.mrb[0].mxu0
  %v4187 = vadd.f32 0.0, %v4186
  %v4188 = vpop.f32.mrb[0].mxu0
  %v4189 = vpop.f32.mrb[0].mxu0
  %4190 = vdwg.mxu0
  %4191 = vmatprep.subr.bf16.mxu0 %v1127
  %4192 = vmatpush1.bf16.msra.mxu0 %v1126
  %4193 = vmatprep.subr.bf16.mxu0 %v1136
  %4194 = vmatpush1.bf16.msra.mxu0 %v1135
  %4195 = vmatprep.subr.bf16.mxu0 %v1145
  %4196 = vmatpush1.bf16.msra.mxu0 %v1144
  %4197 = vmatprep.subr.bf16.mxu0 %v1154
  %4198 = vmatpush1.bf16.msra.mxu0 %v1153
  %4199 = vmatprep.subr.bf16.mxu0 %v1163
  %4200 = vmatpush1.bf16.msra.mxu0 %v1162
  %4201 = vmatprep.subr.bf16.mxu0 %v1172
  %4202 = vmatpush1.bf16.msra.mxu0 %v1171
  %4203 = vmatprep.subr.bf16.mxu0 %v1181
  %4204 = vmatpush1.bf16.msra.mxu0 %v1180
  %4205 = vmatprep.subr.bf16.mxu0 %v1190
  %4206 = vmatpush1.bf16.msra.mxu0 %v1189
  %4207 = vmatprep.subr.bf16.mxu0 0
  %4208 = vmatpush1.bf16.msra.mxu0 0
  %4209 = vmatprep.subr.bf16.mxu0 0
  %4210 = vmatpush1.bf16.msra.mxu0 0
  %4211 = vmatprep.subr.bf16.mxu0 0
  %4212 = vmatpush1.bf16.msra.mxu0 0
  %4213 = vmatprep.subr.bf16.mxu0 0
  %4214 = vmatpush1.bf16.msra.mxu0 0
  %4215 = vmatprep.subr.bf16.mxu0 0
  %4216 = vmatpush1.bf16.msra.mxu0 0
  %4217 = vmatprep.subr.bf16.mxu0 0
  %4218 = vmatpush1.bf16.msra.mxu0 0
  %4219 = vmatprep.subr.bf16.mxu0 0
  %4220 = vmatpush1.bf16.msra.mxu0 0
  %4221 = vmatprep.subr.bf16.mxu0 0
  %4222 = vmatpush1.bf16.msra.mxu0 0
  %4223 = vmatprep.mubr.bf16.mxu0 0
  %4224 = vmatmul.mubr.bf16.gmra.mrb[0].mxu0 %v4067
  %v4225 = vpop.f32.mrb[0].mxu0
  %v4226 = vadd.f32 %v4185, %v4225
  %v4227 = vpop.f32.mrb[0].mxu0
  %v4228 = vadd.f32 %v4187, %v4227
  %v4229 = vpop.f32.mrb[0].mxu0
  %v4230 = vpop.f32.mrb[0].mxu0
  %4231 = vdwg.mxu0
  %4232 = vmatprep.subr.bf16.mxu0 %v985
  %4233 = vmatpush1.bf16.msra.mxu0 %v984
  %4234 = vmatprep.subr.bf16.mxu0 %v994
  %4235 = vmatpush1.bf16.msra.mxu0 %v993
  %4236 = vmatprep.subr.bf16.mxu0 %v1003
  %4237 = vmatpush1.bf16.msra.mxu0 %v1002
  %4238 = vmatprep.subr.bf16.mxu0 %v1012
  %4239 = vmatpush1.bf16.msra.mxu0 %v1011
  %4240 = vmatprep.subr.bf16.mxu0 %v1021
  %4241 = vmatpush1.bf16.msra.mxu0 %v1020
  %4242 = vmatprep.subr.bf16.mxu0 %v1030
  %4243 = vmatpush1.bf16.msra.mxu0 %v1029
  %4244 = vmatprep.subr.bf16.mxu0 %v1039
  %4245 = vmatpush1.bf16.msra.mxu0 %v1038
  %4246 = vmatprep.subr.bf16.mxu0 %v1048
  %4247 = vmatpush1.bf16.msra.mxu0 %v1047
  %4248 = vmatprep.subr.bf16.mxu0 %v1057
  %4249 = vmatpush1.bf16.msra.mxu0 %v1056
  %4250 = vmatprep.subr.bf16.mxu0 %v1066
  %4251 = vmatpush1.bf16.msra.mxu0 %v1065
  %4252 = vmatprep.subr.bf16.mxu0 %v1075
  %4253 = vmatpush1.bf16.msra.mxu0 %v1074
  %4254 = vmatprep.subr.bf16.mxu0 %v1084
  %4255 = vmatpush1.bf16.msra.mxu0 %v1083
  %4256 = vmatprep.subr.bf16.mxu0 %v1093
  %4257 = vmatpush1.bf16.msra.mxu0 %v1092
  %4258 = vmatprep.subr.bf16.mxu0 %v1102
  %4259 = vmatpush1.bf16.msra.mxu0 %v1101
  %4260 = vmatprep.subr.bf16.mxu0 %v1111
  %4261 = vmatpush1.bf16.msra.mxu0 %v1110
  %4262 = vmatprep.subr.bf16.mxu0 %v1120
  %4263 = vmatpush1.bf16.msra.mxu0 %v1119
  %4264 = vmatprep.mubr.bf16.mxu0 %v4066
  %4265 = vmatmul.mubr.bf16.gmra.mrb[0].mxu0 %v4065
  %v4266 = vpop.f32.mrb[0].mxu0
  %v4267 = vadd.f32 0.0, %v4266
  %v4268 = vpop.f32.mrb[0].mxu0
  %v4269 = vadd.f32 0.0, %v4268
  %v4270 = vpop.f32.mrb[0].mxu0
  %v4271 = vpop.f32.mrb[0].mxu0
  %4272 = vdwg.mxu0
  %4273 = vmatprep.subr.bf16.mxu0 %v1129
  %4274 = vmatpush1.bf16.msra.mxu0 %v1128
  %4275 = vmatprep.subr.bf16.mxu0 %v1138
  %4276 = vmatpush1.bf16.msra.mxu0 %v1137
  %4277 = vmatprep.subr.bf16.mxu0 %v1147
  %4278 = vmatpush1.bf16.msra.mxu0 %v1146
  %4279 = vmatprep.subr.bf16.mxu0 %v1156
  %4280 = vmatpush1.bf16.msra.mxu0 %v1155
  %4281 = vmatprep.subr.bf16.mxu0 %v1165
  %4282 = vmatpush1.bf16.msra.mxu0 %v1164
  %4283 = vmatprep.subr.bf16.mxu0 %v1174
  %4284 = vmatpush1.bf16.msra.mxu0 %v1173
  %4285 = vmatprep.subr.bf16.mxu0 %v1183
  %4286 = vmatpush1.bf16.msra.mxu0 %v1182
  %4287 = vmatprep.subr.bf16.mxu0 %v1192
  %4288 = vmatpush1.bf16.msra.mxu0 %v1191
  %4289 = vmatprep.subr.bf16.mxu0 0
  %4290 = vmatpush1.bf16.msra.mxu0 0
  %4291 = vmatprep.subr.bf16.mxu0 0
  %4292 = vmatpush1.bf16.msra.mxu0 0
  %4293 = vmatprep.subr.bf16.mxu0 0
  %4294 = vmatpush1.bf16.msra.mxu0 0
  %4295 = vmatprep.subr.bf16.mxu0 0
  %4296 = vmatpush1.bf16.msra.mxu0 0
  %4297 = vmatprep.subr.bf16.mxu0 0
  %4298 = vmatpush1.bf16.msra.mxu0 0
  %4299 = vmatprep.subr.bf16.mxu0 0
  %4300 = vmatpush1.bf16.msra.mxu0 0
  %4301 = vmatprep.subr.bf16.mxu0 0
  %4302 = vmatpush1.bf16.msra.mxu0 0
  %4303 = vmatprep.subr.bf16.mxu0 0
  %4304 = vmatpush1.bf16.msra.mxu0 0
  %4305 = vmatprep.mubr.bf16.mxu0 0
  %4306 = vmatmul.mubr.bf16.gmra.mrb[0].mxu0 %v4067
  %v4307 = vpop.f32.mrb[0].mxu0
  %v4308 = vadd.f32 %v4267, %v4307
  %v4309 = vpop.f32.mrb[0].mxu0
  %v4310 = vadd.f32 %v4269, %v4309
  %v4311 = vpop.f32.mrb[0].mxu0
  %v4312 = vpop.f32.mrb[0].mxu0
  %4313 = vdwg.mxu0
  %4314 = vmatprep.subr.bf16.mxu0 %v987
  %4315 = vmatpush1.bf16.msra.mxu0 %v986
  %4316 = vmatprep.subr.bf16.mxu0 %v996
  %4317 = vmatpush1.bf16.msra.mxu0 %v995
  %4318 = vmatprep.subr.bf16.mxu0 %v1005
  %4319 = vmatpush1.bf16.msra.mxu0 %v1004
  %4320 = vmatprep.subr.bf16.mxu0 %v1014
  %4321 = vmatpush1.bf16.msra.mxu0 %v1013
  %4322 = vmatprep.subr.bf16.mxu0 %v1023
  %4323 = vmatpush1.bf16.msra.mxu0 %v1022
  %4324 = vmatprep.subr.bf16.mxu0 %v1032
  %4325 = vmatpush1.bf16.msra.mxu0 %v1031
  %4326 = vmatprep.subr.bf16.mxu0 %v1041
  %4327 = vmatpush1.bf16.msra.mxu0 %v1040
  %4328 = vmatprep.subr.bf16.mxu0 %v1050
  %4329 = vmatpush1.bf16.msra.mxu0 %v1049
  %4330 = vmatprep.subr.bf16.mxu0 %v1059
  %4331 = vmatpush1.bf16.msra.mxu0 %v1058
  %4332 = vmatprep.subr.bf16.mxu0 %v1068
  %4333 = vmatpush1.bf16.msra.mxu0 %v1067
  %4334 = vmatprep.subr.bf16.mxu0 %v1077
  %4335 = vmatpush1.bf16.msra.mxu0 %v1076
  %4336 = vmatprep.subr.bf16.mxu0 %v1086
  %4337 = vmatpush1.bf16.msra.mxu0 %v1085
  %4338 = vmatprep.subr.bf16.mxu0 %v1095
  %4339 = vmatpush1.bf16.msra.mxu0 %v1094
  %4340 = vmatprep.subr.bf16.mxu0 %v1104
  %4341 = vmatpush1.bf16.msra.mxu0 %v1103
  %4342 = vmatprep.subr.bf16.mxu0 %v1113
  %4343 = vmatpush1.bf16.msra.mxu0 %v1112
  %4344 = vmatprep.subr.bf16.mxu0 %v1122
  %4345 = vmatpush1.bf16.msra.mxu0 %v1121
  %4346 = vmatprep.mubr.bf16.mxu0 %v4066
  %4347 = vmatmul.mubr.bf16.gmra.mrb[0].mxu0 %v4065
  %v4348 = vpop.f32.mrb[0].mxu0
  %v4349 = vadd.f32 0.0, %v4348
  %v4350 = vpop.f32.mrb[0].mxu0
  %v4351 = vadd.f32 0.0, %v4350
  %v4352 = vpop.f32.mrb[0].mxu0
  %v4353 = vpop.f32.mrb[0].mxu0
  %4354 = vdwg.mxu0
  %4355 = vmatprep.subr.bf16.mxu0 %v1131
  %4356 = vmatpush1.bf16.msra.mxu0 %v1130
  %4357 = vmatprep.subr.bf16.mxu0 %v1140
  %4358 = vmatpush1.bf16.msra.mxu0 %v1139
  %4359 = vmatprep.subr.bf16.mxu0 %v1149
  %4360 = vmatpush1.bf16.msra.mxu0 %v1148
  %4361 = vmatprep.subr.bf16.mxu0 %v1158
  %4362 = vmatpush1.bf16.msra.mxu0 %v1157
  %4363 = vmatprep.subr.bf16.mxu0 %v1167
  %4364 = vmatpush1.bf16.msra.mxu0 %v1166
  %4365 = vmatprep.subr.bf16.mxu0 %v1176
  %4366 = vmatpush1.bf16.msra.mxu0 %v1175
  %4367 = vmatprep.subr.bf16.mxu0 %v1185
  %4368 = vmatpush1.bf16.msra.mxu0 %v1184
  %4369 = vmatprep.subr.bf16.mxu0 %v1194
  %4370 = vmatpush1.bf16.msra.mxu0 %v1193
  %4371 = vmatprep.subr.bf16.mxu0 0
  %4372 = vmatpush1.bf16.msra.mxu0 0
  %4373 = vmatprep.subr.bf16.mxu0 0
  %4374 = vmatpush1.bf16.msra.mxu0 0
  %4375 = vmatprep.subr.bf16.mxu0 0
  %4376 = vmatpush1.bf16.msra.mxu0 0
  %4377 = vmatprep.subr.bf16.mxu0 0
  %4378 = vmatpush1.bf16.msra.mxu0 0
  %4379 = vmatprep.subr.bf16.mxu0 0
  %4380 = vmatpush1.bf16.msra.mxu0 0
  %4381 = vmatprep.subr.bf16.mxu0 0
  %4382 = vmatpush1.bf16.msra.mxu0 0
  %4383 = vmatprep.subr.bf16.mxu0 0
  %4384 = vmatpush1.bf16.msra.mxu0 0
  %4385 = vmatprep.subr.bf16.mxu0 0
  %4386 = vmatpush1.bf16.msra.mxu0 0
  %4387 = vmatprep.mubr.bf16.mxu0 0
  %4388 = vmatmul.mubr.bf16.gmra.mrb[0].mxu0 %v4067
  %v4389 = vpop.f32.mrb[0].mxu0
  %v4390 = vadd.f32 %v4349, %v4389
  %v4391 = vpop.f32.mrb[0].mxu0
  %v4392 = vadd.f32 %v4351, %v4391
  %v4393 = vpop.f32.mrb[0].mxu0
  %v4394 = vpop.f32.mrb[0].mxu0
  %4395 = vdwg.mxu0
  %4396 = vmatprep.subr.bf16.mxu0 0
  %4397 = vmatpush1.bf16.msra.mxu0 %v988
  %4398 = vmatprep.subr.bf16.mxu0 0
  %4399 = vmatpush1.bf16.msra.mxu0 %v997
  %4400 = vmatprep.subr.bf16.mxu0 0
  %4401 = vmatpush1.bf16.msra.mxu0 %v1006
  %4402 = vmatprep.subr.bf16.mxu0 0
  %4403 = vmatpush1.bf16.msra.mxu0 %v1015
  %4404 = vmatprep.subr.bf16.mxu0 0
  %4405 = vmatpush1.bf16.msra.mxu0 %v1024
  %4406 = vmatprep.subr.bf16.mxu0 0
  %4407 = vmatpush1.bf16.msra.mxu0 %v1033
  %4408 = vmatprep.subr.bf16.mxu0 0
  %4409 = vmatpush1.bf16.msra.mxu0 %v1042
  %4410 = vmatprep.subr.bf16.mxu0 0
  %4411 = vmatpush1.bf16.msra.mxu0 %v1051
  %4412 = vmatprep.subr.bf16.mxu0 0
  %4413 = vmatpush1.bf16.msra.mxu0 %v1060
  %4414 = vmatprep.subr.bf16.mxu0 0
  %4415 = vmatpush1.bf16.msra.mxu0 %v1069
  %4416 = vmatprep.subr.bf16.mxu0 0
  %4417 = vmatpush1.bf16.msra.mxu0 %v1078
  %4418 = vmatprep.subr.bf16.mxu0 0
  %4419 = vmatpush1.bf16.msra.mxu0 %v1087
  %4420 = vmatprep.subr.bf16.mxu0 0
  %4421 = vmatpush1.bf16.msra.mxu0 %v1096
  %4422 = vmatprep.subr.bf16.mxu0 0
  %4423 = vmatpush1.bf16.msra.mxu0 %v1105
  %4424 = vmatprep.subr.bf16.mxu0 0
  %4425 = vmatpush1.bf16.msra.mxu0 %v1114
  %4426 = vmatprep.subr.bf16.mxu0 0
  %4427 = vmatpush1.bf16.msra.mxu0 %v1123
  %4428 = vmatprep.mubr.bf16.mxu0 %v4066
  %4429 = vmatmul.mubr.bf16.gmra.mrb[0].mxu0 %v4065
  %v4430 = vpop.f32.mrb[0].mxu0
  %v4431 = vadd.f32 0.0, %v4430
  %v4432 = vpop.f32.mrb[0].mxu0
  %v4433 = vpop.f32.mrb[0].mxu0
  %v4434 = vpop.f32.mrb[0].mxu0
  %4435 = vdwg.mxu0
  %4436 = vmatprep.subr.bf16.mxu0 0
  %4437 = vmatpush1.bf16.msra.mxu0 %v1132
  %4438 = vmatprep.subr.bf16.mxu0 0
  %4439 = vmatpush1.bf16.msra.mxu0 %v1141
  %4440 = vmatprep.subr.bf16.mxu0 0
  %4441 = vmatpush1.bf16.msra.mxu0 %v1150
  %4442 = vmatprep.subr.bf16.mxu0 0
  %4443 = vmatpush1.bf16.msra.mxu0 %v1159
  %4444 = vmatprep.subr.bf16.mxu0 0
  %4445 = vmatpush1.bf16.msra.mxu0 %v1168
  %4446 = vmatprep.subr.bf16.mxu0 0
  %4447 = vmatpush1.bf16.msra.mxu0 %v1177
  %4448 = vmatprep.subr.bf16.mxu0 0
  %4449 = vmatpush1.bf16.msra.mxu0 %v1186
  %4450 = vmatprep.subr.bf16.mxu0 0
  %4451 = vmatpush1.bf16.msra.mxu0 %v1195
  %4452 = vmatprep.subr.bf16.mxu0 0
  %4453 = vmatpush1.bf16.msra.mxu0 0
  %4454 = vmatprep.subr.bf16.mxu0 0
  %4455 = vmatpush1.bf16.msra.mxu0 0
  %4456 = vmatprep.subr.bf16.mxu0 0
  %4457 = vmatpush1.bf16.msra.mxu0 0
  %4458 = vmatprep.subr.bf16.mxu0 0
  %4459 = vmatpush1.bf16.msra.mxu0 0
  %4460 = vmatprep.subr.bf16.mxu0 0
  %4461 = vmatpush1.bf16.msra.mxu0 0
  %4462 = vmatprep.subr.bf16.mxu0 0
  %4463 = vmatpush1.bf16.msra.mxu0 0
  %4464 = vmatprep.subr.bf16.mxu0 0
  %4465 = vmatpush1.bf16.msra.mxu0 0
  %4466 = vmatprep.subr.bf16.mxu0 0
  %4467 = vmatpush1.bf16.msra.mxu0 0
  %4468 = vmatprep.mubr.bf16.mxu0 0
  %4469 = vmatmul.mubr.bf16.gmra.mrb[0].mxu0 %v4067
  %v4470 = vpop.f32.mrb[0].mxu0
  %v4471 = vadd.f32 %v4431, %v4470
  %v4472 = vpop.f32.mrb[0].mxu0
  %v4473 = vpop.f32.mrb[0].mxu0
  %v4474 = vpop.f32.mrb[0].mxu0
  %4475 = vdwg.mxu0
  %v4479 = vcombine.low %v4144, %v4146
  %v4481 = vunpack.c.l.s4 1983009808
  %v4482 = vunpack.c.0.s8 %v4481
  %v4483 = vlaneseq
  %v4484 = vshrl.u32 %v4483, 7
  %v4485 = vsub.s32 %v4482, %v4484
  %v4486 = vrot.slane %v4479, %v4485
  %v4488 = vunpack.c.l.s4 1983009808
  %v4489 = vunpack.c.0.s8 %v4488
  %v4490 = vlaneseq
  %v4491 = vshrl.u32 %v4490, 7
  %v4492 = vsub.s32 %v4489, %v4491
  %v4493 = vrot.slane %v4226, %v4492
  %v4494 = vcombine.low %v4486, %v4493
  %v4496 = vadd.f32 %v4042, %v4494
  %v4497 = vxor.u32 %v4496, 2147483648
  %v4498 = vmul.f32 %v4497, 1.442695
  %v4499 = vpow.pop %v4498
  %v4500 = vadd.f32 %v4499, 1.0
  %v4501 = vrcp.pop %v4500
  %v4502 = vmul.f32 1.0, %v4501
  %v4505 = vrot.slane %v4042, 6
  %v4506 = vrot.slane %v4043, 6
  %v4507 = vsel %vm1851, %v4505, %v4506
  %v4512 = vcombine.low %v4228, %v4308
  %v4514 = vunpack.c.l.s4 1983009808
  %v4515 = vunpack.c.0.s8 %v4514
  %v4516 = vlaneseq
  %v4517 = vshrl.u32 %v4516, 7
  %v4518 = vsub.s32 %v4515, %v4517
  %v4519 = vrot.slane %v4512, %v4518
  %v4521 = vunpack.c.l.s4 1983009808
  %v4522 = vunpack.c.0.s8 %v4521
  %v4523 = vlaneseq
  %v4524 = vshrl.u32 %v4523, 7
  %v4525 = vsub.s32 %v4522, %v4524
  %v4526 = vrot.slane %v4310, %v4525
  %v4527 = vcombine.low %v4519, %v4526
  %v4529 = vadd.f32 %v4507, %v4527
  %v4530 = vxor.u32 %v4529, 2147483648
  %v4531 = vmul.f32 %v4530, 1.442695
  %v4532 = vpow.pop %v4531
  %v4533 = vadd.f32 %v4532, 1.0
  %v4534 = vrcp.pop %v4533
  %v4535 = vmul.f32 1.0, %v4534
  %v4536 = vadd.f32 %v4390, %v269
  %v4537 = vadd.f32 %v4392, %v273
  %v4538 = vadd.f32 %v4471, %v277
  %v4542 = vcombine.low %v4536, %v4537
  %v4544 = vunpack.c.l.s4 1983009808
  %v4545 = vunpack.c.0.s8 %v4544
  %v4546 = vlaneseq
  %v4547 = vshrl.u32 %v4546, 7
  %v4548 = vsub.s32 %v4545, %v4547
  %v4549 = vrot.slane %v4542, %v4548
  %v4551 = vunpack.c.l.s4 1983009808
  %v4552 = vunpack.c.0.s8 %v4551
  %v4553 = vlaneseq
  %v4554 = vshrl.u32 %v4553, 7
  %v4555 = vsub.s32 %v4552, %v4554
  %v4556 = vrot.slane %v4538, %v4555
  %v4557 = vcombine.low %v4549, %v4556
  %v4559 = vmul.f32 %v4502, %v4557
  %v4561 = vrot.slane %v4043, 4
  %v4562 = vrot.slane %v4044, 4
  %v4563 = vsel %vm1908, %v4561, %v4562
  %v4565 = vadd.f32 %v4563, %v4559
  %v4566 = vtanh.pop %v4565
  %v4567 = vsub.f32 %v4038, %v4566
  %v4568 = vmul.f32 %v4535, %v4567
  %v4569 = vadd.f32 %v4566, %v4568
  %s4570 = scalar_lea.vmem %s4, 30
  %4571 = vst [vmem:[%s4570] sm:$0x3f] %v4569
  %s4572 = scalar_lea.vmem %s0, 108
  %v4573 = vld [vmem:[%s4572] sm:$0xff]
  %v4574 = vld [vmem:[%s4572 + $0x8] sm:$0xff]
  %v4575 = vld [vmem:[%s4572 + $0x10] sm:$0x3]
  %v4577 = vcombine.high %v4569, %v4569
  %v4579 = vunpack.c.l.s4 1983009808
  %v4580 = vunpack.c.0.s8 %v4579
  %v4581 = vlaneseq
  %v4582 = vshrl.u32 %v4581, 7
  %v4583 = vsub.s32 %v4580, %v4582
  %v4584 = vrot.slane %v4569, %v4583
  %v4586 = vunpack.c.l.s4 1983009808
  %v4587 = vunpack.c.0.s8 %v4586
  %v4588 = vlaneseq
  %v4589 = vshrl.u32 %v4588, 7
  %v4590 = vsub.s32 %v4587, %v4589
  %v4591 = vrot.slane %v4577, %v4590
  %v4592 = vcombine.high %v4584, %v4584
  %v4596 = vpack.c.bf16 %v4584, %v4584
  %v4597 = vpack.c.bf16 %v4592, %v4592
  %v4598 = vpack.c.bf16 %v4591, %v4591
  %4599 = vmatprep.subr.bf16.mxu0 %v981
  %4600 = vmatpush1.bf16.msra.mxu0 %v980
  %4601 = vmatprep.subr.bf16.mxu0 %v990
  %4602 = vmatpush1.bf16.msra.mxu0 %v989
  %4603 = vmatprep.subr.bf16.mxu0 %v999
  %4604 = vmatpush1.bf16.msra.mxu0 %v998
  %4605 = vmatprep.subr.bf16.mxu0 %v1008
  %4606 = vmatpush1.bf16.msra.mxu0 %v1007
  %4607 = vmatprep.subr.bf16.mxu0 %v1017
  %4608 = vmatpush1.bf16.msra.mxu0 %v1016
  %4609 = vmatprep.subr.bf16.mxu0 %v1026
  %4610 = vmatpush1.bf16.msra.mxu0 %v1025
  %4611 = vmatprep.subr.bf16.mxu0 %v1035
  %4612 = vmatpush1.bf16.msra.mxu0 %v1034
  %4613 = vmatprep.subr.bf16.mxu0 %v1044
  %4614 = vmatpush1.bf16.msra.mxu0 %v1043
  %4615 = vmatprep.subr.bf16.mxu0 %v1053
  %4616 = vmatpush1.bf16.msra.mxu0 %v1052
  %4617 = vmatprep.subr.bf16.mxu0 %v1062
  %4618 = vmatpush1.bf16.msra.mxu0 %v1061
  %4619 = vmatprep.subr.bf16.mxu0 %v1071
  %4620 = vmatpush1.bf16.msra.mxu0 %v1070
  %4621 = vmatprep.subr.bf16.mxu0 %v1080
  %4622 = vmatpush1.bf16.msra.mxu0 %v1079
  %4623 = vmatprep.subr.bf16.mxu0 %v1089
  %4624 = vmatpush1.bf16.msra.mxu0 %v1088
  %4625 = vmatprep.subr.bf16.mxu0 %v1098
  %4626 = vmatpush1.bf16.msra.mxu0 %v1097
  %4627 = vmatprep.subr.bf16.mxu0 %v1107
  %4628 = vmatpush1.bf16.msra.mxu0 %v1106
  %4629 = vmatprep.subr.bf16.mxu0 %v1116
  %4630 = vmatpush1.bf16.msra.mxu0 %v1115
  %4631 = vmatprep.mubr.bf16.mxu0 %v4597
  %4632 = vmatmul.mubr.bf16.gmra.mrb[0].mxu0 %v4596
  %v4633 = vpop.f32.mrb[0].mxu0
  %v4634 = vadd.f32 0.0, %v4633
  %v4635 = vpop.f32.mrb[0].mxu0
  %v4636 = vadd.f32 0.0, %v4635
  %v4637 = vpop.f32.mrb[0].mxu0
  %v4638 = vpop.f32.mrb[0].mxu0
  %4639 = vdwg.mxu0
  %4640 = vmatprep.subr.bf16.mxu0 %v1125
  %4641 = vmatpush1.bf16.msra.mxu0 %v1124
  %4642 = vmatprep.subr.bf16.mxu0 %v1134
  %4643 = vmatpush1.bf16.msra.mxu0 %v1133
  %4644 = vmatprep.subr.bf16.mxu0 %v1143
  %4645 = vmatpush1.bf16.msra.mxu0 %v1142
  %4646 = vmatprep.subr.bf16.mxu0 %v1152
  %4647 = vmatpush1.bf16.msra.mxu0 %v1151
  %4648 = vmatprep.subr.bf16.mxu0 %v1161
  %4649 = vmatpush1.bf16.msra.mxu0 %v1160
  %4650 = vmatprep.subr.bf16.mxu0 %v1170
  %4651 = vmatpush1.bf16.msra.mxu0 %v1169
  %4652 = vmatprep.subr.bf16.mxu0 %v1179
  %4653 = vmatpush1.bf16.msra.mxu0 %v1178
  %4654 = vmatprep.subr.bf16.mxu0 %v1188
  %4655 = vmatpush1.bf16.msra.mxu0 %v1187
  %4656 = vmatprep.subr.bf16.mxu0 0
  %4657 = vmatpush1.bf16.msra.mxu0 0
  %4658 = vmatprep.subr.bf16.mxu0 0
  %4659 = vmatpush1.bf16.msra.mxu0 0
  %4660 = vmatprep.subr.bf16.mxu0 0
  %4661 = vmatpush1.bf16.msra.mxu0 0
  %4662 = vmatprep.subr.bf16.mxu0 0
  %4663 = vmatpush1.bf16.msra.mxu0 0
  %4664 = vmatprep.subr.bf16.mxu0 0
  %4665 = vmatpush1.bf16.msra.mxu0 0
  %4666 = vmatprep.subr.bf16.mxu0 0
  %4667 = vmatpush1.bf16.msra.mxu0 0
  %4668 = vmatprep.subr.bf16.mxu0 0
  %4669 = vmatpush1.bf16.msra.mxu0 0
  %4670 = vmatprep.subr.bf16.mxu0 0
  %4671 = vmatpush1.bf16.msra.mxu0 0
  %4672 = vmatprep.mubr.bf16.mxu0 0
  %4673 = vmatmul.mubr.bf16.gmra.mrb[0].mxu0 %v4598
  %v4674 = vpop.f32.mrb[0].mxu0
  %v4675 = vadd.f32 %v4634, %v4674
  %v4676 = vpop.f32.mrb[0].mxu0
  %v4677 = vadd.f32 %v4636, %v4676
  %v4678 = vpop.f32.mrb[0].mxu0
  %v4679 = vpop.f32.mrb[0].mxu0
  %4680 = vdwg.mxu0
  %4681 = vmatprep.subr.bf16.mxu0 %v983
  %4682 = vmatpush1.bf16.msra.mxu0 %v982
  %4683 = vmatprep.subr.bf16.mxu0 %v992
  %4684 = vmatpush1.bf16.msra.mxu0 %v991
  %4685 = vmatprep.subr.bf16.mxu0 %v1001
  %4686 = vmatpush1.bf16.msra.mxu0 %v1000
  %4687 = vmatprep.subr.bf16.mxu0 %v1010
  %4688 = vmatpush1.bf16.msra.mxu0 %v1009
  %4689 = vmatprep.subr.bf16.mxu0 %v1019
  %4690 = vmatpush1.bf16.msra.mxu0 %v1018
  %4691 = vmatprep.subr.bf16.mxu0 %v1028
  %4692 = vmatpush1.bf16.msra.mxu0 %v1027
  %4693 = vmatprep.subr.bf16.mxu0 %v1037
  %4694 = vmatpush1.bf16.msra.mxu0 %v1036
  %4695 = vmatprep.subr.bf16.mxu0 %v1046
  %4696 = vmatpush1.bf16.msra.mxu0 %v1045
  %4697 = vmatprep.subr.bf16.mxu0 %v1055
  %4698 = vmatpush1.bf16.msra.mxu0 %v1054
  %4699 = vmatprep.subr.bf16.mxu0 %v1064
  %4700 = vmatpush1.bf16.msra.mxu0 %v1063
  %4701 = vmatprep.subr.bf16.mxu0 %v1073
  %4702 = vmatpush1.bf16.msra.mxu0 %v1072
  %4703 = vmatprep.subr.bf16.mxu0 %v1082
  %4704 = vmatpush1.bf16.msra.mxu0 %v1081
  %4705 = vmatprep.subr.bf16.mxu0 %v1091
  %4706 = vmatpush1.bf16.msra.mxu0 %v1090
  %4707 = vmatprep.subr.bf16.mxu0 %v1100
  %4708 = vmatpush1.bf16.msra.mxu0 %v1099
  %4709 = vmatprep.subr.bf16.mxu0 %v1109
  %4710 = vmatpush1.bf16.msra.mxu0 %v1108
  %4711 = vmatprep.subr.bf16.mxu0 %v1118
  %4712 = vmatpush1.bf16.msra.mxu0 %v1117
  %4713 = vmatprep.mubr.bf16.mxu0 %v4597
  %4714 = vmatmul.mubr.bf16.gmra.mrb[0].mxu0 %v4596
  %v4715 = vpop.f32.mrb[0].mxu0
  %v4716 = vadd.f32 0.0, %v4715
  %v4717 = vpop.f32.mrb[0].mxu0
  %v4718 = vadd.f32 0.0, %v4717
  %v4719 = vpop.f32.mrb[0].mxu0
  %v4720 = vpop.f32.mrb[0].mxu0
  %4721 = vdwg.mxu0
  %4722 = vmatprep.subr.bf16.mxu0 %v1127
  %4723 = vmatpush1.bf16.msra.mxu0 %v1126
  %4724 = vmatprep.subr.bf16.mxu0 %v1136
  %4725 = vmatpush1.bf16.msra.mxu0 %v1135
  %4726 = vmatprep.subr.bf16.mxu0 %v1145
  %4727 = vmatpush1.bf16.msra.mxu0 %v1144
  %4728 = vmatprep.subr.bf16.mxu0 %v1154
  %4729 = vmatpush1.bf16.msra.mxu0 %v1153
  %4730 = vmatprep.subr.bf16.mxu0 %v1163
  %4731 = vmatpush1.bf16.msra.mxu0 %v1162
  %4732 = vmatprep.subr.bf16.mxu0 %v1172
  %4733 = vmatpush1.bf16.msra.mxu0 %v1171
  %4734 = vmatprep.subr.bf16.mxu0 %v1181
  %4735 = vmatpush1.bf16.msra.mxu0 %v1180
  %4736 = vmatprep.subr.bf16.mxu0 %v1190
  %4737 = vmatpush1.bf16.msra.mxu0 %v1189
  %4738 = vmatprep.subr.bf16.mxu0 0
  %4739 = vmatpush1.bf16.msra.mxu0 0
  %4740 = vmatprep.subr.bf16.mxu0 0
  %4741 = vmatpush1.bf16.msra.mxu0 0
  %4742 = vmatprep.subr.bf16.mxu0 0
  %4743 = vmatpush1.bf16.msra.mxu0 0
  %4744 = vmatprep.subr.bf16.mxu0 0
  %4745 = vmatpush1.bf16.msra.mxu0 0
  %4746 = vmatprep.subr.bf16.mxu0 0
  %4747 = vmatpush1.bf16.msra.mxu0 0
  %4748 = vmatprep.subr.bf16.mxu0 0
  %4749 = vmatpush1.bf16.msra.mxu0 0
  %4750 = vmatprep.subr.bf16.mxu0 0
  %4751 = vmatpush1.bf16.msra.mxu0 0
  %4752 = vmatprep.subr.bf16.mxu0 0
  %4753 = vmatpush1.bf16.msra.mxu0 0
  %4754 = vmatprep.mubr.bf16.mxu0 0
  %4755 = vmatmul.mubr.bf16.gmra.mrb[0].mxu0 %v4598
  %v4756 = vpop.f32.mrb[0].mxu0
  %v4757 = vadd.f32 %v4716, %v4756
  %v4758 = vpop.f32.mrb[0].mxu0
  %v4759 = vadd.f32 %v4718, %v4758
  %v4760 = vpop.f32.mrb[0].mxu0
  %v4761 = vpop.f32.mrb[0].mxu0
  %4762 = vdwg.mxu0
  %4763 = vmatprep.subr.bf16.mxu0 %v985
  %4764 = vmatpush1.bf16.msra.mxu0 %v984
  %4765 = vmatprep.subr.bf16.mxu0 %v994
  %4766 = vmatpush1.bf16.msra.mxu0 %v993
  %4767 = vmatprep.subr.bf16.mxu0 %v1003
  %4768 = vmatpush1.bf16.msra.mxu0 %v1002
  %4769 = vmatprep.subr.bf16.mxu0 %v1012
  %4770 = vmatpush1.bf16.msra.mxu0 %v1011
  %4771 = vmatprep.subr.bf16.mxu0 %v1021
  %4772 = vmatpush1.bf16.msra.mxu0 %v1020
  %4773 = vmatprep.subr.bf16.mxu0 %v1030
  %4774 = vmatpush1.bf16.msra.mxu0 %v1029
  %4775 = vmatprep.subr.bf16.mxu0 %v1039
  %4776 = vmatpush1.bf16.msra.mxu0 %v1038
  %4777 = vmatprep.subr.bf16.mxu0 %v1048
  %4778 = vmatpush1.bf16.msra.mxu0 %v1047
  %4779 = vmatprep.subr.bf16.mxu0 %v1057
  %4780 = vmatpush1.bf16.msra.mxu0 %v1056
  %4781 = vmatprep.subr.bf16.mxu0 %v1066
  %4782 = vmatpush1.bf16.msra.mxu0 %v1065
  %4783 = vmatprep.subr.bf16.mxu0 %v1075
  %4784 = vmatpush1.bf16.msra.mxu0 %v1074
  %4785 = vmatprep.subr.bf16.mxu0 %v1084
  %4786 = vmatpush1.bf16.msra.mxu0 %v1083
  %4787 = vmatprep.subr.bf16.mxu0 %v1093
  %4788 = vmatpush1.bf16.msra.mxu0 %v1092
  %4789 = vmatprep.subr.bf16.mxu0 %v1102
  %4790 = vmatpush1.bf16.msra.mxu0 %v1101
  %4791 = vmatprep.subr.bf16.mxu0 %v1111
  %4792 = vmatpush1.bf16.msra.mxu0 %v1110
  %4793 = vmatprep.subr.bf16.mxu0 %v1120
  %4794 = vmatpush1.bf16.msra.mxu0 %v1119
  %4795 = vmatprep.mubr.bf16.mxu0 %v4597
  %4796 = vmatmul.mubr.bf16.gmra.mrb[0].mxu0 %v4596
  %v4797 = vpop.f32.mrb[0].mxu0
  %v4798 = vadd.f32 0.0, %v4797
  %v4799 = vpop.f32.mrb[0].mxu0
  %v4800 = vadd.f32 0.0, %v4799
  %v4801 = vpop.f32.mrb[0].mxu0
  %v4802 = vpop.f32.mrb[0].mxu0
  %4803 = vdwg.mxu0
  %4804 = vmatprep.subr.bf16.mxu0 %v1129
  %4805 = vmatpush1.bf16.msra.mxu0 %v1128
  %4806 = vmatprep.subr.bf16.mxu0 %v1138
  %4807 = vmatpush1.bf16.msra.mxu0 %v1137
  %4808 = vmatprep.subr.bf16.mxu0 %v1147
  %4809 = vmatpush1.bf16.msra.mxu0 %v1146
  %4810 = vmatprep.subr.bf16.mxu0 %v1156
  %4811 = vmatpush1.bf16.msra.mxu0 %v1155
  %4812 = vmatprep.subr.bf16.mxu0 %v1165
  %4813 = vmatpush1.bf16.msra.mxu0 %v1164
  %4814 = vmatprep.subr.bf16.mxu0 %v1174
  %4815 = vmatpush1.bf16.msra.mxu0 %v1173
  %4816 = vmatprep.subr.bf16.mxu0 %v1183
  %4817 = vmatpush1.bf16.msra.mxu0 %v1182
  %4818 = vmatprep.subr.bf16.mxu0 %v1192
  %4819 = vmatpush1.bf16.msra.mxu0 %v1191
  %4820 = vmatprep.subr.bf16.mxu0 0
  %4821 = vmatpush1.bf16.msra.mxu0 0
  %4822 = vmatprep.subr.bf16.mxu0 0
  %4823 = vmatpush1.bf16.msra.mxu0 0
  %4824 = vmatprep.subr.bf16.mxu0 0
  %4825 = vmatpush1.bf16.msra.mxu0 0
  %4826 = vmatprep.subr.bf16.mxu0 0
  %4827 = vmatpush1.bf16.msra.mxu0 0
  %4828 = vmatprep.subr.bf16.mxu0 0
  %4829 = vmatpush1.bf16.msra.mxu0 0
  %4830 = vmatprep.subr.bf16.mxu0 0
  %4831 = vmatpush1.bf16.msra.mxu0 0
  %4832 = vmatprep.subr.bf16.mxu0 0
  %4833 = vmatpush1.bf16.msra.mxu0 0
  %4834 = vmatprep.subr.bf16.mxu0 0
  %4835 = vmatpush1.bf16.msra.mxu0 0
  %4836 = vmatprep.mubr.bf16.mxu0 0
  %4837 = vmatmul.mubr.bf16.gmra.mrb[0].mxu0 %v4598
  %v4838 = vpop.f32.mrb[0].mxu0
  %v4839 = vadd.f32 %v4798, %v4838
  %v4840 = vpop.f32.mrb[0].mxu0
  %v4841 = vadd.f32 %v4800, %v4840
  %v4842 = vpop.f32.mrb[0].mxu0
  %v4843 = vpop.f32.mrb[0].mxu0
  %4844 = vdwg.mxu0
  %4845 = vmatprep.subr.bf16.mxu0 %v987
  %4846 = vmatpush1.bf16.msra.mxu0 %v986
  %4847 = vmatprep.subr.bf16.mxu0 %v996
  %4848 = vmatpush1.bf16.msra.mxu0 %v995
  %4849 = vmatprep.subr.bf16.mxu0 %v1005
  %4850 = vmatpush1.bf16.msra.mxu0 %v1004
  %4851 = vmatprep.subr.bf16.mxu0 %v1014
  %4852 = vmatpush1.bf16.msra.mxu0 %v1013
  %4853 = vmatprep.subr.bf16.mxu0 %v1023
  %4854 = vmatpush1.bf16.msra.mxu0 %v1022
  %4855 = vmatprep.subr.bf16.mxu0 %v1032
  %4856 = vmatpush1.bf16.msra.mxu0 %v1031
  %4857 = vmatprep.subr.bf16.mxu0 %v1041
  %4858 = vmatpush1.bf16.msra.mxu0 %v1040
  %4859 = vmatprep.subr.bf16.mxu0 %v1050
  %4860 = vmatpush1.bf16.msra.mxu0 %v1049
  %4861 = vmatprep.subr.bf16.mxu0 %v1059
  %4862 = vmatpush1.bf16.msra.mxu0 %v1058
  %4863 = vmatprep.subr.bf16.mxu0 %v1068
  %4864 = vmatpush1.bf16.msra.mxu0 %v1067
  %4865 = vmatprep.subr.bf16.mxu0 %v1077
  %4866 = vmatpush1.bf16.msra.mxu0 %v1076
  %4867 = vmatprep.subr.bf16.mxu0 %v1086
  %4868 = vmatpush1.bf16.msra.mxu0 %v1085
  %4869 = vmatprep.subr.bf16.mxu0 %v1095
  %4870 = vmatpush1.bf16.msra.mxu0 %v1094
  %4871 = vmatprep.subr.bf16.mxu0 %v1104
  %4872 = vmatpush1.bf16.msra.mxu0 %v1103
  %4873 = vmatprep.subr.bf16.mxu0 %v1113
  %4874 = vmatpush1.bf16.msra.mxu0 %v1112
  %4875 = vmatprep.subr.bf16.mxu0 %v1122
  %4876 = vmatpush1.bf16.msra.mxu0 %v1121
  %4877 = vmatprep.mubr.bf16.mxu0 %v4597
  %4878 = vmatmul.mubr.bf16.gmra.mrb[0].mxu0 %v4596
  %v4879 = vpop.f32.mrb[0].mxu0
  %v4880 = vadd.f32 0.0, %v4879
  %v4881 = vpop.f32.mrb[0].mxu0
  %v4882 = vadd.f32 0.0, %v4881
  %v4883 = vpop.f32.mrb[0].mxu0
  %v4884 = vpop.f32.mrb[0].mxu0
  %4885 = vdwg.mxu0
  %4886 = vmatprep.subr.bf16.mxu0 %v1131
  %4887 = vmatpush1.bf16.msra.mxu0 %v1130
  %4888 = vmatprep.subr.bf16.mxu0 %v1140
  %4889 = vmatpush1.bf16.msra.mxu0 %v1139
  %4890 = vmatprep.subr.bf16.mxu0 %v1149
  %4891 = vmatpush1.bf16.msra.mxu0 %v1148
  %4892 = vmatprep.subr.bf16.mxu0 %v1158
  %4893 = vmatpush1.bf16.msra.mxu0 %v1157
  %4894 = vmatprep.subr.bf16.mxu0 %v1167
  %4895 = vmatpush1.bf16.msra.mxu0 %v1166
  %4896 = vmatprep.subr.bf16.mxu0 %v1176
  %4897 = vmatpush1.bf16.msra.mxu0 %v1175
  %4898 = vmatprep.subr.bf16.mxu0 %v1185
  %4899 = vmatpush1.bf16.msra.mxu0 %v1184
  %4900 = vmatprep.subr.bf16.mxu0 %v1194
  %4901 = vmatpush1.bf16.msra.mxu0 %v1193
  %4902 = vmatprep.subr.bf16.mxu0 0
  %4903 = vmatpush1.bf16.msra.mxu0 0
  %4904 = vmatprep.subr.bf16.mxu0 0
  %4905 = vmatpush1.bf16.msra.mxu0 0
  %4906 = vmatprep.subr.bf16.mxu0 0
  %4907 = vmatpush1.bf16.msra.mxu0 0
  %4908 = vmatprep.subr.bf16.mxu0 0
  %4909 = vmatpush1.bf16.msra.mxu0 0
  %4910 = vmatprep.subr.bf16.mxu0 0
  %4911 = vmatpush1.bf16.msra.mxu0 0
  %4912 = vmatprep.subr.bf16.mxu0 0
  %4913 = vmatpush1.bf16.msra.mxu0 0
  %4914 = vmatprep.subr.bf16.mxu0 0
  %4915 = vmatpush1.bf16.msra.mxu0 0
  %4916 = vmatprep.subr.bf16.mxu0 0
  %4917 = vmatpush1.bf16.msra.mxu0 0
  %4918 = vmatprep.mubr.bf16.mxu0 0
  %4919 = vmatmul.mubr.bf16.gmra.mrb[0].mxu0 %v4598
  %v4920 = vpop.f32.mrb[0].mxu0
  %v4921 = vadd.f32 %v4880, %v4920
  %v4922 = vpop.f32.mrb[0].mxu0
  %v4923 = vadd.f32 %v4882, %v4922
  %v4924 = vpop.f32.mrb[0].mxu0
  %v4925 = vpop.f32.mrb[0].mxu0
  %4926 = vdwg.mxu0
  %4927 = vmatprep.subr.bf16.mxu0 0
  %4928 = vmatpush1.bf16.msra.mxu0 %v988
  %4929 = vmatprep.subr.bf16.mxu0 0
  %4930 = vmatpush1.bf16.msra.mxu0 %v997
  %4931 = vmatprep.subr.bf16.mxu0 0
  %4932 = vmatpush1.bf16.msra.mxu0 %v1006
  %4933 = vmatprep.subr.bf16.mxu0 0
  %4934 = vmatpush1.bf16.msra.mxu0 %v1015
  %4935 = vmatprep.subr.bf16.mxu0 0
  %4936 = vmatpush1.bf16.msra.mxu0 %v1024
  %4937 = vmatprep.subr.bf16.mxu0 0
  %4938 = vmatpush1.bf16.msra.mxu0 %v1033
  %4939 = vmatprep.subr.bf16.mxu0 0
  %4940 = vmatpush1.bf16.msra.mxu0 %v1042
  %4941 = vmatprep.subr.bf16.mxu0 0
  %4942 = vmatpush1.bf16.msra.mxu0 %v1051
  %4943 = vmatprep.subr.bf16.mxu0 0
  %4944 = vmatpush1.bf16.msra.mxu0 %v1060
  %4945 = vmatprep.subr.bf16.mxu0 0
  %4946 = vmatpush1.bf16.msra.mxu0 %v1069
  %4947 = vmatprep.subr.bf16.mxu0 0
  %4948 = vmatpush1.bf16.msra.mxu0 %v1078
  %4949 = vmatprep.subr.bf16.mxu0 0
  %4950 = vmatpush1.bf16.msra.mxu0 %v1087
  %4951 = vmatprep.subr.bf16.mxu0 0
  %4952 = vmatpush1.bf16.msra.mxu0 %v1096
  %4953 = vmatprep.subr.bf16.mxu0 0
  %4954 = vmatpush1.bf16.msra.mxu0 %v1105
  %4955 = vmatprep.subr.bf16.mxu0 0
  %4956 = vmatpush1.bf16.msra.mxu0 %v1114
  %4957 = vmatprep.subr.bf16.mxu0 0
  %4958 = vmatpush1.bf16.msra.mxu0 %v1123
  %4959 = vmatprep.mubr.bf16.mxu0 %v4597
  %4960 = vmatmul.mubr.bf16.gmra.mrb[0].mxu0 %v4596
  %v4961 = vpop.f32.mrb[0].mxu0
  %v4962 = vadd.f32 0.0, %v4961
  %v4963 = vpop.f32.mrb[0].mxu0
  %v4964 = vpop.f32.mrb[0].mxu0
  %v4965 = vpop.f32.mrb[0].mxu0
  %4966 = vdwg.mxu0
  %4967 = vmatprep.subr.bf16.mxu0 0
  %4968 = vmatpush1.bf16.msra.mxu0 %v1132
  %4969 = vmatprep.subr.bf16.mxu0 0
  %4970 = vmatpush1.bf16.msra.mxu0 %v1141
  %4971 = vmatprep.subr.bf16.mxu0 0
  %4972 = vmatpush1.bf16.msra.mxu0 %v1150
  %4973 = vmatprep.subr.bf16.mxu0 0
  %4974 = vmatpush1.bf16.msra.mxu0 %v1159
  %4975 = vmatprep.subr.bf16.mxu0 0
  %4976 = vmatpush1.bf16.msra.mxu0 %v1168
  %4977 = vmatprep.subr.bf16.mxu0 0
  %4978 = vmatpush1.bf16.msra.mxu0 %v1177
  %4979 = vmatprep.subr.bf16.mxu0 0
  %4980 = vmatpush1.bf16.msra.mxu0 %v1186
  %4981 = vmatprep.subr.bf16.mxu0 0
  %4982 = vmatpush1.bf16.msra.mxu0 %v1195
  %4983 = vmatprep.subr.bf16.mxu0 0
  %4984 = vmatpush1.bf16.msra.mxu0 0
  %4985 = vmatprep.subr.bf16.mxu0 0
  %4986 = vmatpush1.bf16.msra.mxu0 0
  %4987 = vmatprep.subr.bf16.mxu0 0
  %4988 = vmatpush1.bf16.msra.mxu0 0
  %4989 = vmatprep.subr.bf16.mxu0 0
  %4990 = vmatpush1.bf16.msra.mxu0 0
  %4991 = vmatprep.subr.bf16.mxu0 0
  %4992 = vmatpush1.bf16.msra.mxu0 0
  %4993 = vmatprep.subr.bf16.mxu0 0
  %4994 = vmatpush1.bf16.msra.mxu0 0
  %4995 = vmatprep.subr.bf16.mxu0 0
  %4996 = vmatpush1.bf16.msra.mxu0 0
  %4997 = vmatprep.subr.bf16.mxu0 0
  %4998 = vmatpush1.bf16.msra.mxu0 0
  %4999 = vmatprep.mubr.bf16.mxu0 0
  %5000 = vmatmul.mubr.bf16.gmra.mrb[0].mxu0 %v4598
  %v5001 = vpop.f32.mrb[0].mxu0
  %v5002 = vadd.f32 %v4962, %v5001
  %v5003 = vpop.f32.mrb[0].mxu0
  %v5004 = vpop.f32.mrb[0].mxu0
  %v5005 = vpop.f32.mrb[0].mxu0
  %5006 = vdwg.mxu0
  %v5010 = vcombine.low %v4675, %v4677
  %v5012 = vunpack.c.l.s4 1983009808
  %v5013 = vunpack.c.0.s8 %v5012
  %v5014 = vlaneseq
  %v5015 = vshrl.u32 %v5014, 7
  %v5016 = vsub.s32 %v5013, %v5015
  %v5017 = vrot.slane %v5010, %v5016
  %v5019 = vunpack.c.l.s4 1983009808
  %v5020 = vunpack.c.0.s8 %v5019
  %v5021 = vlaneseq
  %v5022 = vshrl.u32 %v5021, 7
  %v5023 = vsub.s32 %v5020, %v5022
  %v5024 = vrot.slane %v4757, %v5023
  %v5025 = vcombine.low %v5017, %v5024
  %v5027 = vadd.f32 %v4573, %v5025
  %v5028 = vxor.u32 %v5027, 2147483648
  %v5029 = vmul.f32 %v5028, 1.442695
  %v5030 = vpow.pop %v5029
  %v5031 = vadd.f32 %v5030, 1.0
  %v5032 = vrcp.pop %v5031
  %v5033 = vmul.f32 1.0, %v5032
  %v5036 = vrot.slane %v4573, 6
  %v5037 = vrot.slane %v4574, 6
  %v5038 = vsel %vm1851, %v5036, %v5037
  %v5043 = vcombine.low %v4759, %v4839
  %v5045 = vunpack.c.l.s4 1983009808
  %v5046 = vunpack.c.0.s8 %v5045
  %v5047 = vlaneseq
  %v5048 = vshrl.u32 %v5047, 7
  %v5049 = vsub.s32 %v5046, %v5048
  %v5050 = vrot.slane %v5043, %v5049
  %v5052 = vunpack.c.l.s4 1983009808
  %v5053 = vunpack.c.0.s8 %v5052
  %v5054 = vlaneseq
  %v5055 = vshrl.u32 %v5054, 7
  %v5056 = vsub.s32 %v5053, %v5055
  %v5057 = vrot.slane %v4841, %v5056
  %v5058 = vcombine.low %v5050, %v5057
  %v5060 = vadd.f32 %v5038, %v5058
  %v5061 = vxor.u32 %v5060, 2147483648
  %v5062 = vmul.f32 %v5061, 1.442695
  %v5063 = vpow.pop %v5062
  %v5064 = vadd.f32 %v5063, 1.0
  %v5065 = vrcp.pop %v5064
  %v5066 = vmul.f32 1.0, %v5065
  %v5067 = vadd.f32 %v4921, %v269
  %v5068 = vadd.f32 %v4923, %v273
  %v5069 = vadd.f32 %v5002, %v277
  %v5073 = vcombine.low %v5067, %v5068
  %v5075 = vunpack.c.l.s4 1983009808
  %v5076 = vunpack.c.0.s8 %v5075
  %v5077 = vlaneseq
  %v5078 = vshrl.u32 %v5077, 7
  %v5079 = vsub.s32 %v5076, %v5078
  %v5080 = vrot.slane %v5073, %v5079
  %v5082 = vunpack.c.l.s4 1983009808
  %v5083 = vunpack.c.0.s8 %v5082
  %v5084 = vlaneseq
  %v5085 = vshrl.u32 %v5084, 7
  %v5086 = vsub.s32 %v5083, %v5085
  %v5087 = vrot.slane %v5069, %v5086
  %v5088 = vcombine.low %v5080, %v5087
  %v5090 = vmul.f32 %v5033, %v5088
  %v5092 = vrot.slane %v4574, 4
  %v5093 = vrot.slane %v4575, 4
  %v5094 = vsel %vm1908, %v5092, %v5093
  %v5096 = vadd.f32 %v5094, %v5090
  %v5097 = vtanh.pop %v5096
  %v5098 = vsub.f32 %v4569, %v5097
  %v5099 = vmul.f32 %v5066, %v5098
  %v5100 = vadd.f32 %v5097, %v5099
  %s5101 = scalar_lea.vmem %s4, 36
  %5102 = vst [vmem:[%s5101] sm:$0x3f] %v5100
  %s5103 = scalar_lea.vmem %s0, 126
  %v5104 = vld [vmem:[%s5103] sm:$0xff]
  %v5105 = vld [vmem:[%s5103 + $0x8] sm:$0xff]
  %v5106 = vld [vmem:[%s5103 + $0x10] sm:$0x3]
  %v5108 = vcombine.high %v5100, %v5100
  %v5110 = vunpack.c.l.s4 1983009808
  %v5111 = vunpack.c.0.s8 %v5110
  %v5112 = vlaneseq
  %v5113 = vshrl.u32 %v5112, 7
  %v5114 = vsub.s32 %v5111, %v5113
  %v5115 = vrot.slane %v5100, %v5114
  %v5117 = vunpack.c.l.s4 1983009808
  %v5118 = vunpack.c.0.s8 %v5117
  %v5119 = vlaneseq
  %v5120 = vshrl.u32 %v5119, 7
  %v5121 = vsub.s32 %v5118, %v5120
  %v5122 = vrot.slane %v5108, %v5121
  %v5123 = vcombine.high %v5115, %v5115
  %v5127 = vpack.c.bf16 %v5115, %v5115
  %v5128 = vpack.c.bf16 %v5123, %v5123
  %v5129 = vpack.c.bf16 %v5122, %v5122
  %5130 = vmatprep.subr.bf16.mxu0 %v981
  %5131 = vmatpush1.bf16.msra.mxu0 %v980
  %5132 = vmatprep.subr.bf16.mxu0 %v990
  %5133 = vmatpush1.bf16.msra.mxu0 %v989
  %5134 = vmatprep.subr.bf16.mxu0 %v999
  %5135 = vmatpush1.bf16.msra.mxu0 %v998
  %5136 = vmatprep.subr.bf16.mxu0 %v1008
  %5137 = vmatpush1.bf16.msra.mxu0 %v1007
  %5138 = vmatprep.subr.bf16.mxu0 %v1017
  %5139 = vmatpush1.bf16.msra.mxu0 %v1016
  %5140 = vmatprep.subr.bf16.mxu0 %v1026
  %5141 = vmatpush1.bf16.msra.mxu0 %v1025
  %5142 = vmatprep.subr.bf16.mxu0 %v1035
  %5143 = vmatpush1.bf16.msra.mxu0 %v1034
  %5144 = vmatprep.subr.bf16.mxu0 %v1044
  %5145 = vmatpush1.bf16.msra.mxu0 %v1043
  %5146 = vmatprep.subr.bf16.mxu0 %v1053
  %5147 = vmatpush1.bf16.msra.mxu0 %v1052
  %5148 = vmatprep.subr.bf16.mxu0 %v1062
  %5149 = vmatpush1.bf16.msra.mxu0 %v1061
  %5150 = vmatprep.subr.bf16.mxu0 %v1071
  %5151 = vmatpush1.bf16.msra.mxu0 %v1070
  %5152 = vmatprep.subr.bf16.mxu0 %v1080
  %5153 = vmatpush1.bf16.msra.mxu0 %v1079
  %5154 = vmatprep.subr.bf16.mxu0 %v1089
  %5155 = vmatpush1.bf16.msra.mxu0 %v1088
  %5156 = vmatprep.subr.bf16.mxu0 %v1098
  %5157 = vmatpush1.bf16.msra.mxu0 %v1097
  %5158 = vmatprep.subr.bf16.mxu0 %v1107
  %5159 = vmatpush1.bf16.msra.mxu0 %v1106
  %5160 = vmatprep.subr.bf16.mxu0 %v1116
  %5161 = vmatpush1.bf16.msra.mxu0 %v1115
  %5162 = vmatprep.mubr.bf16.mxu0 %v5128
  %5163 = vmatmul.mubr.bf16.gmra.mrb[0].mxu0 %v5127
  %v5164 = vpop.f32.mrb[0].mxu0
  %v5165 = vadd.f32 0.0, %v5164
  %v5166 = vpop.f32.mrb[0].mxu0
  %v5167 = vadd.f32 0.0, %v5166
  %v5168 = vpop.f32.mrb[0].mxu0
  %v5169 = vpop.f32.mrb[0].mxu0
  %5170 = vdwg.mxu0
  %5171 = vmatprep.subr.bf16.mxu0 %v1125
  %5172 = vmatpush1.bf16.msra.mxu0 %v1124
  %5173 = vmatprep.subr.bf16.mxu0 %v1134
  %5174 = vmatpush1.bf16.msra.mxu0 %v1133
  %5175 = vmatprep.subr.bf16.mxu0 %v1143
  %5176 = vmatpush1.bf16.msra.mxu0 %v1142
  %5177 = vmatprep.subr.bf16.mxu0 %v1152
  %5178 = vmatpush1.bf16.msra.mxu0 %v1151
  %5179 = vmatprep.subr.bf16.mxu0 %v1161
  %5180 = vmatpush1.bf16.msra.mxu0 %v1160
  %5181 = vmatprep.subr.bf16.mxu0 %v1170
  %5182 = vmatpush1.bf16.msra.mxu0 %v1169
  %5183 = vmatprep.subr.bf16.mxu0 %v1179
  %5184 = vmatpush1.bf16.msra.mxu0 %v1178
  %5185 = vmatprep.subr.bf16.mxu0 %v1188
  %5186 = vmatpush1.bf16.msra.mxu0 %v1187
  %5187 = vmatprep.subr.bf16.mxu0 0
  %5188 = vmatpush1.bf16.msra.mxu0 0
  %5189 = vmatprep.subr.bf16.mxu0 0
  %5190 = vmatpush1.bf16.msra.mxu0 0
  %5191 = vmatprep.subr.bf16.mxu0 0
  %5192 = vmatpush1.bf16.msra.mxu0 0
  %5193 = vmatprep.subr.bf16.mxu0 0
  %5194 = vmatpush1.bf16.msra.mxu0 0
  %5195 = vmatprep.subr.bf16.mxu0 0
  %5196 = vmatpush1.bf16.msra.mxu0 0
  %5197 = vmatprep.subr.bf16.mxu0 0
  %5198 = vmatpush1.bf16.msra.mxu0 0
  %5199 = vmatprep.subr.bf16.mxu0 0
  %5200 = vmatpush1.bf16.msra.mxu0 0
  %5201 = vmatprep.subr.bf16.mxu0 0
  %5202 = vmatpush1.bf16.msra.mxu0 0
  %5203 = vmatprep.mubr.bf16.mxu0 0
  %5204 = vmatmul.mubr.bf16.gmra.mrb[0].mxu0 %v5129
  %v5205 = vpop.f32.mrb[0].mxu0
  %v5206 = vadd.f32 %v5165, %v5205
  %v5207 = vpop.f32.mrb[0].mxu0
  %v5208 = vadd.f32 %v5167, %v5207
  %v5209 = vpop.f32.mrb[0].mxu0
  %v5210 = vpop.f32.mrb[0].mxu0
  %5211 = vdwg.mxu0
  %5212 = vmatprep.subr.bf16.mxu0 %v983
  %5213 = vmatpush1.bf16.msra.mxu0 %v982
  %5214 = vmatprep.subr.bf16.mxu0 %v992
  %5215 = vmatpush1.bf16.msra.mxu0 %v991
  %5216 = vmatprep.subr.bf16.mxu0 %v1001
  %5217 = vmatpush1.bf16.msra.mxu0 %v1000
  %5218 = vmatprep.subr.bf16.mxu0 %v1010
  %5219 = vmatpush1.bf16.msra.mxu0 %v1009
  %5220 = vmatprep.subr.bf16.mxu0 %v1019
  %5221 = vmatpush1.bf16.msra.mxu0 %v1018
  %5222 = vmatprep.subr.bf16.mxu0 %v1028
  %5223 = vmatpush1.bf16.msra.mxu0 %v1027
  %5224 = vmatprep.subr.bf16.mxu0 %v1037
  %5225 = vmatpush1.bf16.msra.mxu0 %v1036
  %5226 = vmatprep.subr.bf16.mxu0 %v1046
  %5227 = vmatpush1.bf16.msra.mxu0 %v1045
  %5228 = vmatprep.subr.bf16.mxu0 %v1055
  %5229 = vmatpush1.bf16.msra.mxu0 %v1054
  %5230 = vmatprep.subr.bf16.mxu0 %v1064
  %5231 = vmatpush1.bf16.msra.mxu0 %v1063
  %5232 = vmatprep.subr.bf16.mxu0 %v1073
  %5233 = vmatpush1.bf16.msra.mxu0 %v1072
  %5234 = vmatprep.subr.bf16.mxu0 %v1082
  %5235 = vmatpush1.bf16.msra.mxu0 %v1081
  %5236 = vmatprep.subr.bf16.mxu0 %v1091
  %5237 = vmatpush1.bf16.msra.mxu0 %v1090
  %5238 = vmatprep.subr.bf16.mxu0 %v1100
  %5239 = vmatpush1.bf16.msra.mxu0 %v1099
  %5240 = vmatprep.subr.bf16.mxu0 %v1109
  %5241 = vmatpush1.bf16.msra.mxu0 %v1108
  %5242 = vmatprep.subr.bf16.mxu0 %v1118
  %5243 = vmatpush1.bf16.msra.mxu0 %v1117
  %5244 = vmatprep.mubr.bf16.mxu0 %v5128
  %5245 = vmatmul.mubr.bf16.gmra.mrb[0].mxu0 %v5127
  %v5246 = vpop.f32.mrb[0].mxu0
  %v5247 = vadd.f32 0.0, %v5246
  %v5248 = vpop.f32.mrb[0].mxu0
  %v5249 = vadd.f32 0.0, %v5248
  %v5250 = vpop.f32.mrb[0].mxu0
  %v5251 = vpop.f32.mrb[0].mxu0
  %5252 = vdwg.mxu0
  %5253 = vmatprep.subr.bf16.mxu0 %v1127
  %5254 = vmatpush1.bf16.msra.mxu0 %v1126
  %5255 = vmatprep.subr.bf16.mxu0 %v1136
  %5256 = vmatpush1.bf16.msra.mxu0 %v1135
  %5257 = vmatprep.subr.bf16.mxu0 %v1145
  %5258 = vmatpush1.bf16.msra.mxu0 %v1144
  %5259 = vmatprep.subr.bf16.mxu0 %v1154
  %5260 = vmatpush1.bf16.msra.mxu0 %v1153
  %5261 = vmatprep.subr.bf16.mxu0 %v1163
  %5262 = vmatpush1.bf16.msra.mxu0 %v1162
  %5263 = vmatprep.subr.bf16.mxu0 %v1172
  %5264 = vmatpush1.bf16.msra.mxu0 %v1171
  %5265 = vmatprep.subr.bf16.mxu0 %v1181
  %5266 = vmatpush1.bf16.msra.mxu0 %v1180
  %5267 = vmatprep.subr.bf16.mxu0 %v1190
  %5268 = vmatpush1.bf16.msra.mxu0 %v1189
  %5269 = vmatprep.subr.bf16.mxu0 0
  %5270 = vmatpush1.bf16.msra.mxu0 0
  %5271 = vmatprep.subr.bf16.mxu0 0
  %5272 = vmatpush1.bf16.msra.mxu0 0
  %5273 = vmatprep.subr.bf16.mxu0 0
  %5274 = vmatpush1.bf16.msra.mxu0 0
  %5275 = vmatprep.subr.bf16.mxu0 0
  %5276 = vmatpush1.bf16.msra.mxu0 0
  %5277 = vmatprep.subr.bf16.mxu0 0
  %5278 = vmatpush1.bf16.msra.mxu0 0
  %5279 = vmatprep.subr.bf16.mxu0 0
  %5280 = vmatpush1.bf16.msra.mxu0 0
  %5281 = vmatprep.subr.bf16.mxu0 0
  %5282 = vmatpush1.bf16.msra.mxu0 0
  %5283 = vmatprep.subr.bf16.mxu0 0
  %5284 = vmatpush1.bf16.msra.mxu0 0
  %5285 = vmatprep.mubr.bf16.mxu0 0
  %5286 = vmatmul.mubr.bf16.gmra.mrb[0].mxu0 %v5129
  %v5287 = vpop.f32.mrb[0].mxu0
  %v5288 = vadd.f32 %v5247, %v5287
  %v5289 = vpop.f32.mrb[0].mxu0
  %v5290 = vadd.f32 %v5249, %v5289
  %v5291 = vpop.f32.mrb[0].mxu0
  %v5292 = vpop.f32.mrb[0].mxu0
  %5293 = vdwg.mxu0
  %5294 = vmatprep.subr.bf16.mxu0 %v985
  %5295 = vmatpush1.bf16.msra.mxu0 %v984
  %5296 = vmatprep.subr.bf16.mxu0 %v994
  %5297 = vmatpush1.bf16.msra.mxu0 %v993
  %5298 = vmatprep.subr.bf16.mxu0 %v1003
  %5299 = vmatpush1.bf16.msra.mxu0 %v1002
  %5300 = vmatprep.subr.bf16.mxu0 %v1012
  %5301 = vmatpush1.bf16.msra.mxu0 %v1011
  %5302 = vmatprep.subr.bf16.mxu0 %v1021
  %5303 = vmatpush1.bf16.msra.mxu0 %v1020
  %5304 = vmatprep.subr.bf16.mxu0 %v1030
  %5305 = vmatpush1.bf16.msra.mxu0 %v1029
  %5306 = vmatprep.subr.bf16.mxu0 %v1039
  %5307 = vmatpush1.bf16.msra.mxu0 %v1038
  %5308 = vmatprep.subr.bf16.mxu0 %v1048
  %5309 = vmatpush1.bf16.msra.mxu0 %v1047
  %5310 = vmatprep.subr.bf16.mxu0 %v1057
  %5311 = vmatpush1.bf16.msra.mxu0 %v1056
  %5312 = vmatprep.subr.bf16.mxu0 %v1066
  %5313 = vmatpush1.bf16.msra.mxu0 %v1065
  %5314 = vmatprep.subr.bf16.mxu0 %v1075
  %5315 = vmatpush1.bf16.msra.mxu0 %v1074
  %5316 = vmatprep.subr.bf16.mxu0 %v1084
  %5317 = vmatpush1.bf16.msra.mxu0 %v1083
  %5318 = vmatprep.subr.bf16.mxu0 %v1093
  %5319 = vmatpush1.bf16.msra.mxu0 %v1092
  %5320 = vmatprep.subr.bf16.mxu0 %v1102
  %5321 = vmatpush1.bf16.msra.mxu0 %v1101
  %5322 = vmatprep.subr.bf16.mxu0 %v1111
  %5323 = vmatpush1.bf16.msra.mxu0 %v1110
  %5324 = vmatprep.subr.bf16.mxu0 %v1120
  %5325 = vmatpush1.bf16.msra.mxu0 %v1119
  %5326 = vmatprep.mubr.bf16.mxu0 %v5128
  %5327 = vmatmul.mubr.bf16.gmra.mrb[0].mxu0 %v5127
  %v5328 = vpop.f32.mrb[0].mxu0
  %v5329 = vadd.f32 0.0, %v5328
  %v5330 = vpop.f32.mrb[0].mxu0
  %v5331 = vadd.f32 0.0, %v5330
  %v5332 = vpop.f32.mrb[0].mxu0
  %v5333 = vpop.f32.mrb[0].mxu0
  %5334 = vdwg.mxu0
  %5335 = vmatprep.subr.bf16.mxu0 %v1129
  %5336 = vmatpush1.bf16.msra.mxu0 %v1128
  %5337 = vmatprep.subr.bf16.mxu0 %v1138
  %5338 = vmatpush1.bf16.msra.mxu0 %v1137
  %5339 = vmatprep.subr.bf16.mxu0 %v1147
  %5340 = vmatpush1.bf16.msra.mxu0 %v1146
  %5341 = vmatprep.subr.bf16.mxu0 %v1156
  %5342 = vmatpush1.bf16.msra.mxu0 %v1155
  %5343 = vmatprep.subr.bf16.mxu0 %v1165
  %5344 = vmatpush1.bf16.msra.mxu0 %v1164
  %5345 = vmatprep.subr.bf16.mxu0 %v1174
  %5346 = vmatpush1.bf16.msra.mxu0 %v1173
  %5347 = vmatprep.subr.bf16.mxu0 %v1183
  %5348 = vmatpush1.bf16.msra.mxu0 %v1182
  %5349 = vmatprep.subr.bf16.mxu0 %v1192
  %5350 = vmatpush1.bf16.msra.mxu0 %v1191
  %5351 = vmatprep.subr.bf16.mxu0 0
  %5352 = vmatpush1.bf16.msra.mxu0 0
  %5353 = vmatprep.subr.bf16.mxu0 0
  %5354 = vmatpush1.bf16.msra.mxu0 0
  %5355 = vmatprep.subr.bf16.mxu0 0
  %5356 = vmatpush1.bf16.msra.mxu0 0
  %5357 = vmatprep.subr.bf16.mxu0 0
  %5358 = vmatpush1.bf16.msra.mxu0 0
  %5359 = vmatprep.subr.bf16.mxu0 0
  %5360 = vmatpush1.bf16.msra.mxu0 0
  %5361 = vmatprep.subr.bf16.mxu0 0
  %5362 = vmatpush1.bf16.msra.mxu0 0
  %5363 = vmatprep.subr.bf16.mxu0 0
  %5364 = vmatpush1.bf16.msra.mxu0 0
  %5365 = vmatprep.subr.bf16.mxu0 0
  %5366 = vmatpush1.bf16.msra.mxu0 0
  %5367 = vmatprep.mubr.bf16.mxu0 0
  %5368 = vmatmul.mubr.bf16.gmra.mrb[0].mxu0 %v5129
  %v5369 = vpop.f32.mrb[0].mxu0
  %v5370 = vadd.f32 %v5329, %v5369
  %v5371 = vpop.f32.mrb[0].mxu0
  %v5372 = vadd.f32 %v5331, %v5371
  %v5373 = vpop.f32.mrb[0].mxu0
  %v5374 = vpop.f32.mrb[0].mxu0
  %5375 = vdwg.mxu0
  %5376 = vmatprep.subr.bf16.mxu0 %v987
  %5377 = vmatpush1.bf16.msra.mxu0 %v986
  %5378 = vmatprep.subr.bf16.mxu0 %v996
  %5379 = vmatpush1.bf16.msra.mxu0 %v995
  %5380 = vmatprep.subr.bf16.mxu0 %v1005
  %5381 = vmatpush1.bf16.msra.mxu0 %v1004
  %5382 = vmatprep.subr.bf16.mxu0 %v1014
  %5383 = vmatpush1.bf16.msra.mxu0 %v1013
  %5384 = vmatprep.subr.bf16.mxu0 %v1023
  %5385 = vmatpush1.bf16.msra.mxu0 %v1022
  %5386 = vmatprep.subr.bf16.mxu0 %v1032
  %5387 = vmatpush1.bf16.msra.mxu0 %v1031
  %5388 = vmatprep.subr.bf16.mxu0 %v1041
  %5389 = vmatpush1.bf16.msra.mxu0 %v1040
  %5390 = vmatprep.subr.bf16.mxu0 %v1050
  %5391 = vmatpush1.bf16.msra.mxu0 %v1049
  %5392 = vmatprep.subr.bf16.mxu0 %v1059
  %5393 = vmatpush1.bf16.msra.mxu0 %v1058
  %5394 = vmatprep.subr.bf16.mxu0 %v1068
  %5395 = vmatpush1.bf16.msra.mxu0 %v1067
  %5396 = vmatprep.subr.bf16.mxu0 %v1077
  %5397 = vmatpush1.bf16.msra.mxu0 %v1076
  %5398 = vmatprep.subr.bf16.mxu0 %v1086
  %5399 = vmatpush1.bf16.msra.mxu0 %v1085
  %5400 = vmatprep.subr.bf16.mxu0 %v1095
  %5401 = vmatpush1.bf16.msra.mxu0 %v1094
  %5402 = vmatprep.subr.bf16.mxu0 %v1104
  %5403 = vmatpush1.bf16.msra.mxu0 %v1103
  %5404 = vmatprep.subr.bf16.mxu0 %v1113
  %5405 = vmatpush1.bf16.msra.mxu0 %v1112
  %5406 = vmatprep.subr.bf16.mxu0 %v1122
  %5407 = vmatpush1.bf16.msra.mxu0 %v1121
  %5408 = vmatprep.mubr.bf16.mxu0 %v5128
  %5409 = vmatmul.mubr.bf16.gmra.mrb[0].mxu0 %v5127
  %v5410 = vpop.f32.mrb[0].mxu0
  %v5411 = vadd.f32 0.0, %v5410
  %v5412 = vpop.f32.mrb[0].mxu0
  %v5413 = vadd.f32 0.0, %v5412
  %v5414 = vpop.f32.mrb[0].mxu0
  %v5415 = vpop.f32.mrb[0].mxu0
  %5416 = vdwg.mxu0
  %5417 = vmatprep.subr.bf16.mxu0 %v1131
  %5418 = vmatpush1.bf16.msra.mxu0 %v1130
  %5419 = vmatprep.subr.bf16.mxu0 %v1140
  %5420 = vmatpush1.bf16.msra.mxu0 %v1139
  %5421 = vmatprep.subr.bf16.mxu0 %v1149
  %5422 = vmatpush1.bf16.msra.mxu0 %v1148
  %5423 = vmatprep.subr.bf16.mxu0 %v1158
  %5424 = vmatpush1.bf16.msra.mxu0 %v1157
  %5425 = vmatprep.subr.bf16.mxu0 %v1167
  %5426 = vmatpush1.bf16.msra.mxu0 %v1166
  %5427 = vmatprep.subr.bf16.mxu0 %v1176
  %5428 = vmatpush1.bf16.msra.mxu0 %v1175
  %5429 = vmatprep.subr.bf16.mxu0 %v1185
  %5430 = vmatpush1.bf16.msra.mxu0 %v1184
  %5431 = vmatprep.subr.bf16.mxu0 %v1194
  %5432 = vmatpush1.bf16.msra.mxu0 %v1193
  %5433 = vmatprep.subr.bf16.mxu0 0
  %5434 = vmatpush1.bf16.msra.mxu0 0
  %5435 = vmatprep.subr.bf16.mxu0 0
  %5436 = vmatpush1.bf16.msra.mxu0 0
  %5437 = vmatprep.subr.bf16.mxu0 0
  %5438 = vmatpush1.bf16.msra.mxu0 0
  %5439 = vmatprep.subr.bf16.mxu0 0
  %5440 = vmatpush1.bf16.msra.mxu0 0
  %5441 = vmatprep.subr.bf16.mxu0 0
  %5442 = vmatpush1.bf16.msra.mxu0 0
  %5443 = vmatprep.subr.bf16.mxu0 0
  %5444 = vmatpush1.bf16.msra.mxu0 0
  %5445 = vmatprep.subr.bf16.mxu0 0
  %5446 = vmatpush1.bf16.msra.mxu0 0
  %5447 = vmatprep.subr.bf16.mxu0 0
  %5448 = vmatpush1.bf16.msra.mxu0 0
  %5449 = vmatprep.mubr.bf16.mxu0 0
  %5450 = vmatmul.mubr.bf16.gmra.mrb[0].mxu0 %v5129
  %v5451 = vpop.f32.mrb[0].mxu0
  %v5452 = vadd.f32 %v5411, %v5451
  %v5453 = vpop.f32.mrb[0].mxu0
  %v5454 = vadd.f32 %v5413, %v5453
  %v5455 = vpop.f32.mrb[0].mxu0
  %v5456 = vpop.f32.mrb[0].mxu0
  %5457 = vdwg.mxu0
  %5458 = vmatprep.subr.bf16.mxu0 0
  %5459 = vmatpush1.bf16.msra.mxu0 %v988
  %5460 = vmatprep.subr.bf16.mxu0 0
  %5461 = vmatpush1.bf16.msra.mxu0 %v997
  %5462 = vmatprep.subr.bf16.mxu0 0
  %5463 = vmatpush1.bf16.msra.mxu0 %v1006
  %5464 = vmatprep.subr.bf16.mxu0 0
  %5465 = vmatpush1.bf16.msra.mxu0 %v1015
  %5466 = vmatprep.subr.bf16.mxu0 0
  %5467 = vmatpush1.bf16.msra.mxu0 %v1024
  %5468 = vmatprep.subr.bf16.mxu0 0
  %5469 = vmatpush1.bf16.msra.mxu0 %v1033
  %5470 = vmatprep.subr.bf16.mxu0 0
  %5471 = vmatpush1.bf16.msra.mxu0 %v1042
  %5472 = vmatprep.subr.bf16.mxu0 0
  %5473 = vmatpush1.bf16.msra.mxu0 %v1051
  %5474 = vmatprep.subr.bf16.mxu0 0
  %5475 = vmatpush1.bf16.msra.mxu0 %v1060
  %5476 = vmatprep.subr.bf16.mxu0 0
  %5477 = vmatpush1.bf16.msra.mxu0 %v1069
  %5478 = vmatprep.subr.bf16.mxu0 0
  %5479 = vmatpush1.bf16.msra.mxu0 %v1078
  %5480 = vmatprep.subr.bf16.mxu0 0
  %5481 = vmatpush1.bf16.msra.mxu0 %v1087
  %5482 = vmatprep.subr.bf16.mxu0 0
  %5483 = vmatpush1.bf16.msra.mxu0 %v1096
  %5484 = vmatprep.subr.bf16.mxu0 0
  %5485 = vmatpush1.bf16.msra.mxu0 %v1105
  %5486 = vmatprep.subr.bf16.mxu0 0
  %5487 = vmatpush1.bf16.msra.mxu0 %v1114
  %5488 = vmatprep.subr.bf16.mxu0 0
  %5489 = vmatpush1.bf16.msra.mxu0 %v1123
  %5490 = vmatprep.mubr.bf16.mxu0 %v5128
  %5491 = vmatmul.mubr.bf16.gmra.mrb[0].mxu0 %v5127
  %v5492 = vpop.f32.mrb[0].mxu0
  %v5493 = vadd.f32 0.0, %v5492
  %v5494 = vpop.f32.mrb[0].mxu0
  %v5495 = vpop.f32.mrb[0].mxu0
  %v5496 = vpop.f32.mrb[0].mxu0
  %5497 = vdwg.mxu0
  %5498 = vmatprep.subr.bf16.mxu0 0
  %5499 = vmatpush1.bf16.msra.mxu0 %v1132
  %5500 = vmatprep.subr.bf16.mxu0 0
  %5501 = vmatpush1.bf16.msra.mxu0 %v1141
  %5502 = vmatprep.subr.bf16.mxu0 0
  %5503 = vmatpush1.bf16.msra.mxu0 %v1150
  %5504 = vmatprep.subr.bf16.mxu0 0
  %5505 = vmatpush1.bf16.msra.mxu0 %v1159
  %5506 = vmatprep.subr.bf16.mxu0 0
  %5507 = vmatpush1.bf16.msra.mxu0 %v1168
  %5508 = vmatprep.subr.bf16.mxu0 0
  %5509 = vmatpush1.bf16.msra.mxu0 %v1177
  %5510 = vmatprep.subr.bf16.mxu0 0
  %5511 = vmatpush1.bf16.msra.mxu0 %v1186
  %5512 = vmatprep.subr.bf16.mxu0 0
  %5513 = vmatpush1.bf16.msra.mxu0 %v1195
  %5514 = vmatprep.subr.bf16.mxu0 0
  %5515 = vmatpush1.bf16.msra.mxu0 0
  %5516 = vmatprep.subr.bf16.mxu0 0
  %5517 = vmatpush1.bf16.msra.mxu0 0
  %5518 = vmatprep.subr.bf16.mxu0 0
  %5519 = vmatpush1.bf16.msra.mxu0 0
  %5520 = vmatprep.subr.bf16.mxu0 0
  %5521 = vmatpush1.bf16.msra.mxu0 0
  %5522 = vmatprep.subr.bf16.mxu0 0
  %5523 = vmatpush1.bf16.msra.mxu0 0
  %5524 = vmatprep.subr.bf16.mxu0 0
  %5525 = vmatpush1.bf16.msra.mxu0 0
  %5526 = vmatprep.subr.bf16.mxu0 0
  %5527 = vmatpush1.bf16.msra.mxu0 0
  %5528 = vmatprep.subr.bf16.mxu0 0
  %5529 = vmatpush1.bf16.msra.mxu0 0
  %5530 = vmatprep.mubr.bf16.mxu0 0
  %5531 = vmatmul.mubr.bf16.gmra.mrb[0].mxu0 %v5129
  %v5532 = vpop.f32.mrb[0].mxu0
  %v5533 = vadd.f32 %v5493, %v5532
  %v5534 = vpop.f32.mrb[0].mxu0
  %v5535 = vpop.f32.mrb[0].mxu0
  %v5536 = vpop.f32.mrb[0].mxu0
  %5537 = vdwg.mxu0
  %v5541 = vcombine.low %v5206, %v5208
  %v5543 = vunpack.c.l.s4 1983009808
  %v5544 = vunpack.c.0.s8 %v5543
  %v5545 = vlaneseq
  %v5546 = vshrl.u32 %v5545, 7
  %v5547 = vsub.s32 %v5544, %v5546
  %v5548 = vrot.slane %v5541, %v5547
  %v5550 = vunpack.c.l.s4 1983009808
  %v5551 = vunpack.c.0.s8 %v5550
  %v5552 = vlaneseq
  %v5553 = vshrl.u32 %v5552, 7
  %v5554 = vsub.s32 %v5551, %v5553
  %v5555 = vrot.slane %v5288, %v5554
  %v5556 = vcombine.low %v5548, %v5555
  %v5558 = vadd.f32 %v5104, %v5556
  %v5559 = vxor.u32 %v5558, 2147483648
  %v5560 = vmul.f32 %v5559, 1.442695
  %v5561 = vpow.pop %v5560
  %v5562 = vadd.f32 %v5561, 1.0
  %v5563 = vrcp.pop %v5562
  %v5564 = vmul.f32 1.0, %v5563
  %v5567 = vrot.slane %v5104, 6
  %v5568 = vrot.slane %v5105, 6
  %v5569 = vsel %vm1851, %v5567, %v5568
  %v5574 = vcombine.low %v5290, %v5370
  %v5576 = vunpack.c.l.s4 1983009808
  %v5577 = vunpack.c.0.s8 %v5576
  %v5578 = vlaneseq
  %v5579 = vshrl.u32 %v5578, 7
  %v5580 = vsub.s32 %v5577, %v5579
  %v5581 = vrot.slane %v5574, %v5580
  %v5583 = vunpack.c.l.s4 1983009808
  %v5584 = vunpack.c.0.s8 %v5583
  %v5585 = vlaneseq
  %v5586 = vshrl.u32 %v5585, 7
  %v5587 = vsub.s32 %v5584, %v5586
  %v5588 = vrot.slane %v5372, %v5587
  %v5589 = vcombine.low %v5581, %v5588
  %v5591 = vadd.f32 %v5569, %v5589
  %v5592 = vxor.u32 %v5591, 2147483648
  %v5593 = vmul.f32 %v5592, 1.442695
  %v5594 = vpow.pop %v5593
  %v5595 = vadd.f32 %v5594, 1.0
  %v5596 = vrcp.pop %v5595
  %v5597 = vmul.f32 1.0, %v5596
  %v5598 = vadd.f32 %v5452, %v269
  %v5599 = vadd.f32 %v5454, %v273
  %v5600 = vadd.f32 %v5533, %v277
  %v5604 = vcombine.low %v5598, %v5599
  %v5606 = vunpack.c.l.s4 1983009808
  %v5607 = vunpack.c.0.s8 %v5606
  %v5608 = vlaneseq
  %v5609 = vshrl.u32 %v5608, 7
  %v5610 = vsub.s32 %v5607, %v5609
  %v5611 = vrot.slane %v5604, %v5610
  %v5613 = vunpack.c.l.s4 1983009808
  %v5614 = vunpack.c.0.s8 %v5613
  %v5615 = vlaneseq
  %v5616 = vshrl.u32 %v5615, 7
  %v5617 = vsub.s32 %v5614, %v5616
  %v5618 = vrot.slane %v5600, %v5617
  %v5619 = vcombine.low %v5611, %v5618
  %v5621 = vmul.f32 %v5564, %v5619
  %v5623 = vrot.slane %v5105, 4
  %v5624 = vrot.slane %v5106, 4
  %v5625 = vsel %vm1908, %v5623, %v5624
  %v5627 = vadd.f32 %v5625, %v5621
  %v5628 = vtanh.pop %v5627
  %v5629 = vsub.f32 %v5100, %v5628
  %v5630 = vmul.f32 %v5597, %v5629
  %v5631 = vadd.f32 %v5628, %v5630
  %s5632 = scalar_lea.vmem %s4, 42
  %5633 = vst [vmem:[%s5632] sm:$0x3f] %v5631
  %5634 = vst [vmem:[#allocation2] sm:$0x3f] %v5631
  // Predicated region
  $region22: #{decoder_forward.1} parent=0 // pred_check
    _
  $region23: #{decoder_forward.1} parent=0 // pred_check_branch
    %5636 = sbr.rel (0) target = $region25
  $region24: #{decoder_forward.1} parent=0 // pred_region
    _
  $region25: #{decoder_forward.1} parent=0 // pred_fallthru
    _
  // Predicated region
  $region26: #{decoder_forward.1} parent=0 // pred_check
    _
  $region27: #{decoder_forward.1} parent=0 // pred_check_branch
    %5638 = sbr.rel (0) target = $region29
  $region28: #{decoder_forward.1} parent=0 // pred_region
    _
  $region29: #{decoder_forward.1} parent=0 // pred_fallthru
    _

</llo_original>
